<compile_context>
chip_gen: v6e
topology: v6e:2x2x1
jax: 0.10.0
libtpu: 0.0.40
codegen_flags: <defaults>
</compile_context>

<pallas_src>
import jax
import jax.numpy as jnp
import numpy as np
from jax import lax
from jax.experimental import pallas as pl
from jax.experimental.pallas import tpu as pltpu


def _round_up(x, m):
    return (x + m - 1) // m * m


# ---------------------------------------------------------------- kernels ---
def _convblock_kernel(xcol_ref, w_ref, o_ref):
    # xcol_ref: (4, TM, KKC) bf16 -- one im2col tile per 2x2 max-pool slot
    # w_ref   : (KKC, Cout)  bf16
    # o_ref   : (TM, Cout)   bf16 = relu(max_p(xcol[p] @ w)); math in f32.
    w = w_ref[...]
    acc = jnp.dot(xcol_ref[0], w, preferred_element_type=jnp.float32)
    for p in range(1, 4):
        acc = jnp.maximum(
            acc, jnp.dot(xcol_ref[p], w, preferred_element_type=jnp.float32))
    o_ref[...] = jnp.maximum(acc, 0.0).astype(o_ref.dtype)


def _conv3_fc_kernel(xcol_ref, w_ref, w1_ref, b1_ref, w2_ref, b2_ref, o_ref):
    # Fused conv3-block + NCHW-flatten + fc1 + fc2 (no activation on fc1/fc2).
    # xcol_ref: (4, P*Bp, KKC) bf16, rows ordered (pool-position, batch)
    # w_ref   : (KKC, C3)      bf16
    # w1_ref  : (P, C3, H1)    bf16  (fc1 weight with NCHW flatten folded in)
    # b1_ref  : (1, H1) f32,  w2_ref: (H1, N) bf16,  b2_ref: (1, N) f32
    # o_ref   : (Bp, N) f32
    n_pos = w1_ref.shape[0]
    bp = o_ref.shape[0]

    w = w_ref[...]
    acc = jnp.dot(xcol_ref[0], w, preferred_element_type=jnp.float32)
    for p in range(1, 4):
        acc = jnp.maximum(
            acc, jnp.dot(xcol_ref[p], w, preferred_element_type=jnp.float32))
    a = jnp.maximum(acc, 0.0)                                  # (P*Bp, C3) f32

    # fc1: per-sample contraction over the 9 spatial positions (rows p*Bp..).
    h = None
    for p in range(n_pos):
        ap = a[p * bp:(p + 1) * bp, :].astype(jnp.bfloat16)    # (Bp, C3)
        hp = jnp.dot(ap, w1_ref[p], preferred_element_type=jnp.float32)
        h = hp if h is None else h + hp
    h = h + b1_ref[...]                                        # (Bp, H1) f32

    out = jnp.dot(h.astype(jnp.bfloat16), w2_ref[...],
                  preferred_element_type=jnp.float32) + b2_ref[...]
    o_ref[...] = out.astype(o_ref.dtype)


# ------------------------------------------------------------------- glue ---
def _patches(x_nhwc, pad):
    # One XLA op: 3x3 patches, feature order (channel, kh, kw).
    return lax.conv_general_dilated_patches(
        x_nhwc, (3, 3), (1, 1), [(pad, pad), (pad, pad)],
        dimension_numbers=("NHWC", "HWIO", "NHWC"))


def conv_block(x_nhwc, wcol, pad, *, tile_m=512):
    """ConvBlock: conv2d(k=3, bias=False) -> MaxPool2d(2,2) -> ReLU. bf16 out."""
    B, H, W_, _ = x_nhwc.shape
    kkc, cout = wcol.shape
    Hc, Wc = H + 2 * pad - 2, W_ + 2 * pad - 2
    Hp, Wp = Hc // 2, Wc // 2

    patches = _patches(x_nhwc, pad)                            # (B, Hc, Wc, kkc)
    cols = [patches[:, pi:pi + 2 * Hp:2, pj:pj + 2 * Wp:2, :]
            .reshape(B * Hp * Wp, kkc)
            for pi in range(2) for pj in range(2)]
    xcols = jnp.stack(cols, axis=0)                            # (4, M, kkc) bf16

    M = B * Hp * Wp
    # >=2 grid steps (both v7x TensorCores) when row count justifies it;
    # tiles rounded to 16 for bf16 sublane packing.
    if M >= 32:
        tm = min(tile_m, _round_up(pl.cdiv(M, 2), 16))
    else:
        tm = _round_up(M, 16)
    Mp = _round_up(M, tm)
    if Mp != M:
        xcols = jnp.pad(xcols, ((0, 0), (0, Mp - M), (0, 0)))

    out = pl.pallas_call(
        _convblock_kernel,
        out_shape=jax.ShapeDtypeStruct((Mp, cout), jnp.bfloat16),
        grid_spec=pltpu.PrefetchScalarGridSpec(
            num_scalar_prefetch=0,
            grid=(Mp // tm,),
            in_specs=[pl.BlockSpec((4, tm, kkc), lambda i: (0, i, 0)),
                      pl.BlockSpec((kkc, cout), lambda i: (0, 0))],
            out_specs=pl.BlockSpec((tm, cout), lambda i: (i, 0))),
        compiler_params=pltpu.CompilerParams(
            dimension_semantics=("parallel",)),
    )(xcols, wcol)
    return out[:M].reshape(B, Hp, Wp, cout)


def conv3_fc_head(x_nhwc, wcol, w1f, b1, w2, b2):
    """Fused conv3 block + flatten + fc1 + fc2 in one pallas_call."""
    B, H, W_, _ = x_nhwc.shape
    kkc, c3 = wcol.shape
    Hc, Wc = H, W_                                             # pad=1, k=3
    Hp, Wp = Hc // 2, Wc // 2
    n_pos = Hp * Wp
    h1 = w1f.shape[-1]
    n_cls = w2.shape[-1]

    patches = _patches(x_nhwc, 1)                              # (B, Hc, Wc, kkc)
    Bp = _round_up(B, 8)
    if Bp != B:
        patches = jnp.pad(patches, ((0, Bp - B), (0, 0), (0, 0), (0, 0)))
    patches = jnp.transpose(patches, (1, 2, 0, 3))             # (Hc, Wc, Bp, kkc)
    cols = [patches[pi:pi + 2 * Hp:2, pj:pj + 2 * Wp:2, :, :]
            .reshape(n_pos * Bp, kkc)                          # rows = (pos, b)
            for pi in range(2) for pj in range(2)]
    xcols = jnp.stack(cols, axis=0)                            # (4, P*Bp, kkc)

    out = pl.pallas_call(
        _conv3_fc_kernel,
        out_shape=jax.ShapeDtypeStruct((Bp, n_cls), jnp.float32),
        grid_spec=pltpu.PrefetchScalarGridSpec(
            num_scalar_prefetch=0,
            grid=(1,),
            in_specs=[pl.BlockSpec((4, n_pos * Bp, kkc), lambda i: (0, 0, 0)),
                      pl.BlockSpec((kkc, c3), lambda i: (0, 0)),
                      pl.BlockSpec((n_pos, c3, h1), lambda i: (0, 0, 0)),
                      pl.BlockSpec((1, h1), lambda i: (0, 0)),
                      pl.BlockSpec((c3, n_cls), lambda i: (0, 0)),
                      pl.BlockSpec((1, n_cls), lambda i: (0, 0))],
            out_specs=pl.BlockSpec((Bp, n_cls), lambda i: (0, 0))),
        compiler_params=pltpu.CompilerParams(
            dimension_semantics=("arbitrary",)),
    )(xcols, wcol, w1f, b1, w2, b2)
    return out[:B]


@jax.jit
def cnn_net2_forward(x_nchw, prepped):
    x = jnp.transpose(x_nchw, (0, 2, 3, 1)).astype(jnp.bfloat16)  # NCHW -> NHWC
    y = conv_block(x, prepped["conv1_w"], pad=0)       # (B, 13, 13, 16) bf16
    y = conv_block(y, prepped["conv2_w"], pad=1)       # (B,  6,  6, 32) bf16
    return conv3_fc_head(y, prepped["conv3_w"], prepped["fc1_wf"],
                         prepped["fc1_b"], prepped["fc2_w"], prepped["fc2_b"])


# ------------------------------------------------------------- parameters ---
def init_params(key):
    ks = jax.random.split(key, 7)

    def u(k, shape, fan_in):
        bound = 1.0 / np.sqrt(fan_in)
        return jax.random.uniform(k, shape, jnp.float32, -bound, bound)

    return {
        # conv weights stored as (kh, kw, in_ch, out_ch)
        "conv1_w": u(ks[0], (3, 3, 1, 16), 1 * 9),
        "conv2_w": u(ks[1], (3, 3, 16, 32), 16 * 9),
        "conv3_w": u(ks[2], (3, 3, 32, 64), 32 * 9),
        # linear weights stored as (in_features, out_features);
        # fc1 rows follow PyTorch's NCHW-flatten (c, h, w) ordering.
        "fc1_w": u(ks[3], (576, 64), 576),
        "fc1_b": u(ks[4], (1, 64), 576),
        "fc2_w": u(ks[5], (64, 10), 64),
        "fc2_b": u(ks[6], (1, 10), 64),
    }


def prepare_params(params):
    """One-time weight prep (hoisted out of the jitted forward): bf16 casts,
    im2col weight layout (channel-major, matching conv_general_dilated_patches),
    and folding nn.Flatten's NCHW (c,h,w) row order into fc1 -> (pos, C3, H1)."""
    def conv_w(w):
        kh, kw, ci, co = w.shape
        return (jnp.transpose(w, (2, 0, 1, 3))         # (ci, kh, kw, co)
                .reshape(ci * kh * kw, co).astype(jnp.bfloat16))

    c3 = params["conv3_w"].shape[3]
    h1 = params["fc1_w"].shape[1]
    n_pos = params["fc1_w"].shape[0] // c3             # 576 // 64 = 9
    w1f = (params["fc1_w"].reshape(c3, n_pos, h1)      # rows ordered (c, h, w)
           .transpose(1, 0, 2)                         # (pos, C3, H1)
           .astype(jnp.bfloat16))
    return {
        "conv1_w": conv_w(params["conv1_w"]),
        "conv2_w": conv_w(params["conv2_w"]),
        "conv3_w": conv_w(params["conv3_w"]),
        "fc1_wf": w1f,
        "fc1_b": params["fc1_b"].astype(jnp.float32),
        "fc2_w": params["fc2_w"].astype(jnp.bfloat16),
        "fc2_b": params["fc2_b"].astype(jnp.float32),
    }


# -------------------------------------------------------------- reference ---
def reference_forward(x_nchw, params):
    def block(x, w, pad):
        w_oihw = jnp.transpose(w, (3, 2, 0, 1))
        y = lax.conv_general_dilated(
            x, w_oihw, (1, 1), [(pad, pad), (pad, pad)],
            dimension_numbers=("NCHW", "OIHW", "NCHW"))
        y = lax.reduce_window(y, -jnp.inf, lax.max,
                              (1, 1, 2, 2), (1, 1, 2, 2), "VALID")
        return jnp.maximum(y, 0.0)

    y = block(x_nchw, params["conv1_w"], 0)
    y = block(y, params["conv2_w"], 1)
    y = block(y, params["conv3_w"], 1)
    y = y.reshape(y.shape[0], -1)                      # NCHW flatten
    y = y @ params["fc1_w"] + params["fc1_b"]
    y = y @ params["fc2_w"] + params["fc2_b"]
    return y


if __name__ == "__main__":
    key = jax.random.PRNGKey(0)
    pkey, xkey = jax.random.split(key)
    params = init_params(pkey)
    prepped = prepare_params(params)
    # CnnNet2 implies 1x28x28 inputs (fc1 expects 3*3*64 = 576 features).
    x = jax.random.normal(xkey, (2, 1, 28, 28), jnp.float32)

    out = jax.block_until_ready(cnn_net2_forward(x, prepped))
    assert out.shape == (2, 10) and out.dtype == jnp.float32

    ref = reference_forward(x, params)
    np.testing.assert_allclose(np.asarray(out), np.asarray(ref),
                               rtol=2e-2, atol=2e-2)
    print("KERNEL_OK")
</pallas_src>

<mosaic_0001>
module attributes {stable_mosaic.version = 11 : i64} {
  func.func @_convblock_kernel(%arg0: i32, %arg1: memref<4x176x9xbf16, #tpu.memory_space<vmem>>, %arg2: memref<9x16xbf16, #tpu.memory_space<vmem>>, %arg3: memref<176x16xbf16, #tpu.memory_space<vmem>>) attributes {dimension_semantics = [#tpu.dimension_semantics<parallel>], iteration_bounds = array<i64: 2>, scalar_prefetch = 0 : i64, scratch_operands = 0 : i64, tpu.core_type = #tpu.core_type<tc>, window_params = [{transform_indices = @transform_0, window_bounds = array<i64: 4, 176, 9>}, {pipeline_mode = #tpu.pipeline_mode<synchronous>, transform_indices = @transform_1, window_bounds = array<i64: 9, 16>}, {transform_indices = @transform_2, window_bounds = array<i64: 176, 16>}]} {
    %c0 = arith.constant 0 : index
    %c0_0 = arith.constant 0 : index
    %0 = vector.load %arg2[%c0, %c0_0] : memref<9x16xbf16, #tpu.memory_space<vmem>>, vector<9x16xbf16>
    %c0_1 = arith.constant 0 : index
    %c0_2 = arith.constant 0 : index
    %c0_3 = arith.constant 0 : index
    %1 = vector.load %arg1[%c0_1, %c0_2, %c0_3] : memref<4x176x9xbf16, #tpu.memory_space<vmem>>, vector<1x176x9xbf16>
    %2 = vector.shape_cast %1 : vector<1x176x9xbf16> to vector<176x9xbf16>
    %cst = arith.constant dense<0.000000e+00> : vector<176x16xf32>
    %3 = tpu.matmul %2, %0, %cst {dimension_numbers = #tpu.dot_dimension_numbers<[1], [0], [0], [1], [0, 0, 1, 1], [], []>} : vector<176x9xbf16>, vector<9x16xbf16>, vector<176x16xf32> -> vector<176x16xf32>
    %c1 = arith.constant 1 : index
    %c0_4 = arith.constant 0 : index
    %c0_5 = arith.constant 0 : index
    %4 = vector.load %arg1[%c1, %c0_4, %c0_5] : memref<4x176x9xbf16, #tpu.memory_space<vmem>>, vector<1x176x9xbf16>
    %5 = vector.shape_cast %4 : vector<1x176x9xbf16> to vector<176x9xbf16>
    %cst_6 = arith.constant dense<0.000000e+00> : vector<176x16xf32>
    %6 = tpu.matmul %5, %0, %cst_6 {dimension_numbers = #tpu.dot_dimension_numbers<[1], [0], [0], [1], [0, 0, 1, 1], [], []>} : vector<176x9xbf16>, vector<9x16xbf16>, vector<176x16xf32> -> vector<176x16xf32>
    %7 = arith.maximumf %3, %6 : vector<176x16xf32>
    %c2 = arith.constant 2 : index
    %c0_7 = arith.constant 0 : index
    %c0_8 = arith.constant 0 : index
    %8 = vector.load %arg1[%c2, %c0_7, %c0_8] : memref<4x176x9xbf16, #tpu.memory_space<vmem>>, vector<1x176x9xbf16>
    %9 = vector.shape_cast %8 : vector<1x176x9xbf16> to vector<176x9xbf16>
    %cst_9 = arith.constant dense<0.000000e+00> : vector<176x16xf32>
    %10 = tpu.matmul %9, %0, %cst_9 {dimension_numbers = #tpu.dot_dimension_numbers<[1], [0], [0], [1], [0, 0, 1, 1], [], []>} : vector<176x9xbf16>, vector<9x16xbf16>, vector<176x16xf32> -> vector<176x16xf32>
    %11 = arith.maximumf %7, %10 : vector<176x16xf32>
    %c3 = arith.constant 3 : index
    %c0_10 = arith.constant 0 : index
    %c0_11 = arith.constant 0 : index
    %12 = vector.load %arg1[%c3, %c0_10, %c0_11] : memref<4x176x9xbf16, #tpu.memory_space<vmem>>, vector<1x176x9xbf16>
    %13 = vector.shape_cast %12 : vector<1x176x9xbf16> to vector<176x9xbf16>
    %cst_12 = arith.constant dense<0.000000e+00> : vector<176x16xf32>
    %14 = tpu.matmul %13, %0, %cst_12 {dimension_numbers = #tpu.dot_dimension_numbers<[1], [0], [0], [1], [0, 0, 1, 1], [], []>} : vector<176x9xbf16>, vector<9x16xbf16>, vector<176x16xf32> -> vector<176x16xf32>
    %15 = arith.maximumf %11, %14 : vector<176x16xf32>
    %cst_13 = arith.constant 0.000000e+00 : f32
    %16 = vector.broadcast %cst_13 : f32 to vector<176x16xf32>
    %17 = arith.maximumf %15, %16 : vector<176x16xf32>
    %18 = arith.truncf %17 : vector<176x16xf32> to vector<176x16xbf16>
    %c0_14 = arith.constant 0 : index
    %c0_15 = arith.constant 0 : index
    %19 = vector.load %arg3[%c0_14, %c0_15] : memref<176x16xbf16, #tpu.memory_space<vmem>>, vector<176x16xbf16>
    tpu.vector_store %arg3[%c0_14, %c0_15], %18 {strides = array<i32>} : memref<176x16xbf16, #tpu.memory_space<vmem>>, vector<176x16xbf16>,
    return
  }
  func.func @transform_0(%arg0: i32) -> (i32, i32, i32) {
    %c0_i32 = arith.constant 0 : i32
    %c0_i32_0 = arith.constant 0 : i32
    %c0_i32_1 = arith.constant 0 : i32
    return %c0_i32, %arg0, %c0_i32_0 : i32, i32, i32
  }
  func.func @transform_1(%arg0: i32) -> (i32, i32) {
    %c0_i32 = arith.constant 0 : i32
    %c0_i32_0 = arith.constant 0 : i32
    %c0_i32_1 = arith.constant 0 : i32
    return %c0_i32, %c0_i32_0 : i32, i32
  }
  func.func @transform_2(%arg0: i32) -> (i32, i32) {
    %c0_i32 = arith.constant 0 : i32
    %c0_i32_0 = arith.constant 0 : i32
    return %arg0, %c0_i32 : i32, i32
  }
}

module attributes {stable_mosaic.version = 11 : i64} {
  func.func @_convblock_kernel(%arg0: i32, %arg1: memref<4x48x144xbf16, #tpu.memory_space<vmem>>, %arg2: memref<144x32xbf16, #tpu.memory_space<vmem>>, %arg3: memref<48x32xbf16, #tpu.memory_space<vmem>>) attributes {dimension_semantics = [#tpu.dimension_semantics<parallel>], iteration_bounds = array<i64: 2>, scalar_prefetch = 0 : i64, scratch_operands = 0 : i64, tpu.core_type = #tpu.core_type<tc>, window_params = [{transform_indices = @transform_0, window_bounds = array<i64: 4, 48, 144>}, {pipeline_mode = #tpu.pipeline_mode<synchronous>, transform_indices = @transform_1, window_bounds = array<i64: 144, 32>}, {transform_indices = @transform_2, window_bounds = array<i64: 48, 32>}]} {
    %c0 = arith.constant 0 : index
    %c0_0 = arith.constant 0 : index
    %0 = vector.load %arg2[%c0, %c0_0] : memref<144x32xbf16, #tpu.memory_space<vmem>>, vector<144x32xbf16>
    %c0_1 = arith.constant 0 : index
    %c0_2 = arith.constant 0 : index
    %c0_3 = arith.constant 0 : index
    %1 = vector.load %arg1[%c0_1, %c0_2, %c0_3] : memref<4x48x144xbf16, #tpu.memory_space<vmem>>, vector<1x48x144xbf16>
    %2 = vector.shape_cast %1 : vector<1x48x144xbf16> to vector<48x144xbf16>
    %cst = arith.constant dense<0.000000e+00> : vector<48x32xf32>
    %3 = tpu.matmul %2, %0, %cst {dimension_numbers = #tpu.dot_dimension_numbers<[1], [0], [0], [1], [0, 0, 1, 1], [], []>} : vector<48x144xbf16>, vector<144x32xbf16>, vector<48x32xf32> -> vector<48x32xf32>
    %c1 = arith.constant 1 : index
    %c0_4 = arith.constant 0 : index
    %c0_5 = arith.constant 0 : index
    %4 = vector.load %arg1[%c1, %c0_4, %c0_5] : memref<4x48x144xbf16, #tpu.memory_space<vmem>>, vector<1x48x144xbf16>
    %5 = vector.shape_cast %4 : vector<1x48x144xbf16> to vector<48x144xbf16>
    %cst_6 = arith.constant dense<0.000000e+00> : vector<48x32xf32>
    %6 = tpu.matmul %5, %0, %cst_6 {dimension_numbers = #tpu.dot_dimension_numbers<[1], [0], [0], [1], [0, 0, 1, 1], [], []>} : vector<48x144xbf16>, vector<144x32xbf16>, vector<48x32xf32> -> vector<48x32xf32>
    %7 = arith.maximumf %3, %6 : vector<48x32xf32>
    %c2 = arith.constant 2 : index
    %c0_7 = arith.constant 0 : index
    %c0_8 = arith.constant 0 : index
    %8 = vector.load %arg1[%c2, %c0_7, %c0_8] : memref<4x48x144xbf16, #tpu.memory_space<vmem>>, vector<1x48x144xbf16>
    %9 = vector.shape_cast %8 : vector<1x48x144xbf16> to vector<48x144xbf16>
    %cst_9 = arith.constant dense<0.000000e+00> : vector<48x32xf32>
    %10 = tpu.matmul %9, %0, %cst_9 {dimension_numbers = #tpu.dot_dimension_numbers<[1], [0], [0], [1], [0, 0, 1, 1], [], []>} : vector<48x144xbf16>, vector<144x32xbf16>, vector<48x32xf32> -> vector<48x32xf32>
    %11 = arith.maximumf %7, %10 : vector<48x32xf32>
    %c3 = arith.constant 3 : index
    %c0_10 = arith.constant 0 : index
    %c0_11 = arith.constant 0 : index
    %12 = vector.load %arg1[%c3, %c0_10, %c0_11] : memref<4x48x144xbf16, #tpu.memory_space<vmem>>, vector<1x48x144xbf16>
    %13 = vector.shape_cast %12 : vector<1x48x144xbf16> to vector<48x144xbf16>
    %cst_12 = arith.constant dense<0.000000e+00> : vector<48x32xf32>
    %14 = tpu.matmul %13, %0, %cst_12 {dimension_numbers = #tpu.dot_dimension_numbers<[1], [0], [0], [1], [0, 0, 1, 1], [], []>} : vector<48x144xbf16>, vector<144x32xbf16>, vector<48x32xf32> -> vector<48x32xf32>
    %15 = arith.maximumf %11, %14 : vector<48x32xf32>
    %cst_13 = arith.constant 0.000000e+00 : f32
    %16 = vector.broadcast %cst_13 : f32 to vector<48x32xf32>
    %17 = arith.maximumf %15, %16 : vector<48x32xf32>
    %18 = arith.truncf %17 : vector<48x32xf32> to vector<48x32xbf16>
    %c0_14 = arith.constant 0 : index
    %c0_15 = arith.constant 0 : index
    %19 = vector.load %arg3[%c0_14, %c0_15] : memref<48x32xbf16, #tpu.memory_space<vmem>>, vector<48x32xbf16>
    tpu.vector_store %arg3[%c0_14, %c0_15], %18 {strides = array<i32>} : memref<48x32xbf16, #tpu.memory_space<vmem>>, vector<48x32xbf16>,
    return
  }
  func.func @transform_0(%arg0: i32) -> (i32, i32, i32) {
    %c0_i32 = arith.constant 0 : i32
    %c0_i32_0 = arith.constant 0 : i32
    %c0_i32_1 = arith.constant 0 : i32
    return %c0_i32, %arg0, %c0_i32_0 : i32, i32, i32
  }
  func.func @transform_1(%arg0: i32) -> (i32, i32) {
    %c0_i32 = arith.constant 0 : i32
    %c0_i32_0 = arith.constant 0 : i32
    %c0_i32_1 = arith.constant 0 : i32
    return %c0_i32, %c0_i32_0 : i32, i32
  }
  func.func @transform_2(%arg0: i32) -> (i32, i32) {
    %c0_i32 = arith.constant 0 : i32
    %c0_i32_0 = arith.constant 0 : i32
    return %arg0, %c0_i32 : i32, i32
  }
}

module attributes {stable_mosaic.version = 11 : i64} {
  func.func @_conv3_fc_kernel(%arg0: i32, %arg1: memref<4x72x288xbf16, #tpu.memory_space<vmem>>, %arg2: memref<288x64xbf16, #tpu.memory_space<vmem>>, %arg3: memref<9x64x64xbf16, #tpu.memory_space<vmem>>, %arg4: memref<1x64xf32, #tpu.memory_space<vmem>>, %arg5: memref<64x10xbf16, #tpu.memory_space<vmem>>, %arg6: memref<1x10xf32, #tpu.memory_space<vmem>>, %arg7: memref<8x10xf32, #tpu.memory_space<vmem>>) attributes {dimension_semantics = [#tpu.dimension_semantics<arbitrary>], iteration_bounds = array<i64: 1>, scalar_prefetch = 0 : i64, scratch_operands = 0 : i64, tpu.core_type = #tpu.core_type<tc>, window_params = [{pipeline_mode = #tpu.pipeline_mode<synchronous>, transform_indices = @transform_0, window_bounds = array<i64: 4, 72, 288>}, {pipeline_mode = #tpu.pipeline_mode<synchronous>, transform_indices = @transform_1, window_bounds = array<i64: 288, 64>}, {pipeline_mode = #tpu.pipeline_mode<synchronous>, transform_indices = @transform_2, window_bounds = array<i64: 9, 64, 64>}, {pipeline_mode = #tpu.pipeline_mode<synchronous>, transform_indices = @transform_3, window_bounds = array<i64: 1, 64>}, {pipeline_mode = #tpu.pipeline_mode<synchronous>, transform_indices = @transform_4, window_bounds = array<i64: 64, 10>}, {pipeline_mode = #tpu.pipeline_mode<synchronous>, transform_indices = @transform_5, window_bounds = array<i64: 1, 10>}, {pipeline_mode = #tpu.pipeline_mode<synchronous>, transform_indices = @transform_6, window_bounds = array<i64: 8, 10>}]} {
    %c0 = arith.constant 0 : index
    %c0_0 = arith.constant 0 : index
    %0 = vector.load %arg2[%c0, %c0_0] : memref<288x64xbf16, #tpu.memory_space<vmem>>, vector<288x64xbf16>
    %c0_1 = arith.constant 0 : index
    %c0_2 = arith.constant 0 : index
    %c0_3 = arith.constant 0 : index
    %1 = vector.load %arg1[%c0_1, %c0_2, %c0_3] : memref<4x72x288xbf16, #tpu.memory_space<vmem>>, vector<1x72x288xbf16>
    %2 = vector.shape_cast %1 : vector<1x72x288xbf16> to vector<72x288xbf16>
    %cst = arith.constant dense<0.000000e+00> : vector<72x64xf32>
    %3 = tpu.matmul %2, %0, %cst {dimension_numbers = #tpu.dot_dimension_numbers<[1], [0], [0], [1], [0, 0, 1, 1], [], []>} : vector<72x288xbf16>, vector<288x64xbf16>, vector<72x64xf32> -> vector<72x64xf32>
    %c1 = arith.constant 1 : index
    %c0_4 = arith.constant 0 : index
    %c0_5 = arith.constant 0 : index
    %4 = vector.load %arg1[%c1, %c0_4, %c0_5] : memref<4x72x288xbf16, #tpu.memory_space<vmem>>, vector<1x72x288xbf16>
    %5 = vector.shape_cast %4 : vector<1x72x288xbf16> to vector<72x288xbf16>
    %cst_6 = arith.constant dense<0.000000e+00> : vector<72x64xf32>
    %6 = tpu.matmul %5, %0, %cst_6 {dimension_numbers = #tpu.dot_dimension_numbers<[1], [0], [0], [1], [0, 0, 1, 1], [], []>} : vector<72x288xbf16>, vector<288x64xbf16>, vector<72x64xf32> -> vector<72x64xf32>
    %7 = arith.maximumf %3, %6 : vector<72x64xf32>
    %c2 = arith.constant 2 : index
    %c0_7 = arith.constant 0 : index
    %c0_8 = arith.constant 0 : index
    %8 = vector.load %arg1[%c2, %c0_7, %c0_8] : memref<4x72x288xbf16, #tpu.memory_space<vmem>>, vector<1x72x288xbf16>
    %9 = vector.shape_cast %8 : vector<1x72x288xbf16> to vector<72x288xbf16>
    %cst_9 = arith.constant dense<0.000000e+00> : vector<72x64xf32>
    %10 = tpu.matmul %9, %0, %cst_9 {dimension_numbers = #tpu.dot_dimension_numbers<[1], [0], [0], [1], [0, 0, 1, 1], [], []>} : vector<72x288xbf16>, vector<288x64xbf16>, vector<72x64xf32> -> vector<72x64xf32>
    %11 = arith.maximumf %7, %10 : vector<72x64xf32>
    %c3 = arith.constant 3 : index
    %c0_10 = arith.constant 0 : index
    %c0_11 = arith.constant 0 : index
    %12 = vector.load %arg1[%c3, %c0_10, %c0_11] : memref<4x72x288xbf16, #tpu.memory_space<vmem>>, vector<1x72x288xbf16>
    %13 = vector.shape_cast %12 : vector<1x72x288xbf16> to vector<72x288xbf16>
    %cst_12 = arith.constant dense<0.000000e+00> : vector<72x64xf32>
    %14 = tpu.matmul %13, %0, %cst_12 {dimension_numbers = #tpu.dot_dimension_numbers<[1], [0], [0], [1], [0, 0, 1, 1], [], []>} : vector<72x288xbf16>, vector<288x64xbf16>, vector<72x64xf32> -> vector<72x64xf32>
    %15 = arith.maximumf %11, %14 : vector<72x64xf32>
    %cst_13 = arith.constant 0.000000e+00 : f32
    %16 = vector.broadcast %cst_13 : f32 to vector<72x64xf32>
    %17 = arith.maximumf %15, %16 : vector<72x64xf32>
    %18 = vector.extract_strided_slice %17 {offsets = [0, 0], sizes = [8, 64], strides = [1, 1]} : vector<72x64xf32> to vector<8x64xf32>
    %19 = arith.truncf %18 : vector<8x64xf32> to vector<8x64xbf16>
    %c0_14 = arith.constant 0 : index
    %c0_15 = arith.constant 0 : index
    %c0_16 = arith.constant 0 : index
    %20 = vector.load %arg3[%c0_14, %c0_15, %c0_16] : memref<9x64x64xbf16, #tpu.memory_space<vmem>>, vector<1x64x64xbf16>
    %21 = vector.shape_cast %20 : vector<1x64x64xbf16> to vector<64x64xbf16>
    %cst_17 = arith.constant dense<0.000000e+00> : vector<8x64xf32>
    %22 = tpu.matmul %19, %21, %cst_17 {dimension_numbers = #tpu.dot_dimension_numbers<[1], [0], [0], [1], [0, 0, 1, 1], [], []>} : vector<8x64xbf16>, vector<64x64xbf16>, vector<8x64xf32> -> vector<8x64xf32>
    %23 = vector.extract_strided_slice %17 {offsets = [8, 0], sizes = [8, 64], strides = [1, 1]} : vector<72x64xf32> to vector<8x64xf32>
    %24 = arith.truncf %23 : vector<8x64xf32> to vector<8x64xbf16>
    %c1_18 = arith.constant 1 : index
    %c0_19 = arith.constant 0 : index
    %c0_20 = arith.constant 0 : index
    %25 = vector.load %arg3[%c1_18, %c0_19, %c0_20] : memref<9x64x64xbf16, #tpu.memory_space<vmem>>, vector<1x64x64xbf16>
    %26 = vector.shape_cast %25 : vector<1x64x64xbf16> to vector<64x64xbf16>
    %cst_21 = arith.constant dense<0.000000e+00> : vector<8x64xf32>
    %27 = tpu.matmul %24, %26, %cst_21 {dimension_numbers = #tpu.dot_dimension_numbers<[1], [0], [0], [1], [0, 0, 1, 1], [], []>} : vector<8x64xbf16>, vector<64x64xbf16>, vector<8x64xf32> -> vector<8x64xf32>
    %28 = arith.addf %22, %27 : vector<8x64xf32>
    %29 = vector.extract_strided_slice %17 {offsets = [16, 0], sizes = [8, 64], strides = [1, 1]} : vector<72x64xf32> to vector<8x64xf32>
    %30 = arith.truncf %29 : vector<8x64xf32> to vector<8x64xbf16>
    %c2_22 = arith.constant 2 : index
    %c0_23 = arith.constant 0 : index
    %c0_24 = arith.constant 0 : index
    %31 = vector.load %arg3[%c2_22, %c0_23, %c0_24] : memref<9x64x64xbf16, #tpu.memory_space<vmem>>, vector<1x64x64xbf16>
    %32 = vector.shape_cast %31 : vector<1x64x64xbf16> to vector<64x64xbf16>
    %cst_25 = arith.constant dense<0.000000e+00> : vector<8x64xf32>
    %33 = tpu.matmul %30, %32, %cst_25 {dimension_numbers = #tpu.dot_dimension_numbers<[1], [0], [0], [1], [0, 0, 1, 1], [], []>} : vector<8x64xbf16>, vector<64x64xbf16>, vector<8x64xf32> -> vector<8x64xf32>
    %34 = arith.addf %28, %33 : vector<8x64xf32>
    %35 = vector.extract_strided_slice %17 {offsets = [24, 0], sizes = [8, 64], strides = [1, 1]} : vector<72x64xf32> to vector<8x64xf32>
    %36 = arith.truncf %35 : vector<8x64xf32> to vector<8x64xbf16>
    %c3_26 = arith.constant 3 : index
    %c0_27 = arith.constant 0 : index
    %c0_28 = arith.constant 0 : index
    %37 = vector.load %arg3[%c3_26, %c0_27, %c0_28] : memref<9x64x64xbf16, #tpu.memory_space<vmem>>, vector<1x64x64xbf16>
    %38 = vector.shape_cast %37 : vector<1x64x64xbf16> to vector<64x64xbf16>
    %cst_29 = arith.constant dense<0.000000e+00> : vector<8x64xf32>
    %39 = tpu.matmul %36, %38, %cst_29 {dimension_numbers = #tpu.dot_dimension_numbers<[1], [0], [0], [1], [0, 0, 1, 1], [], []>} : vector<8x64xbf16>, vector<64x64xbf16>, vector<8x64xf32> -> vector<8x64xf32>
    %40 = arith.addf %34, %39 : vector<8x64xf32>
    %41 = vector.extract_strided_slice %17 {offsets = [32, 0], sizes = [8, 64], strides = [1, 1]} : vector<72x64xf32> to vector<8x64xf32>
    %42 = arith.truncf %41 : vector<8x64xf32> to vector<8x64xbf16>
    %c4 = arith.constant 4 : index
    %c0_30 = arith.constant 0 : index
    %c0_31 = arith.constant 0 : index
    %43 = vector.load %arg3[%c4, %c0_30, %c0_31] : memref<9x64x64xbf16, #tpu.memory_space<vmem>>, vector<1x64x64xbf16>
    %44 = vector.shape_cast %43 : vector<1x64x64xbf16> to vector<64x64xbf16>
    %cst_32 = arith.constant dense<0.000000e+00> : vector<8x64xf32>
    %45 = tpu.matmul %42, %44, %cst_32 {dimension_numbers = #tpu.dot_dimension_numbers<[1], [0], [0], [1], [0, 0, 1, 1], [], []>} : vector<8x64xbf16>, vector<64x64xbf16>, vector<8x64xf32> -> vector<8x64xf32>
    %46 = arith.addf %40, %45 : vector<8x64xf32>
    %47 = vector.extract_strided_slice %17 {offsets = [40, 0], sizes = [8, 64], strides = [1, 1]} : vector<72x64xf32> to vector<8x64xf32>
    %48 = arith.truncf %47 : vector<8x64xf32> to vector<8x64xbf16>
    %c5 = arith.constant 5 : index
    %c0_33 = arith.constant 0 : index
    %c0_34 = arith.constant 0 : index
    %49 = vector.load %arg3[%c5, %c0_33, %c0_34] : memref<9x64x64xbf16, #tpu.memory_space<vmem>>, vector<1x64x64xbf16>
    %50 = vector.shape_cast %49 : vector<1x64x64xbf16> to vector<64x64xbf16>
    %cst_35 = arith.constant dense<0.000000e+00> : vector<8x64xf32>
    %51 = tpu.matmul %48, %50, %cst_35 {dimension_numbers = #tpu.dot_dimension_numbers<[1], [0], [0], [1], [0, 0, 1, 1], [], []>} : vector<8x64xbf16>, vector<64x64xbf16>, vector<8x64xf32> -> vector<8x64xf32>
    %52 = arith.addf %46, %51 : vector<8x64xf32>
    %53 = vector.extract_strided_slice %17 {offsets = [48, 0], sizes = [8, 64], strides = [1, 1]} : vector<72x64xf32> to vector<8x64xf32>
    %54 = arith.truncf %53 : vector<8x64xf32> to vector<8x64xbf16>
    %c6 = arith.constant 6 : index
    %c0_36 = arith.constant 0 : index
    %c0_37 = arith.constant 0 : index
    %55 = vector.load %arg3[%c6, %c0_36, %c0_37] : memref<9x64x64xbf16, #tpu.memory_space<vmem>>, vector<1x64x64xbf16>
    %56 = vector.shape_cast %55 : vector<1x64x64xbf16> to vector<64x64xbf16>
    %cst_38 = arith.constant dense<0.000000e+00> : vector<8x64xf32>
    %57 = tpu.matmul %54, %56, %cst_38 {dimension_numbers = #tpu.dot_dimension_numbers<[1], [0], [0], [1], [0, 0, 1, 1], [], []>} : vector<8x64xbf16>, vector<64x64xbf16>, vector<8x64xf32> -> vector<8x64xf32>
    %58 = arith.addf %52, %57 : vector<8x64xf32>
    %59 = vector.extract_strided_slice %17 {offsets = [56, 0], sizes = [8, 64], strides = [1, 1]} : vector<72x64xf32> to vector<8x64xf32>
    %60 = arith.truncf %59 : vector<8x64xf32> to vector<8x64xbf16>
    %c7 = arith.constant 7 : index
    %c0_39 = arith.constant 0 : index
    %c0_40 = arith.constant 0 : index
    %61 = vector.load %arg3[%c7, %c0_39, %c0_40] : memref<9x64x64xbf16, #tpu.memory_space<vmem>>, vector<1x64x64xbf16>
    %62 = vector.shape_cast %61 : vector<1x64x64xbf16> to vector<64x64xbf16>
    %cst_41 = arith.constant dense<0.000000e+00> : vector<8x64xf32>
    %63 = tpu.matmul %60, %62, %cst_41 {dimension_numbers = #tpu.dot_dimension_numbers<[1], [0], [0], [1], [0, 0, 1, 1], [], []>} : vector<8x64xbf16>, vector<64x64xbf16>, vector<8x64xf32> -> vector<8x64xf32>
    %64 = arith.addf %58, %63 : vector<8x64xf32>
    %65 = vector.extract_strided_slice %17 {offsets = [64, 0], sizes = [8, 64], strides = [1, 1]} : vector<72x64xf32> to vector<8x64xf32>
    %66 = arith.truncf %65 : vector<8x64xf32> to vector<8x64xbf16>
    %c8 = arith.constant 8 : index
    %c0_42 = arith.constant 0 : index
    %c0_43 = arith.constant 0 : index
    %67 = vector.load %arg3[%c8, %c0_42, %c0_43] : memref<9x64x64xbf16, #tpu.memory_space<vmem>>, vector<1x64x64xbf16>
    %68 = vector.shape_cast %67 : vector<1x64x64xbf16> to vector<64x64xbf16>
    %cst_44 = arith.constant dense<0.000000e+00> : vector<8x64xf32>
    %69 = tpu.matmul %66, %68, %cst_44 {dimension_numbers = #tpu.dot_dimension_numbers<[1], [0], [0], [1], [0, 0, 1, 1], [], []>} : vector<8x64xbf16>, vector<64x64xbf16>, vector<8x64xf32> -> vector<8x64xf32>
    %70 = arith.addf %64, %69 : vector<8x64xf32>
    %c0_45 = arith.constant 0 : index
    %c0_46 = arith.constant 0 : index
    %71 = vector.load %arg4[%c0_45, %c0_46] : memref<1x64xf32, #tpu.memory_space<vmem>>, vector<1x64xf32>
    %72 = vector.broadcast %71 : vector<1x64xf32> to vector<8x64xf32>
    %73 = arith.addf %70, %72 : vector<8x64xf32>
    %74 = arith.truncf %73 : vector<8x64xf32> to vector<8x64xbf16>
    %c0_47 = arith.constant 0 : index
    %c0_48 = arith.constant 0 : index
    %75 = vector.load %arg5[%c0_47, %c0_48] : memref<64x10xbf16, #tpu.memory_space<vmem>>, vector<64x10xbf16>
    %cst_49 = arith.constant dense<0.000000e+00> : vector<8x10xf32>
    %76 = tpu.matmul %74, %75, %cst_49 {dimension_numbers = #tpu.dot_dimension_numbers<[1], [0], [0], [1], [0, 0, 1, 1], [], []>} : vector<8x64xbf16>, vector<64x10xbf16>, vector<8x10xf32> -> vector<8x10xf32>
    %c0_50 = arith.constant 0 : index
    %c0_51 = arith.constant 0 : index
    %77 = vector.load %arg6[%c0_50, %c0_51] : memref<1x10xf32, #tpu.memory_space<vmem>>, vector<1x10xf32>
    %78 = vector.broadcast %77 : vector<1x10xf32> to vector<8x10xf32>
    %79 = arith.addf %76, %78 : vector<8x10xf32>
    %c0_52 = arith.constant 0 : index
    %c0_53 = arith.constant 0 : index
    %80 = vector.load %arg7[%c0_52, %c0_53] : memref<8x10xf32, #tpu.memory_space<vmem>>, vector<8x10xf32>
    tpu.vector_store %arg7[%c0_52, %c0_53], %79 {strides = array<i32>} : memref<8x10xf32, #tpu.memory_space<vmem>>, vector<8x10xf32>,
    return
  }
  func.func @transform_0(%arg0: i32) -> (i32, i32, i32) {
    %c0_i32 = arith.constant 0 : i32
    %c0_i32_0 = arith.constant 0 : i32
    %c0_i32_1 = arith.constant 0 : i32
    %c0_i32_2 = arith.constant 0 : i32
    return %c0_i32, %c0_i32_0, %c0_i32_1 : i32, i32, i32
  }
  func.func @transform_1(%arg0: i32) -> (i32, i32) {
    %c0_i32 = arith.constant 0 : i32
    %c0_i32_0 = arith.constant 0 : i32
    %c0_i32_1 = arith.constant 0 : i32
    return %c0_i32, %c0_i32_0 : i32, i32
  }
  func.func @transform_2(%arg0: i32) -> (i32, i32, i32) {
    %c0_i32 = arith.constant 0 : i32
    %c0_i32_0 = arith.constant 0 : i32
    %c0_i32_1 = arith.constant 0 : i32
    %c0_i32_2 = arith.constant 0 : i32
    return %c0_i32, %c0_i32_0, %c0_i32_1 : i32, i32, i32
  }
  func.func @transform_3(%arg0: i32) -> (i32, i32) {
    %c0_i32 = arith.constant 0 : i32
    %c0_i32_0 = arith.constant 0 : i32
    %c0_i32_1 = arith.constant 0 : i32
    return %c0_i32, %c0_i32_0 : i32, i32
  }
  func.func @transform_4(%arg0: i32) -> (i32, i32) {
    %c0_i32 = arith.constant 0 : i32
    %c0_i32_0 = arith.constant 0 : i32
    %c0_i32_1 = arith.constant 0 : i32
    return %c0_i32, %c0_i32_0 : i32, i32
  }
  func.func @transform_5(%arg0: i32) -> (i32, i32) {
    %c0_i32 = arith.constant 0 : i32
    %c0_i32_0 = arith.constant 0 : i32
    %c0_i32_1 = arith.constant 0 : i32
    return %c0_i32, %c0_i32_0 : i32, i32
  }
  func.func @transform_6(%arg0: i32) -> (i32, i32) {
    %c0_i32 = arith.constant 0 : i32
    %c0_i32_0 = arith.constant 0 : i32
    %c0_i32_1 = arith.constant 0 : i32
    return %c0_i32, %c0_i32_0 : i32, i32
  }
}

</mosaic_0001>

<llo_original>
// kernel: cnn_net2_forward.3
$region0: #{cnn_net2_forward.3}
  #allocation0 [shape = 'u32[]', space=smem, size = 0x4, offset = 0x4, fixed_abs, tag = 'smem constant byte address 0x4 - core index']
  #allocation1 [shape = 'u32[144,128]{1,0:T(1,128)}', space=vmem, size = 0x12000, scoped, tag = 'internal scratch']
  %s0 = inlined_call_operand.vmem [shape: bf16[4,352,9], index: 0, kind: input, shape index: {}]
  %s1 = inlined_call_operand.vmem [shape: bf16[9,16], index: 1, kind: input, shape index: {}]
  %s2 = inlined_call_operand.vmem [shape: bf16[352,16], index: 2, kind: output, shape index: {}]
  %s3 = sld [smem:[#allocation0]]
  $region82: #{cnn_net2_forward.3} parent=0
    _
  %s5 = ssub.s32 1, %s3
  %s6 = scalar_select 0, %s5, %s3
  $region1: #{cnn_net2_forward.3} parent=0
    #allocation2 [shape = 'u8[360448]{0}', space=vmem, size = 0x58000, scoped, tag = 'input window, operand 0']
    loop: start=0, step=1, limit=4
    $region2: #{cnn_net2_forward.3} parent=1 // loop_pre_header
      _
    $region3: #{cnn_net2_forward.3} parent=1 // loop_header
      %s8 = sphi 0, %s12
      %p9 = scmp.ge.s32.totalorder %s8, 4
      %s18 = sphi 0, %s20
      %s21 = sphi 0, %s18
      %s22 = sphi 0, %s21
      %s38 = sphi 0, %s22
      %s42 = sphi 0, %s42
      %s44 = sphi 0, %s42
      %s45 = sphi 0, %s44
      %s59 = sphi 0, %s45
      %s65 = sphi 0, %s67
      %s68 = sphi 0, %s65
      %s69 = sphi 0, %s68
      %s85 = sphi 0, %s69
    $region4: #{cnn_net2_forward.3} parent=1 // loop_header_branch
      %11 = sbr.rel (%p9) target = $region8
    $region5: #{cnn_net2_forward.3} parent=1 // loop_body
      %s13 = ssub.s32 %s8, 1
      %s14 = ssub.s32 %s8, 2
      %s15 = sadd.s32 %s8, 1
      %s16 = ssub.s32 %s8, %s15
      %p17 = scmp.eq.s32.totalorder %s16, 0
      %s19 = sadd.s32 %s18, 1
      %s20 = scalar_select %p17, %s18, %s19
      %p23 = pneg %p17
      %p24 = scmp.eq.s32.totalorder %s8, 1
      %p25 = por %p23, %p24
      %p26 = scmp.ne.s32.totalorder %s18, %s21
      %p27 = scmp.eq.s32.totalorder %s8, 0
      %p28 = por %p26, %p27
      %p29 = scmp.ne.s32.totalorder %s18, %s21
      %p30 = scmp.eq.s32.totalorder %s13, 1
      %p31 = por %p29, %p30
      %p32 = scmp.ne.s32.totalorder %s21, %s22
      %p33 = scmp.eq.s32.totalorder %s13, 0
      %p34 = por %p32, %p33
      %p35 = scmp.ne.s32.totalorder %s21, %s22
      %p36 = scmp.eq.s32.totalorder %s14, 1
      %p37 = por %p35, %p36
      %p39 = scmp.ne.s32.totalorder %s22, %s38
      %p40 = scmp.eq.s32.totalorder %s14, 0
      %p41 = por %p39, %p40
      %s43 = sadd.s32 %s42, 1
      %p46 = scmp.eq.s32.totalorder %s8, 1
      %p47 = scmp.ne.s32.totalorder %s42, %s44
      %p48 = scmp.eq.s32.totalorder %s8, 0
      %p49 = por %p47, %p48
      %p50 = scmp.ne.s32.totalorder %s42, %s44
      %p51 = scmp.eq.s32.totalorder %s13, 1
      %p52 = por %p50, %p51
      %p53 = scmp.ne.s32.totalorder %s44, %s45
      %p54 = scmp.eq.s32.totalorder %s13, 0
      %p55 = por %p53, %p54
      %p56 = scmp.ne.s32.totalorder %s44, %s45
      %p57 = scmp.eq.s32.totalorder %s14, 1
      %p58 = por %p56, %p57
      %p60 = scmp.ne.s32.totalorder %s45, %s59
      %p61 = scmp.eq.s32.totalorder %s14, 0
      %p62 = por %p60, %p61
      %s63 = ssub.s32 %s8, %s15
      %p64 = scmp.eq.s32.totalorder %s63, 0
      %s66 = sadd.s32 %s65, 1
      %s67 = scalar_select %p64, %s65, %s66
      %p70 = pneg %p64
      %p71 = scmp.eq.s32.totalorder %s8, 1
      %p72 = por %p70, %p71
      %p73 = scmp.ne.s32.totalorder %s65, %s68
      %p74 = scmp.eq.s32.totalorder %s8, 0
      %p75 = por %p73, %p74
      %p76 = scmp.ne.s32.totalorder %s65, %s68
      %p77 = scmp.eq.s32.totalorder %s13, 1
      %p78 = por %p76, %p77
      %p79 = scmp.ne.s32.totalorder %s68, %s69
      %p80 = scmp.eq.s32.totalorder %s13, 0
      %p81 = por %p79, %p80
      %p82 = scmp.ne.s32.totalorder %s68, %s69
      %p83 = scmp.eq.s32.totalorder %s14, 1
      %p84 = por %p82, %p83
      %p86 = scmp.ne.s32.totalorder %s69, %s85
      %p87 = scmp.eq.s32.totalorder %s14, 0
      %p88 = por %p86, %p87
      %p89 = scmp.le.s32.totalorder 1, %s8
      %p90 = scmp.lt.s32.totalorder %s8, 3
      %p91 = pnand %p89, %p90
      %p92 = pneg %p91
      // Predicated region
      $region9: #{cnn_net2_forward.3} parent=5 // pred_check
        _
      $region10: #{cnn_net2_forward.3} parent=5 // pred_check_branch
        %94 = sbr.rel (%p91) target = $region12
      $region11: #{cnn_net2_forward.3} parent=5 // pred_region
        %s95 = ssub.s32 %s8, 1
        // Predicated region
        $region13: #{cnn_net2_forward.3} parent=11 // pred_check
          %p96 = pneg %p55
        $region14: #{cnn_net2_forward.3} parent=11 // pred_check_branch
          %98 = sbr.rel (%p96) target = $region16
        $region15: #{cnn_net2_forward.3} parent=11 // pred_region
          _
        $region16: #{cnn_net2_forward.3} parent=11 // pred_fallthru
          _
      $region12: #{cnn_net2_forward.3} parent=5 // pred_fallthru
        _
      %p99 = scmp.lt.s32.totalorder %s8, 2
      // Predicated region
      $region17: #{cnn_net2_forward.3} parent=5 // pred_check
        %p100 = pneg %p99
      $region18: #{cnn_net2_forward.3} parent=5 // pred_check_branch
        %102 = sbr.rel (%p100) target = $region20
      $region19: #{cnn_net2_forward.3} parent=5 // pred_region
        // Predicated region
        $region21: #{cnn_net2_forward.3} parent=19 // pred_check
          %p103 = pneg %p28
        $region22: #{cnn_net2_forward.3} parent=19 // pred_check_branch
          %105 = sbr.rel (%p103) target = $region24
        $region23: #{cnn_net2_forward.3} parent=19 // pred_region
          %s106 = sand.u32 %s18, 1
          %s107 = sand.u32 %s18, 1
          %s108 = smul.addr %s107, 352
          %s109 = scalar_lea.vmem [#allocation2], %s108
          %s110 = smul.u32 22, %s8
          %s111 = smul.addr %s110, 4
          %s112 = scalar_lea.vmem %s0, %s111
          // Predicated region
          $region25: #{cnn_net2_forward.3} parent=23 // pred_check
            _
          $region26: #{cnn_net2_forward.3} parent=23 // pred_check_branch
            %114 = sbr.rel (0) target = $region28
          $region27: #{cnn_net2_forward.3} parent=23 // pred_region
            // Predicated region
            $region29: #{cnn_net2_forward.3} parent=27 // pred_check
              _
            $region30: #{cnn_net2_forward.3} parent=27 // pred_check_branch
              %116 = sbr.rel target = $region32
            $region31: #{cnn_net2_forward.3} parent=27 // pred_region
              // Predicated region
              $region44: #{cnn_net2_forward.3} parent=31 // pred_check
                _
              $region45: #{cnn_net2_forward.3} parent=31 // pred_check_branch
                %306 = sbr.rel (0) target = $region47
              $region46: #{cnn_net2_forward.3} parent=31 // pred_region
                loop: start=0, step=1, limit=1
                $region48: #{cnn_net2_forward.3} parent=46 // loop_pre_header
                  _
                $region49: #{cnn_net2_forward.3} parent=46 // loop_header
                  %s308 = sphi 0, %s312
                  %p309 = scmp.ge.s32.totalorder %s308, 1
                  %s313 = sphi %s112, %s112
                  %s314 = sphi %s109, %s109
                $region50: #{cnn_net2_forward.3} parent=46 // loop_header_branch
                  %311 = sbr.rel (%p309) target = $region54
                $region51: #{cnn_net2_forward.3} parent=46 // loop_body
                  _
                $region52: #{cnn_net2_forward.3} parent=46 // loop_footer
                  %s312 = sadd.s32 1, %s308
                $region53: #{cnn_net2_forward.3} parent=46 // loop_footer_branch
                  %307 = sbr.rel target = $region49
                $region54: #{cnn_net2_forward.3} parent=46 // loop_exit
                  _
                %s316 = ssub.s32 16, 1
                loop: start=0, step=1, limit=1
                $region55: #{cnn_net2_forward.3} parent=46 // loop_pre_header
                  _
                $region56: #{cnn_net2_forward.3} parent=46 // loop_header
                  %s318 = sphi 0, %s322
                  %p319 = scmp.ge.s32.totalorder %s318, 1
                  %s323 = sphi %s112, %s112
                  %s324 = sphi %s109, %s109
                $region57: #{cnn_net2_forward.3} parent=46 // loop_header_branch
                  %321 = sbr.rel (%p319) target = $region61
                $region58: #{cnn_net2_forward.3} parent=46 // loop_body
                  %v325 = vld [vmem:[%s323] sm:%s316]
                  %326 = vst [vmem:[%s324] sm:%s316] %v325
                  %v327 = vld [vmem:[%s323 + $0x4] sm:%s316]
                  %328 = vst [vmem:[%s324 + $0x4] sm:%s316] %v327
                  %v329 = vld [vmem:[%s323 + $0x8] sm:%s316]
                  %330 = vst [vmem:[%s324 + $0x8] sm:%s316] %v329
                  %v331 = vld [vmem:[%s323 + $0xc] sm:%s316]
                  %332 = vst [vmem:[%s324 + $0xc] sm:%s316] %v331
                  %v333 = vld [vmem:[%s323 + $0x10] sm:%s316]
                  %334 = vst [vmem:[%s324 + $0x10] sm:%s316] %v333
                  %v335 = vld [vmem:[%s323 + $0x14] sm:%s316]
                  %336 = vst [vmem:[%s324 + $0x14] sm:%s316] %v335
                  %v337 = vld [vmem:[%s323 + $0x18] sm:%s316]
                  %338 = vst [vmem:[%s324 + $0x18] sm:%s316] %v337
                  %v339 = vld [vmem:[%s323 + $0x1c] sm:%s316]
                  %340 = vst [vmem:[%s324 + $0x1c] sm:%s316] %v339
                  %v341 = vld [vmem:[%s323 + $0x20] sm:%s316]
                  %342 = vst [vmem:[%s324 + $0x20] sm:%s316] %v341
                  %v343 = vld [vmem:[%s323 + $0x24] sm:%s316]
                  %344 = vst [vmem:[%s324 + $0x24] sm:%s316] %v343
                  %v345 = vld [vmem:[%s323 + $0x28] sm:%s316]
                  %346 = vst [vmem:[%s324 + $0x28] sm:%s316] %v345
                  %v347 = vld [vmem:[%s323 + $0x2c] sm:%s316]
                  %348 = vst [vmem:[%s324 + $0x2c] sm:%s316] %v347
                  %v349 = vld [vmem:[%s323 + $0x30] sm:%s316]
                  %350 = vst [vmem:[%s324 + $0x30] sm:%s316] %v349
                  %v351 = vld [vmem:[%s323 + $0x34] sm:%s316]
                  %352 = vst [vmem:[%s324 + $0x34] sm:%s316] %v351
                  %v353 = vld [vmem:[%s323 + $0x38] sm:%s316]
                  %354 = vst [vmem:[%s324 + $0x38] sm:%s316] %v353
                  %v355 = vld [vmem:[%s323 + $0x3c] sm:%s316]
                  %356 = vst [vmem:[%s324 + $0x3c] sm:%s316] %v355
                  %v357 = vld [vmem:[%s323 + $0x40] sm:%s316]
                  %358 = vst [vmem:[%s324 + $0x40] sm:%s316] %v357
                  %v359 = vld [vmem:[%s323 + $0x44] sm:%s316]
                  %360 = vst [vmem:[%s324 + $0x44] sm:%s316] %v359
                  %v361 = vld [vmem:[%s323 + $0x48] sm:%s316]
                  %362 = vst [vmem:[%s324 + $0x48] sm:%s316] %v361
                  %v363 = vld [vmem:[%s323 + $0x4c] sm:%s316]
                  %364 = vst [vmem:[%s324 + $0x4c] sm:%s316] %v363
                  %v365 = vld [vmem:[%s323 + $0x50] sm:%s316]
                  %366 = vst [vmem:[%s324 + $0x50] sm:%s316] %v365
                  %v367 = vld [vmem:[%s323 + $0x54] sm:%s316]
                  %368 = vst [vmem:[%s324 + $0x54] sm:%s316] %v367
                  %v369 = vld [vmem:[%s323 + $0xb0] sm:%s316]
                  %370 = vst [vmem:[%s324 + $0x58] sm:%s316] %v369
                  %v371 = vld [vmem:[%s323 + $0xb4] sm:%s316]
                  %372 = vst [vmem:[%s324 + $0x5c] sm:%s316] %v371
                  %v373 = vld [vmem:[%s323 + $0xb8] sm:%s316]
                  %374 = vst [vmem:[%s324 + $0x60] sm:%s316] %v373
                  %v375 = vld [vmem:[%s323 + $0xbc] sm:%s316]
                  %376 = vst [vmem:[%s324 + $0x64] sm:%s316] %v375
                  %v377 = vld [vmem:[%s323 + $0xc0] sm:%s316]
                  %378 = vst [vmem:[%s324 + $0x68] sm:%s316] %v377
                  %v379 = vld [vmem:[%s323 + $0xc4] sm:%s316]
                  %380 = vst [vmem:[%s324 + $0x6c] sm:%s316] %v379
                  %v381 = vld [vmem:[%s323 + $0xc8] sm:%s316]
                  %382 = vst [vmem:[%s324 + $0x70] sm:%s316] %v381
                  %v383 = vld [vmem:[%s323 + $0xcc] sm:%s316]
                  %384 = vst [vmem:[%s324 + $0x74] sm:%s316] %v383
                  %v385 = vld [vmem:[%s323 + $0xd0] sm:%s316]
                  %386 = vst [vmem:[%s324 + $0x78] sm:%s316] %v385
                  %v387 = vld [vmem:[%s323 + $0xd4] sm:%s316]
                  %388 = vst [vmem:[%s324 + $0x7c] sm:%s316] %v387
                  %v389 = vld [vmem:[%s323 + $0xd8] sm:%s316]
                  %390 = vst [vmem:[%s324 + $0x80] sm:%s316] %v389
                  %v391 = vld [vmem:[%s323 + $0xdc] sm:%s316]
                  %392 = vst [vmem:[%s324 + $0x84] sm:%s316] %v391
                  %v393 = vld [vmem:[%s323 + $0xe0] sm:%s316]
                  %394 = vst [vmem:[%s324 + $0x88] sm:%s316] %v393
                  %v395 = vld [vmem:[%s323 + $0xe4] sm:%s316]
                  %396 = vst [vmem:[%s324 + $0x8c] sm:%s316] %v395
                  %v397 = vld [vmem:[%s323 + $0xe8] sm:%s316]
                  %398 = vst [vmem:[%s324 + $0x90] sm:%s316] %v397
                  %v399 = vld [vmem:[%s323 + $0xec] sm:%s316]
                  %400 = vst [vmem:[%s324 + $0x94] sm:%s316] %v399
                  %v401 = vld [vmem:[%s323 + $0xf0] sm:%s316]
                  %402 = vst [vmem:[%s324 + $0x98] sm:%s316] %v401
                  %v403 = vld [vmem:[%s323 + $0xf4] sm:%s316]
                  %404 = vst [vmem:[%s324 + $0x9c] sm:%s316] %v403
                  %v405 = vld [vmem:[%s323 + $0xf8] sm:%s316]
                  %406 = vst [vmem:[%s324 + $0xa0] sm:%s316] %v405
                  %v407 = vld [vmem:[%s323 + $0xfc] sm:%s316]
                  %408 = vst [vmem:[%s324 + $0xa4] sm:%s316] %v407
                  %v409 = vld [vmem:[%s323 + $0x100] sm:%s316]
                  %410 = vst [vmem:[%s324 + $0xa8] sm:%s316] %v409
                  %v411 = vld [vmem:[%s323 + $0x104] sm:%s316]
                  %412 = vst [vmem:[%s324 + $0xac] sm:%s316] %v411
                  %v413 = vld [vmem:[%s323 + $0x160] sm:%s316]
                  %414 = vst [vmem:[%s324 + $0xb0] sm:%s316] %v413
                  %v415 = vld [vmem:[%s323 + $0x164] sm:%s316]
                  %416 = vst [vmem:[%s324 + $0xb4] sm:%s316] %v415
                  %v417 = vld [vmem:[%s323 + $0x168] sm:%s316]
                  %418 = vst [vmem:[%s324 + $0xb8] sm:%s316] %v417
                  %v419 = vld [vmem:[%s323 + $0x16c] sm:%s316]
                  %420 = vst [vmem:[%s324 + $0xbc] sm:%s316] %v419
                  %v421 = vld [vmem:[%s323 + $0x170] sm:%s316]
                  %422 = vst [vmem:[%s324 + $0xc0] sm:%s316] %v421
                  %v423 = vld [vmem:[%s323 + $0x174] sm:%s316]
                  %424 = vst [vmem:[%s324 + $0xc4] sm:%s316] %v423
                  %v425 = vld [vmem:[%s323 + $0x178] sm:%s316]
                  %426 = vst [vmem:[%s324 + $0xc8] sm:%s316] %v425
                  %v427 = vld [vmem:[%s323 + $0x17c] sm:%s316]
                  %428 = vst [vmem:[%s324 + $0xcc] sm:%s316] %v427
                  %v429 = vld [vmem:[%s323 + $0x180] sm:%s316]
                  %430 = vst [vmem:[%s324 + $0xd0] sm:%s316] %v429
                  %v431 = vld [vmem:[%s323 + $0x184] sm:%s316]
                  %432 = vst [vmem:[%s324 + $0xd4] sm:%s316] %v431
                  %v433 = vld [vmem:[%s323 + $0x188] sm:%s316]
                  %434 = vst [vmem:[%s324 + $0xd8] sm:%s316] %v433
                  %v435 = vld [vmem:[%s323 + $0x18c] sm:%s316]
                  %436 = vst [vmem:[%s324 + $0xdc] sm:%s316] %v435
                  %v437 = vld [vmem:[%s323 + $0x190] sm:%s316]
                  %438 = vst [vmem:[%s324 + $0xe0] sm:%s316] %v437
                  %v439 = vld [vmem:[%s323 + $0x194] sm:%s316]
                  %440 = vst [vmem:[%s324 + $0xe4] sm:%s316] %v439
                  %v441 = vld [vmem:[%s323 + $0x198] sm:%s316]
                  %442 = vst [vmem:[%s324 + $0xe8] sm:%s316] %v441
                  %v443 = vld [vmem:[%s323 + $0x19c] sm:%s316]
                  %444 = vst [vmem:[%s324 + $0xec] sm:%s316] %v443
                  %v445 = vld [vmem:[%s323 + $0x1a0] sm:%s316]
                  %446 = vst [vmem:[%s324 + $0xf0] sm:%s316] %v445
                  %v447 = vld [vmem:[%s323 + $0x1a4] sm:%s316]
                  %448 = vst [vmem:[%s324 + $0xf4] sm:%s316] %v447
                  %v449 = vld [vmem:[%s323 + $0x1a8] sm:%s316]
                  %450 = vst [vmem:[%s324 + $0xf8] sm:%s316] %v449
                  %v451 = vld [vmem:[%s323 + $0x1ac] sm:%s316]
                  %452 = vst [vmem:[%s324 + $0xfc] sm:%s316] %v451
                  %v453 = vld [vmem:[%s323 + $0x1b0] sm:%s316]
                  %454 = vst [vmem:[%s324 + $0x100] sm:%s316] %v453
                  %v455 = vld [vmem:[%s323 + $0x1b4] sm:%s316]
                  %456 = vst [vmem:[%s324 + $0x104] sm:%s316] %v455
                  %v457 = vld [vmem:[%s323 + $0x210] sm:%s316]
                  %458 = vst [vmem:[%s324 + $0x108] sm:%s316] %v457
                  %v459 = vld [vmem:[%s323 + $0x214] sm:%s316]
                  %460 = vst [vmem:[%s324 + $0x10c] sm:%s316] %v459
                  %v461 = vld [vmem:[%s323 + $0x218] sm:%s316]
                  %462 = vst [vmem:[%s324 + $0x110] sm:%s316] %v461
                  %v463 = vld [vmem:[%s323 + $0x21c] sm:%s316]
                  %464 = vst [vmem:[%s324 + $0x114] sm:%s316] %v463
                  %v465 = vld [vmem:[%s323 + $0x220] sm:%s316]
                  %466 = vst [vmem:[%s324 + $0x118] sm:%s316] %v465
                  %v467 = vld [vmem:[%s323 + $0x224] sm:%s316]
                  %468 = vst [vmem:[%s324 + $0x11c] sm:%s316] %v467
                  %v469 = vld [vmem:[%s323 + $0x228] sm:%s316]
                  %470 = vst [vmem:[%s324 + $0x120] sm:%s316] %v469
                  %v471 = vld [vmem:[%s323 + $0x22c] sm:%s316]
                  %472 = vst [vmem:[%s324 + $0x124] sm:%s316] %v471
                  %v473 = vld [vmem:[%s323 + $0x230] sm:%s316]
                  %474 = vst [vmem:[%s324 + $0x128] sm:%s316] %v473
                  %v475 = vld [vmem:[%s323 + $0x234] sm:%s316]
                  %476 = vst [vmem:[%s324 + $0x12c] sm:%s316] %v475
                  %v477 = vld [vmem:[%s323 + $0x238] sm:%s316]
                  %478 = vst [vmem:[%s324 + $0x130] sm:%s316] %v477
                  %v479 = vld [vmem:[%s323 + $0x23c] sm:%s316]
                  %480 = vst [vmem:[%s324 + $0x134] sm:%s316] %v479
                  %v481 = vld [vmem:[%s323 + $0x240] sm:%s316]
                  %482 = vst [vmem:[%s324 + $0x138] sm:%s316] %v481
                  %v483 = vld [vmem:[%s323 + $0x244] sm:%s316]
                  %484 = vst [vmem:[%s324 + $0x13c] sm:%s316] %v483
                  %v485 = vld [vmem:[%s323 + $0x248] sm:%s316]
                  %486 = vst [vmem:[%s324 + $0x140] sm:%s316] %v485
                  %v487 = vld [vmem:[%s323 + $0x24c] sm:%s316]
                  %488 = vst [vmem:[%s324 + $0x144] sm:%s316] %v487
                  %v489 = vld [vmem:[%s323 + $0x250] sm:%s316]
                  %490 = vst [vmem:[%s324 + $0x148] sm:%s316] %v489
                  %v491 = vld [vmem:[%s323 + $0x254] sm:%s316]
                  %492 = vst [vmem:[%s324 + $0x14c] sm:%s316] %v491
                  %v493 = vld [vmem:[%s323 + $0x258] sm:%s316]
                  %494 = vst [vmem:[%s324 + $0x150] sm:%s316] %v493
                  %v495 = vld [vmem:[%s323 + $0x25c] sm:%s316]
                  %496 = vst [vmem:[%s324 + $0x154] sm:%s316] %v495
                  %v497 = vld [vmem:[%s323 + $0x260] sm:%s316]
                  %498 = vst [vmem:[%s324 + $0x158] sm:%s316] %v497
                  %v499 = vld [vmem:[%s323 + $0x264] sm:%s316]
                  %500 = vst [vmem:[%s324 + $0x15c] sm:%s316] %v499
                $region59: #{cnn_net2_forward.3} parent=46 // loop_footer
                  %s322 = sadd.s32 1, %s318
                $region60: #{cnn_net2_forward.3} parent=46 // loop_footer_branch
                  %317 = sbr.rel target = $region56
                $region61: #{cnn_net2_forward.3} parent=46 // loop_exit
                  _
              $region47: #{cnn_net2_forward.3} parent=31 // pred_fallthru
                _
            $region32: #{cnn_net2_forward.3} parent=27 // pred_fallthru
              _
            // Predicated region
            $region33: #{cnn_net2_forward.3} parent=27 // pred_check
              _
            $region34: #{cnn_net2_forward.3} parent=27 // pred_check_branch
              %118 = sbr.rel (0) target = $region36
            $region35: #{cnn_net2_forward.3} parent=27 // pred_region
              %s120 = ssub.s32 16, 1
              loop: start=0, step=1, limit=1
              $region37: #{cnn_net2_forward.3} parent=35 // loop_pre_header
                _
              $region38: #{cnn_net2_forward.3} parent=35 // loop_header
                %s122 = sphi 0, %s126
                %p123 = scmp.ge.s32.totalorder %s122, 1
                %s127 = sphi %s112, %s112
                %s128 = sphi %s109, %s109
              $region39: #{cnn_net2_forward.3} parent=35 // loop_header_branch
                %125 = sbr.rel (%p123) target = $region43
              $region40: #{cnn_net2_forward.3} parent=35 // loop_body
                %v129 = vld [vmem:[%s127] sm:%s120]
                %130 = vst [vmem:[%s128] sm:%s120] %v129
                %v131 = vld [vmem:[%s127 + $0x4] sm:%s120]
                %132 = vst [vmem:[%s128 + $0x4] sm:%s120] %v131
                %v133 = vld [vmem:[%s127 + $0x8] sm:%s120]
                %134 = vst [vmem:[%s128 + $0x8] sm:%s120] %v133
                %v135 = vld [vmem:[%s127 + $0xc] sm:%s120]
                %136 = vst [vmem:[%s128 + $0xc] sm:%s120] %v135
                %v137 = vld [vmem:[%s127 + $0x10] sm:%s120]
                %138 = vst [vmem:[%s128 + $0x10] sm:%s120] %v137
                %v139 = vld [vmem:[%s127 + $0x14] sm:%s120]
                %140 = vst [vmem:[%s128 + $0x14] sm:%s120] %v139
                %v141 = vld [vmem:[%s127 + $0x18] sm:%s120]
                %142 = vst [vmem:[%s128 + $0x18] sm:%s120] %v141
                %v143 = vld [vmem:[%s127 + $0x1c] sm:%s120]
                %144 = vst [vmem:[%s128 + $0x1c] sm:%s120] %v143
                %v145 = vld [vmem:[%s127 + $0x20] sm:%s120]
                %146 = vst [vmem:[%s128 + $0x20] sm:%s120] %v145
                %v147 = vld [vmem:[%s127 + $0x24] sm:%s120]
                %148 = vst [vmem:[%s128 + $0x24] sm:%s120] %v147
                %v149 = vld [vmem:[%s127 + $0x28] sm:%s120]
                %150 = vst [vmem:[%s128 + $0x28] sm:%s120] %v149
                %v151 = vld [vmem:[%s127 + $0x2c] sm:%s120]
                %152 = vst [vmem:[%s128 + $0x2c] sm:%s120] %v151
                %v153 = vld [vmem:[%s127 + $0x30] sm:%s120]
                %154 = vst [vmem:[%s128 + $0x30] sm:%s120] %v153
                %v155 = vld [vmem:[%s127 + $0x34] sm:%s120]
                %156 = vst [vmem:[%s128 + $0x34] sm:%s120] %v155
                %v157 = vld [vmem:[%s127 + $0x38] sm:%s120]
                %158 = vst [vmem:[%s128 + $0x38] sm:%s120] %v157
                %v159 = vld [vmem:[%s127 + $0x3c] sm:%s120]
                %160 = vst [vmem:[%s128 + $0x3c] sm:%s120] %v159
                %v161 = vld [vmem:[%s127 + $0x40] sm:%s120]
                %162 = vst [vmem:[%s128 + $0x40] sm:%s120] %v161
                %v163 = vld [vmem:[%s127 + $0x44] sm:%s120]
                %164 = vst [vmem:[%s128 + $0x44] sm:%s120] %v163
                %v165 = vld [vmem:[%s127 + $0x48] sm:%s120]
                %166 = vst [vmem:[%s128 + $0x48] sm:%s120] %v165
                %v167 = vld [vmem:[%s127 + $0x4c] sm:%s120]
                %168 = vst [vmem:[%s128 + $0x4c] sm:%s120] %v167
                %v169 = vld [vmem:[%s127 + $0x50] sm:%s120]
                %170 = vst [vmem:[%s128 + $0x50] sm:%s120] %v169
                %v171 = vld [vmem:[%s127 + $0x54] sm:%s120]
                %172 = vst [vmem:[%s128 + $0x54] sm:%s120] %v171
                %v173 = vld [vmem:[%s127 + $0xb0] sm:%s120]
                %174 = vst [vmem:[%s128 + $0x58] sm:%s120] %v173
                %v175 = vld [vmem:[%s127 + $0xb4] sm:%s120]
                %176 = vst [vmem:[%s128 + $0x5c] sm:%s120] %v175
                %v177 = vld [vmem:[%s127 + $0xb8] sm:%s120]
                %178 = vst [vmem:[%s128 + $0x60] sm:%s120] %v177
                %v179 = vld [vmem:[%s127 + $0xbc] sm:%s120]
                %180 = vst [vmem:[%s128 + $0x64] sm:%s120] %v179
                %v181 = vld [vmem:[%s127 + $0xc0] sm:%s120]
                %182 = vst [vmem:[%s128 + $0x68] sm:%s120] %v181
                %v183 = vld [vmem:[%s127 + $0xc4] sm:%s120]
                %184 = vst [vmem:[%s128 + $0x6c] sm:%s120] %v183
                %v185 = vld [vmem:[%s127 + $0xc8] sm:%s120]
                %186 = vst [vmem:[%s128 + $0x70] sm:%s120] %v185
                %v187 = vld [vmem:[%s127 + $0xcc] sm:%s120]
                %188 = vst [vmem:[%s128 + $0x74] sm:%s120] %v187
                %v189 = vld [vmem:[%s127 + $0xd0] sm:%s120]
                %190 = vst [vmem:[%s128 + $0x78] sm:%s120] %v189
                %v191 = vld [vmem:[%s127 + $0xd4] sm:%s120]
                %192 = vst [vmem:[%s128 + $0x7c] sm:%s120] %v191
                %v193 = vld [vmem:[%s127 + $0xd8] sm:%s120]
                %194 = vst [vmem:[%s128 + $0x80] sm:%s120] %v193
                %v195 = vld [vmem:[%s127 + $0xdc] sm:%s120]
                %196 = vst [vmem:[%s128 + $0x84] sm:%s120] %v195
                %v197 = vld [vmem:[%s127 + $0xe0] sm:%s120]
                %198 = vst [vmem:[%s128 + $0x88] sm:%s120] %v197
                %v199 = vld [vmem:[%s127 + $0xe4] sm:%s120]
                %200 = vst [vmem:[%s128 + $0x8c] sm:%s120] %v199
                %v201 = vld [vmem:[%s127 + $0xe8] sm:%s120]
                %202 = vst [vmem:[%s128 + $0x90] sm:%s120] %v201
                %v203 = vld [vmem:[%s127 + $0xec] sm:%s120]
                %204 = vst [vmem:[%s128 + $0x94] sm:%s120] %v203
                %v205 = vld [vmem:[%s127 + $0xf0] sm:%s120]
                %206 = vst [vmem:[%s128 + $0x98] sm:%s120] %v205
                %v207 = vld [vmem:[%s127 + $0xf4] sm:%s120]
                %208 = vst [vmem:[%s128 + $0x9c] sm:%s120] %v207
                %v209 = vld [vmem:[%s127 + $0xf8] sm:%s120]
                %210 = vst [vmem:[%s128 + $0xa0] sm:%s120] %v209
                %v211 = vld [vmem:[%s127 + $0xfc] sm:%s120]
                %212 = vst [vmem:[%s128 + $0xa4] sm:%s120] %v211
                %v213 = vld [vmem:[%s127 + $0x100] sm:%s120]
                %214 = vst [vmem:[%s128 + $0xa8] sm:%s120] %v213
                %v215 = vld [vmem:[%s127 + $0x104] sm:%s120]
                %216 = vst [vmem:[%s128 + $0xac] sm:%s120] %v215
                %v217 = vld [vmem:[%s127 + $0x160] sm:%s120]
                %218 = vst [vmem:[%s128 + $0xb0] sm:%s120] %v217
                %v219 = vld [vmem:[%s127 + $0x164] sm:%s120]
                %220 = vst [vmem:[%s128 + $0xb4] sm:%s120] %v219
                %v221 = vld [vmem:[%s127 + $0x168] sm:%s120]
                %222 = vst [vmem:[%s128 + $0xb8] sm:%s120] %v221
                %v223 = vld [vmem:[%s127 + $0x16c] sm:%s120]
                %224 = vst [vmem:[%s128 + $0xbc] sm:%s120] %v223
                %v225 = vld [vmem:[%s127 + $0x170] sm:%s120]
                %226 = vst [vmem:[%s128 + $0xc0] sm:%s120] %v225
                %v227 = vld [vmem:[%s127 + $0x174] sm:%s120]
                %228 = vst [vmem:[%s128 + $0xc4] sm:%s120] %v227
                %v229 = vld [vmem:[%s127 + $0x178] sm:%s120]
                %230 = vst [vmem:[%s128 + $0xc8] sm:%s120] %v229
                %v231 = vld [vmem:[%s127 + $0x17c] sm:%s120]
                %232 = vst [vmem:[%s128 + $0xcc] sm:%s120] %v231
                %v233 = vld [vmem:[%s127 + $0x180] sm:%s120]
                %234 = vst [vmem:[%s128 + $0xd0] sm:%s120] %v233
                %v235 = vld [vmem:[%s127 + $0x184] sm:%s120]
                %236 = vst [vmem:[%s128 + $0xd4] sm:%s120] %v235
                %v237 = vld [vmem:[%s127 + $0x188] sm:%s120]
                %238 = vst [vmem:[%s128 + $0xd8] sm:%s120] %v237
                %v239 = vld [vmem:[%s127 + $0x18c] sm:%s120]
                %240 = vst [vmem:[%s128 + $0xdc] sm:%s120] %v239
                %v241 = vld [vmem:[%s127 + $0x190] sm:%s120]
                %242 = vst [vmem:[%s128 + $0xe0] sm:%s120] %v241
                %v243 = vld [vmem:[%s127 + $0x194] sm:%s120]
                %244 = vst [vmem:[%s128 + $0xe4] sm:%s120] %v243
                %v245 = vld [vmem:[%s127 + $0x198] sm:%s120]
                %246 = vst [vmem:[%s128 + $0xe8] sm:%s120] %v245
                %v247 = vld [vmem:[%s127 + $0x19c] sm:%s120]
                %248 = vst [vmem:[%s128 + $0xec] sm:%s120] %v247
                %v249 = vld [vmem:[%s127 + $0x1a0] sm:%s120]
                %250 = vst [vmem:[%s128 + $0xf0] sm:%s120] %v249
                %v251 = vld [vmem:[%s127 + $0x1a4] sm:%s120]
                %252 = vst [vmem:[%s128 + $0xf4] sm:%s120] %v251
                %v253 = vld [vmem:[%s127 + $0x1a8] sm:%s120]
                %254 = vst [vmem:[%s128 + $0xf8] sm:%s120] %v253
                %v255 = vld [vmem:[%s127 + $0x1ac] sm:%s120]
                %256 = vst [vmem:[%s128 + $0xfc] sm:%s120] %v255
                %v257 = vld [vmem:[%s127 + $0x1b0] sm:%s120]
                %258 = vst [vmem:[%s128 + $0x100] sm:%s120] %v257
                %v259 = vld [vmem:[%s127 + $0x1b4] sm:%s120]
                %260 = vst [vmem:[%s128 + $0x104] sm:%s120] %v259
                %v261 = vld [vmem:[%s127 + $0x210] sm:%s120]
                %262 = vst [vmem:[%s128 + $0x108] sm:%s120] %v261
                %v263 = vld [vmem:[%s127 + $0x214] sm:%s120]
                %264 = vst [vmem:[%s128 + $0x10c] sm:%s120] %v263
                %v265 = vld [vmem:[%s127 + $0x218] sm:%s120]
                %266 = vst [vmem:[%s128 + $0x110] sm:%s120] %v265
                %v267 = vld [vmem:[%s127 + $0x21c] sm:%s120]
                %268 = vst [vmem:[%s128 + $0x114] sm:%s120] %v267
                %v269 = vld [vmem:[%s127 + $0x220] sm:%s120]
                %270 = vst [vmem:[%s128 + $0x118] sm:%s120] %v269
                %v271 = vld [vmem:[%s127 + $0x224] sm:%s120]
                %272 = vst [vmem:[%s128 + $0x11c] sm:%s120] %v271
                %v273 = vld [vmem:[%s127 + $0x228] sm:%s120]
                %274 = vst [vmem:[%s128 + $0x120] sm:%s120] %v273
                %v275 = vld [vmem:[%s127 + $0x22c] sm:%s120]
                %276 = vst [vmem:[%s128 + $0x124] sm:%s120] %v275
                %v277 = vld [vmem:[%s127 + $0x230] sm:%s120]
                %278 = vst [vmem:[%s128 + $0x128] sm:%s120] %v277
                %v279 = vld [vmem:[%s127 + $0x234] sm:%s120]
                %280 = vst [vmem:[%s128 + $0x12c] sm:%s120] %v279
                %v281 = vld [vmem:[%s127 + $0x238] sm:%s120]
                %282 = vst [vmem:[%s128 + $0x130] sm:%s120] %v281
                %v283 = vld [vmem:[%s127 + $0x23c] sm:%s120]
                %284 = vst [vmem:[%s128 + $0x134] sm:%s120] %v283
                %v285 = vld [vmem:[%s127 + $0x240] sm:%s120]
                %286 = vst [vmem:[%s128 + $0x138] sm:%s120] %v285
                %v287 = vld [vmem:[%s127 + $0x244] sm:%s120]
                %288 = vst [vmem:[%s128 + $0x13c] sm:%s120] %v287
                %v289 = vld [vmem:[%s127 + $0x248] sm:%s120]
                %290 = vst [vmem:[%s128 + $0x140] sm:%s120] %v289
                %v291 = vld [vmem:[%s127 + $0x24c] sm:%s120]
                %292 = vst [vmem:[%s128 + $0x144] sm:%s120] %v291
                %v293 = vld [vmem:[%s127 + $0x250] sm:%s120]
                %294 = vst [vmem:[%s128 + $0x148] sm:%s120] %v293
                %v295 = vld [vmem:[%s127 + $0x254] sm:%s120]
                %296 = vst [vmem:[%s128 + $0x14c] sm:%s120] %v295
                %v297 = vld [vmem:[%s127 + $0x258] sm:%s120]
                %298 = vst [vmem:[%s128 + $0x150] sm:%s120] %v297
                %v299 = vld [vmem:[%s127 + $0x25c] sm:%s120]
                %300 = vst [vmem:[%s128 + $0x154] sm:%s120] %v299
                %v301 = vld [vmem:[%s127 + $0x260] sm:%s120]
                %302 = vst [vmem:[%s128 + $0x158] sm:%s120] %v301
                %v303 = vld [vmem:[%s127 + $0x264] sm:%s120]
                %304 = vst [vmem:[%s128 + $0x15c] sm:%s120] %v303
              $region41: #{cnn_net2_forward.3} parent=35 // loop_footer
                %s126 = sadd.s32 1, %s122
              $region42: #{cnn_net2_forward.3} parent=35 // loop_footer_branch
                %121 = sbr.rel target = $region38
              $region43: #{cnn_net2_forward.3} parent=35 // loop_exit
                _
            $region36: #{cnn_net2_forward.3} parent=27 // pred_fallthru
              _
          $region28: #{cnn_net2_forward.3} parent=23 // pred_fallthru
            _
          %501 = vnop
        $region24: #{cnn_net2_forward.3} parent=19 // pred_fallthru
          _
      $region20: #{cnn_net2_forward.3} parent=5 // pred_fallthru
        _
      %p502 = scmp.le.s32.totalorder 1, %s8
      %p503 = scmp.lt.s32.totalorder %s8, 3
      %p504 = pnand %p502, %p503
      %p505 = pneg %p504
      // Predicated region
      $region62: #{cnn_net2_forward.3} parent=5 // pred_check
        _
      $region63: #{cnn_net2_forward.3} parent=5 // pred_check_branch
        %507 = sbr.rel (%p504) target = $region65
      $region64: #{cnn_net2_forward.3} parent=5 // pred_region
        %s508 = ssub.s32 %s8, 1
        %s509 = sand.u32 %s21, 1
        %s510 = sand.u32 %s21, 1
        %s511 = smul.addr %s510, 352
        %s512 = scalar_lea.vmem [#allocation2], %s511
        // Predicated region
        $region66: #{cnn_net2_forward.3} parent=64 // pred_check
          %p513 = pneg %p34
        $region67: #{cnn_net2_forward.3} parent=64 // pred_check_branch
          %515 = sbr.rel (%p513) target = $region69
        $region68: #{cnn_net2_forward.3} parent=64 // pred_region
          _
        $region69: #{cnn_net2_forward.3} parent=64 // pred_fallthru
          _
        %s516 = sand.u32 %s21, 1
        %s517 = sand.u32 %s21, 1
        %s518 = smul.addr %s517, 352
        %s519 = scalar_lea.vmem [#allocation2], %s518
        %p520 = pneg %p34
        %p521 = pneg %p31
        %p522 = pneg %p55
        %p523 = pneg %p52
        %p524 = pneg %p81
        %p525 = pneg %p78
        %s526 = smul.u32 22, %s13
        %p527 = scmp.lt.s32.totalorder %s526, 43
        %s528 = scalar_select %p527, %s526, 43
        %s529 = smul.addr %s528, 4
        %s530 = scalar_lea.vmem %s2, %s529
        %s531 = smul.u32 22, %s13
        %s532 = smul.u32 22, %s13
        %p533 = scmp.lt.s32.totalorder %s532, 43
        %s534 = scalar_select %p533, %s532, 43
        %s535 = smul.addr %s534, 4
        %s536 = scalar_lea.vmem %s2, %s535
        %s537 = smul.u32 22, %s13
        %v539 = vld [vmem:[%s1] sm:$0xf]
        %v540 = vld [vmem:[%s1 + $0x4] sm:$0x1]
        %v541 = vld [vmem:[%s512] sm:$0xf]
        %v542 = vld [vmem:[%s512 + $0x4] sm:$0xf]
        %v543 = vld [vmem:[%s512 + $0x8] sm:$0xf]
        %v544 = vld [vmem:[%s512 + $0xc] sm:$0xf]
        %v545 = vld [vmem:[%s512 + $0x10] sm:$0xf]
        %v546 = vld [vmem:[%s512 + $0x14] sm:$0xf]
        %v547 = vld [vmem:[%s512 + $0x18] sm:$0xf]
        %v548 = vld [vmem:[%s512 + $0x1c] sm:$0xf]
        %v549 = vld [vmem:[%s512 + $0x20] sm:$0xf]
        %v550 = vld [vmem:[%s512 + $0x24] sm:$0xf]
        %v551 = vld [vmem:[%s512 + $0x28] sm:$0xf]
        %v552 = vld [vmem:[%s512 + $0x2c] sm:$0xf]
        %v553 = vld [vmem:[%s512 + $0x30] sm:$0xf]
        %v554 = vld [vmem:[%s512 + $0x34] sm:$0xf]
        %v555 = vld [vmem:[%s512 + $0x38] sm:$0xf]
        %v556 = vld [vmem:[%s512 + $0x3c] sm:$0xf]
        %v557 = vld [vmem:[%s512 + $0x40] sm:$0xf]
        %v558 = vld [vmem:[%s512 + $0x44] sm:$0xf]
        %v559 = vld [vmem:[%s512 + $0x48] sm:$0xf]
        %v560 = vld [vmem:[%s512 + $0x4c] sm:$0xf]
        %v561 = vld [vmem:[%s512 + $0x50] sm:$0xf]
        %v562 = vld [vmem:[%s512 + $0x54] sm:$0xf]
        %v585 = vunpack.c.l.b16 %v541
        %v586 = vunpack.c.l.b16 %v542
        %v587 = vunpack.c.l.b16 %v543
        %v588 = vunpack.c.l.b16 %v544
        %v589 = vunpack.c.l.b16 %v545
        %v590 = vunpack.c.l.b16 %v546
        %v591 = vunpack.c.l.b16 %v547
        %v592 = vunpack.c.l.b16 %v548
        %v593 = vunpack.c.l.b16 %v549
        %v594 = vunpack.c.l.b16 %v550
        %v595 = vunpack.c.l.b16 %v551
        %v596 = vunpack.c.l.b16 %v552
        %v597 = vunpack.c.l.b16 %v553
        %v598 = vunpack.c.l.b16 %v554
        %v599 = vunpack.c.l.b16 %v555
        %v600 = vunpack.c.l.b16 %v556
        %v601 = vunpack.c.l.b16 %v557
        %v602 = vunpack.c.l.b16 %v558
        %v603 = vunpack.c.l.b16 %v559
        %v604 = vunpack.c.l.b16 %v560
        %v605 = vunpack.c.l.b16 %v561
        %v606 = vunpack.c.l.b16 %v562
        %v607 = vpack.c.b16 %v586, %v585
        %v608 = vpack.c.b16 %v588, %v587
        %v609 = vpack.c.b16 %v590, %v589
        %v610 = vpack.c.b16 %v592, %v591
        %v611 = vpack.c.b16 %v594, %v593
        %v612 = vpack.c.b16 %v596, %v595
        %v613 = vpack.c.b16 %v598, %v597
        %v614 = vpack.c.b16 %v600, %v599
        %v615 = vpack.c.b16 %v602, %v601
        %v616 = vpack.c.b16 %v604, %v603
        %v617 = vpack.c.b16 %v606, %v605
        %v620 = vunpack.c.l.b16 %v539
        %v621 = vunpack.c.l.b16 %v540
        %v622 = vpack.c.b16 %v621, %v620
        %vm623 = vcmask 72704
        %v625 = vsel %vm623, %v607, 0
        %v628 = vsel %vm623, %v608, 0
        %v631 = vsel %vm623, %v609, 0
        %v634 = vsel %vm623, %v610, 0
        %v637 = vsel %vm623, %v611, 0
        %v640 = vsel %vm623, %v612, 0
        %v643 = vsel %vm623, %v613, 0
        %v646 = vsel %vm623, %v614, 0
        %v649 = vsel %vm623, %v615, 0
        %v652 = vsel %vm623, %v616, 0
        %v655 = vsel %vm623, %v617, 0
        %vm657 = vcmask 1043456
        %vm658 = vcmask 1044480
        %v659 = vsel %vm657, 4294967295, 65535
        %v660 = vsel %vm658, %v659, 0
        %v662 = vand.u32 %v622, %v660
        %664 = vmatprep.subr.bf16.mxu0 0
        %665 = vmatpush1.bf16.msra.mxu0 0
        %666 = vmatprep.subr.bf16.mxu0 0
        %667 = vmatpush1.bf16.msra.mxu0 0
        %668 = vmatprep.subr.bf16.mxu0 0
        %669 = vmatpush1.bf16.msra.mxu0 0
        %670 = vmatprep.subr.bf16.mxu0 0
        %671 = vmatpush1.bf16.msra.mxu0 0
        %672 = vmatprep.subr.bf16.mxu0 0
        %673 = vmatpush1.bf16.msra.mxu0 0
        %674 = vmatprep.subr.bf16.mxu0 0
        %675 = vmatpush1.bf16.msra.mxu0 0
        %676 = vmatprep.subr.bf16.mxu0 0
        %677 = vmatpush1.bf16.msra.mxu0 0
        %678 = vmatprep.subr.bf16.mxu0 0
        %679 = vmatpush1.bf16.msra.mxu0 %v662
        %680 = vmatprep.subr.bf16.mxu0 0
        %681 = vmatpush2.bf16.msra.mxu0 0
        %682 = vmatprep.subr.bf16.mxu0 0
        %683 = vmatpush2.bf16.msra.mxu0 0
        %684 = vmatprep.subr.bf16.mxu0 0
        %685 = vmatpush2.bf16.msra.mxu0 0
        %686 = vmatprep.subr.bf16.mxu0 0
        %687 = vmatpush2.bf16.msra.mxu0 0
        %688 = vmatprep.subr.bf16.mxu0 0
        %689 = vmatpush2.bf16.msra.mxu0 0
        %690 = vmatprep.subr.bf16.mxu0 0
        %691 = vmatpush2.bf16.msra.mxu0 0
        %692 = vmatprep.subr.bf16.mxu0 0
        %693 = vmatpush2.bf16.msra.mxu0 0
        %694 = vmatprep.subr.bf16.mxu0 0
        %695 = vmatpush2.bf16.msra.mxu0 0
        %696 = vmatprep.mubr.bf16.mxu0 0
        %697 = vmatmul.mubr.bf16.gmra.mxu0 %v625
        %v698 = vpop.f32.mrf.mxu0
        %v699 = vadd.f32 0.0, %v698
        %v700 = vpop.f32.mrf.mxu0
        %v701 = vpop.f32.mrf.mxu0
        %v702 = vadd.f32 0.0, %v701
        %v703 = vpop.f32.mrf.mxu0
        %704 = vmatprep.mubr.bf16.mxu0 0
        %705 = vmatmul.mubr.bf16.gmra.mxu0 %v628
        %v706 = vpop.f32.mrf.mxu0
        %v707 = vadd.f32 0.0, %v706
        %v708 = vpop.f32.mrf.mxu0
        %v709 = vpop.f32.mrf.mxu0
        %v710 = vadd.f32 0.0, %v709
        %v711 = vpop.f32.mrf.mxu0
        %712 = vmatprep.mubr.bf16.mxu0 0
        %713 = vmatmul.mubr.bf16.gmra.mxu0 %v631
        %v714 = vpop.f32.mrf.mxu0
        %v715 = vadd.f32 0.0, %v714
        %v716 = vpop.f32.mrf.mxu0
        %v717 = vpop.f32.mrf.mxu0
        %v718 = vadd.f32 0.0, %v717
        %v719 = vpop.f32.mrf.mxu0
        %720 = vmatprep.mubr.bf16.mxu0 0
        %721 = vmatmul.mubr.bf16.gmra.mxu0 %v634
        %v722 = vpop.f32.mrf.mxu0
        %v723 = vadd.f32 0.0, %v722
        %v724 = vpop.f32.mrf.mxu0
        %v725 = vpop.f32.mrf.mxu0
        %v726 = vadd.f32 0.0, %v725
        %v727 = vpop.f32.mrf.mxu0
        %728 = vmatprep.mubr.bf16.mxu0 0
        %729 = vmatmul.mubr.bf16.gmra.mxu0 %v637
        %v730 = vpop.f32.mrf.mxu0
        %v731 = vadd.f32 0.0, %v730
        %v732 = vpop.f32.mrf.mxu0
        %v733 = vpop.f32.mrf.mxu0
        %v734 = vadd.f32 0.0, %v733
        %v735 = vpop.f32.mrf.mxu0
        %736 = vmatprep.mubr.bf16.mxu0 0
        %737 = vmatmul.mubr.bf16.gmra.mxu0 %v640
        %v738 = vpop.f32.mrf.mxu0
        %v739 = vadd.f32 0.0, %v738
        %v740 = vpop.f32.mrf.mxu0
        %v741 = vpop.f32.mrf.mxu0
        %v742 = vadd.f32 0.0, %v741
        %v743 = vpop.f32.mrf.mxu0
        %744 = vmatprep.mubr.bf16.mxu0 0
        %745 = vmatmul.mubr.bf16.gmra.mxu0 %v643
        %v746 = vpop.f32.mrf.mxu0
        %v747 = vadd.f32 0.0, %v746
        %v748 = vpop.f32.mrf.mxu0
        %v749 = vpop.f32.mrf.mxu0
        %v750 = vadd.f32 0.0, %v749
        %v751 = vpop.f32.mrf.mxu0
        %752 = vmatprep.mubr.bf16.mxu0 0
        %753 = vmatmul.mubr.bf16.gmra.mxu0 %v646
        %v754 = vpop.f32.mrf.mxu0
        %v755 = vadd.f32 0.0, %v754
        %v756 = vpop.f32.mrf.mxu0
        %v757 = vpop.f32.mrf.mxu0
        %v758 = vadd.f32 0.0, %v757
        %v759 = vpop.f32.mrf.mxu0
        %760 = vmatprep.mubr.bf16.mxu0 0
        %761 = vmatmul.mubr.bf16.gmra.mxu0 %v649
        %v762 = vpop.f32.mrf.mxu0
        %v763 = vadd.f32 0.0, %v762
        %v764 = vpop.f32.mrf.mxu0
        %v765 = vpop.f32.mrf.mxu0
        %v766 = vadd.f32 0.0, %v765
        %v767 = vpop.f32.mrf.mxu0
        %768 = vmatprep.mubr.bf16.mxu0 0
        %769 = vmatmul.mubr.bf16.gmra.mxu0 %v652
        %v770 = vpop.f32.mrf.mxu0
        %v771 = vadd.f32 0.0, %v770
        %v772 = vpop.f32.mrf.mxu0
        %v773 = vpop.f32.mrf.mxu0
        %v774 = vadd.f32 0.0, %v773
        %v775 = vpop.f32.mrf.mxu0
        %776 = vmatprep.mubr.bf16.mxu0 0
        %777 = vmatmul.mubr.bf16.gmra.mxu0 %v655
        %v778 = vpop.f32.mrf.mxu0
        %v779 = vadd.f32 0.0, %v778
        %v780 = vpop.f32.mrf.mxu0
        %v781 = vpop.f32.mrf.mxu0
        %v782 = vadd.f32 0.0, %v781
        %v783 = vpop.f32.mrf.mxu0
        %784 = vdwg.mxu0
        %s785 = scalar_lea.vmem %s512, 88 [#allocation2]
        %v786 = vld [vmem:[%s785] sm:$0xf]
        %v787 = vld [vmem:[%s785 + $0x4] sm:$0xf]
        %v788 = vld [vmem:[%s785 + $0x8] sm:$0xf]
        %v789 = vld [vmem:[%s785 + $0xc] sm:$0xf]
        %v790 = vld [vmem:[%s785 + $0x10] sm:$0xf]
        %v791 = vld [vmem:[%s785 + $0x14] sm:$0xf]
        %v792 = vld [vmem:[%s785 + $0x18] sm:$0xf]
        %v793 = vld [vmem:[%s785 + $0x1c] sm:$0xf]
        %v794 = vld [vmem:[%s785 + $0x20] sm:$0xf]
        %v795 = vld [vmem:[%s785 + $0x24] sm:$0xf]
        %v796 = vld [vmem:[%s785 + $0x28] sm:$0xf]
        %v797 = vld [vmem:[%s785 + $0x2c] sm:$0xf]
        %v798 = vld [vmem:[%s785 + $0x30] sm:$0xf]
        %v799 = vld [vmem:[%s785 + $0x34] sm:$0xf]
        %v800 = vld [vmem:[%s785 + $0x38] sm:$0xf]
        %v801 = vld [vmem:[%s785 + $0x3c] sm:$0xf]
        %v802 = vld [vmem:[%s785 + $0x40] sm:$0xf]
        %v803 = vld [vmem:[%s785 + $0x44] sm:$0xf]
        %v804 = vld [vmem:[%s785 + $0x48] sm:$0xf]
        %v805 = vld [vmem:[%s785 + $0x4c] sm:$0xf]
        %v806 = vld [vmem:[%s785 + $0x50] sm:$0xf]
        %v807 = vld [vmem:[%s785 + $0x54] sm:$0xf]
        %v830 = vunpack.c.l.b16 %v786
        %v831 = vunpack.c.l.b16 %v787
        %v832 = vunpack.c.l.b16 %v788
        %v833 = vunpack.c.l.b16 %v789
        %v834 = vunpack.c.l.b16 %v790
        %v835 = vunpack.c.l.b16 %v791
        %v836 = vunpack.c.l.b16 %v792
        %v837 = vunpack.c.l.b16 %v793
        %v838 = vunpack.c.l.b16 %v794
        %v839 = vunpack.c.l.b16 %v795
        %v840 = vunpack.c.l.b16 %v796
        %v841 = vunpack.c.l.b16 %v797
        %v842 = vunpack.c.l.b16 %v798
        %v843 = vunpack.c.l.b16 %v799
        %v844 = vunpack.c.l.b16 %v800
        %v845 = vunpack.c.l.b16 %v801
        %v846 = vunpack.c.l.b16 %v802
        %v847 = vunpack.c.l.b16 %v803
        %v848 = vunpack.c.l.b16 %v804
        %v849 = vunpack.c.l.b16 %v805
        %v850 = vunpack.c.l.b16 %v806
        %v851 = vunpack.c.l.b16 %v807
        %v852 = vpack.c.b16 %v831, %v830
        %v853 = vpack.c.b16 %v833, %v832
        %v854 = vpack.c.b16 %v835, %v834
        %v855 = vpack.c.b16 %v837, %v836
        %v856 = vpack.c.b16 %v839, %v838
        %v857 = vpack.c.b16 %v841, %v840
        %v858 = vpack.c.b16 %v843, %v842
        %v859 = vpack.c.b16 %v845, %v844
        %v860 = vpack.c.b16 %v847, %v846
        %v861 = vpack.c.b16 %v849, %v848
        %v862 = vpack.c.b16 %v851, %v850
        %v864 = vsel %vm623, %v852, 0
        %v867 = vsel %vm623, %v853, 0
        %v870 = vsel %vm623, %v854, 0
        %v873 = vsel %vm623, %v855, 0
        %v876 = vsel %vm623, %v856, 0
        %v879 = vsel %vm623, %v857, 0
        %v882 = vsel %vm623, %v858, 0
        %v885 = vsel %vm623, %v859, 0
        %v888 = vsel %vm623, %v860, 0
        %v891 = vsel %vm623, %v861, 0
        %v894 = vsel %vm623, %v862, 0
        %896 = vmatprep.subr.bf16.mxu0 0
        %897 = vmatpush1.bf16.msra.mxu0 0
        %898 = vmatprep.subr.bf16.mxu0 0
        %899 = vmatpush1.bf16.msra.mxu0 0
        %900 = vmatprep.subr.bf16.mxu0 0
        %901 = vmatpush1.bf16.msra.mxu0 0
        %902 = vmatprep.subr.bf16.mxu0 0
        %903 = vmatpush1.bf16.msra.mxu0 0
        %904 = vmatprep.subr.bf16.mxu0 0
        %905 = vmatpush1.bf16.msra.mxu0 0
        %906 = vmatprep.subr.bf16.mxu0 0
        %907 = vmatpush1.bf16.msra.mxu0 0
        %908 = vmatprep.subr.bf16.mxu0 0
        %909 = vmatpush1.bf16.msra.mxu0 0
        %910 = vmatprep.subr.bf16.mxu0 0
        %911 = vmatpush1.bf16.msra.mxu0 %v662
        %912 = vmatprep.subr.bf16.mxu0 0
        %913 = vmatpush2.bf16.msra.mxu0 0
        %914 = vmatprep.subr.bf16.mxu0 0
        %915 = vmatpush2.bf16.msra.mxu0 0
        %916 = vmatprep.subr.bf16.mxu0 0
        %917 = vmatpush2.bf16.msra.mxu0 0
        %918 = vmatprep.subr.bf16.mxu0 0
        %919 = vmatpush2.bf16.msra.mxu0 0
        %920 = vmatprep.subr.bf16.mxu0 0
        %921 = vmatpush2.bf16.msra.mxu0 0
        %922 = vmatprep.subr.bf16.mxu0 0
        %923 = vmatpush2.bf16.msra.mxu0 0
        %924 = vmatprep.subr.bf16.mxu0 0
        %925 = vmatpush2.bf16.msra.mxu0 0
        %926 = vmatprep.subr.bf16.mxu0 0
        %927 = vmatpush2.bf16.msra.mxu0 0
        %928 = vmatprep.mubr.bf16.mxu0 0
        %929 = vmatmul.mubr.bf16.gmra.mxu0 %v864
        %v930 = vpop.f32.mrf.mxu0
        %v931 = vadd.f32 0.0, %v930
        %v932 = vpop.f32.mrf.mxu0
        %v933 = vpop.f32.mrf.mxu0
        %v934 = vadd.f32 0.0, %v933
        %v935 = vpop.f32.mrf.mxu0
        %936 = vmatprep.mubr.bf16.mxu0 0
        %937 = vmatmul.mubr.bf16.gmra.mxu0 %v867
        %v938 = vpop.f32.mrf.mxu0
        %v939 = vadd.f32 0.0, %v938
        %v940 = vpop.f32.mrf.mxu0
        %v941 = vpop.f32.mrf.mxu0
        %v942 = vadd.f32 0.0, %v941
        %v943 = vpop.f32.mrf.mxu0
        %944 = vmatprep.mubr.bf16.mxu0 0
        %945 = vmatmul.mubr.bf16.gmra.mxu0 %v870
        %v946 = vpop.f32.mrf.mxu0
        %v947 = vadd.f32 0.0, %v946
        %v948 = vpop.f32.mrf.mxu0
        %v949 = vpop.f32.mrf.mxu0
        %v950 = vadd.f32 0.0, %v949
        %v951 = vpop.f32.mrf.mxu0
        %952 = vmatprep.mubr.bf16.mxu0 0
        %953 = vmatmul.mubr.bf16.gmra.mxu0 %v873
        %v954 = vpop.f32.mrf.mxu0
        %v955 = vadd.f32 0.0, %v954
        %v956 = vpop.f32.mrf.mxu0
        %v957 = vpop.f32.mrf.mxu0
        %v958 = vadd.f32 0.0, %v957
        %v959 = vpop.f32.mrf.mxu0
        %960 = vmatprep.mubr.bf16.mxu0 0
        %961 = vmatmul.mubr.bf16.gmra.mxu0 %v876
        %v962 = vpop.f32.mrf.mxu0
        %v963 = vadd.f32 0.0, %v962
        %v964 = vpop.f32.mrf.mxu0
        %v965 = vpop.f32.mrf.mxu0
        %v966 = vadd.f32 0.0, %v965
        %v967 = vpop.f32.mrf.mxu0
        %968 = vmatprep.mubr.bf16.mxu0 0
        %969 = vmatmul.mubr.bf16.gmra.mxu0 %v879
        %v970 = vpop.f32.mrf.mxu0
        %v971 = vadd.f32 0.0, %v970
        %v972 = vpop.f32.mrf.mxu0
        %v973 = vpop.f32.mrf.mxu0
        %v974 = vadd.f32 0.0, %v973
        %v975 = vpop.f32.mrf.mxu0
        %976 = vmatprep.mubr.bf16.mxu0 0
        %977 = vmatmul.mubr.bf16.gmra.mxu0 %v882
        %v978 = vpop.f32.mrf.mxu0
        %v979 = vadd.f32 0.0, %v978
        %v980 = vpop.f32.mrf.mxu0
        %v981 = vpop.f32.mrf.mxu0
        %v982 = vadd.f32 0.0, %v981
        %v983 = vpop.f32.mrf.mxu0
        %984 = vmatprep.mubr.bf16.mxu0 0
        %985 = vmatmul.mubr.bf16.gmra.mxu0 %v885
        %v986 = vpop.f32.mrf.mxu0
        %v987 = vadd.f32 0.0, %v986
        %v988 = vpop.f32.mrf.mxu0
        %v989 = vpop.f32.mrf.mxu0
        %v990 = vadd.f32 0.0, %v989
        %v991 = vpop.f32.mrf.mxu0
        %992 = vmatprep.mubr.bf16.mxu0 0
        %993 = vmatmul.mubr.bf16.gmra.mxu0 %v888
        %v994 = vpop.f32.mrf.mxu0
        %v995 = vadd.f32 0.0, %v994
        %v996 = vpop.f32.mrf.mxu0
        %v997 = vpop.f32.mrf.mxu0
        %v998 = vadd.f32 0.0, %v997
        %v999 = vpop.f32.mrf.mxu0
        %1000 = vmatprep.mubr.bf16.mxu0 0
        %1001 = vmatmul.mubr.bf16.gmra.mxu0 %v891
        %v1002 = vpop.f32.mrf.mxu0
        %v1003 = vadd.f32 0.0, %v1002
        %v1004 = vpop.f32.mrf.mxu0
        %v1005 = vpop.f32.mrf.mxu0
        %v1006 = vadd.f32 0.0, %v1005
        %v1007 = vpop.f32.mrf.mxu0
        %1008 = vmatprep.mubr.bf16.mxu0 0
        %1009 = vmatmul.mubr.bf16.gmra.mxu0 %v894
        %v1010 = vpop.f32.mrf.mxu0
        %v1011 = vadd.f32 0.0, %v1010
        %v1012 = vpop.f32.mrf.mxu0
        %v1013 = vpop.f32.mrf.mxu0
        %v1014 = vadd.f32 0.0, %v1013
        %v1015 = vpop.f32.mrf.mxu0
        %1016 = vdwg.mxu0
        %v1017 = vmax.f32 %v699, %v931
        %v1018 = vmax.f32 %v702, %v934
        %v1019 = vmax.f32 %v707, %v939
        %v1020 = vmax.f32 %v710, %v942
        %v1021 = vmax.f32 %v715, %v947
        %v1022 = vmax.f32 %v718, %v950
        %v1023 = vmax.f32 %v723, %v955
        %v1024 = vmax.f32 %v726, %v958
        %v1025 = vmax.f32 %v731, %v963
        %v1026 = vmax.f32 %v734, %v966
        %v1027 = vmax.f32 %v739, %v971
        %v1028 = vmax.f32 %v742, %v974
        %v1029 = vmax.f32 %v747, %v979
        %v1030 = vmax.f32 %v750, %v982
        %v1031 = vmax.f32 %v755, %v987
        %v1032 = vmax.f32 %v758, %v990
        %v1033 = vmax.f32 %v763, %v995
        %v1034 = vmax.f32 %v766, %v998
        %v1035 = vmax.f32 %v771, %v1003
        %v1036 = vmax.f32 %v774, %v1006
        %v1037 = vmax.f32 %v779, %v1011
        %v1038 = vmax.f32 %v782, %v1014
        %s1039 = scalar_lea.vmem %s512, 176 [#allocation2]
        %v1040 = vld [vmem:[%s1039] sm:$0xf]
        %v1041 = vld [vmem:[%s1039 + $0x4] sm:$0xf]
        %v1042 = vld [vmem:[%s1039 + $0x8] sm:$0xf]
        %v1043 = vld [vmem:[%s1039 + $0xc] sm:$0xf]
        %v1044 = vld [vmem:[%s1039 + $0x10] sm:$0xf]
        %v1045 = vld [vmem:[%s1039 + $0x14] sm:$0xf]
        %v1046 = vld [vmem:[%s1039 + $0x18] sm:$0xf]
        %v1047 = vld [vmem:[%s1039 + $0x1c] sm:$0xf]
        %v1048 = vld [vmem:[%s1039 + $0x20] sm:$0xf]
        %v1049 = vld [vmem:[%s1039 + $0x24] sm:$0xf]
        %v1050 = vld [vmem:[%s1039 + $0x28] sm:$0xf]
        %v1051 = vld [vmem:[%s1039 + $0x2c] sm:$0xf]
        %v1052 = vld [vmem:[%s1039 + $0x30] sm:$0xf]
        %v1053 = vld [vmem:[%s1039 + $0x34] sm:$0xf]
        %v1054 = vld [vmem:[%s1039 + $0x38] sm:$0xf]
        %v1055 = vld [vmem:[%s1039 + $0x3c] sm:$0xf]
        %v1056 = vld [vmem:[%s1039 + $0x40] sm:$0xf]
        %v1057 = vld [vmem:[%s1039 + $0x44] sm:$0xf]
        %v1058 = vld [vmem:[%s1039 + $0x48] sm:$0xf]
        %v1059 = vld [vmem:[%s1039 + $0x4c] sm:$0xf]
        %v1060 = vld [vmem:[%s1039 + $0x50] sm:$0xf]
        %v1061 = vld [vmem:[%s1039 + $0x54] sm:$0xf]
        %v1084 = vunpack.c.l.b16 %v1040
        %v1085 = vunpack.c.l.b16 %v1041
        %v1086 = vunpack.c.l.b16 %v1042
        %v1087 = vunpack.c.l.b16 %v1043
        %v1088 = vunpack.c.l.b16 %v1044
        %v1089 = vunpack.c.l.b16 %v1045
        %v1090 = vunpack.c.l.b16 %v1046
        %v1091 = vunpack.c.l.b16 %v1047
        %v1092 = vunpack.c.l.b16 %v1048
        %v1093 = vunpack.c.l.b16 %v1049
        %v1094 = vunpack.c.l.b16 %v1050
        %v1095 = vunpack.c.l.b16 %v1051
        %v1096 = vunpack.c.l.b16 %v1052
        %v1097 = vunpack.c.l.b16 %v1053
        %v1098 = vunpack.c.l.b16 %v1054
        %v1099 = vunpack.c.l.b16 %v1055
        %v1100 = vunpack.c.l.b16 %v1056
        %v1101 = vunpack.c.l.b16 %v1057
        %v1102 = vunpack.c.l.b16 %v1058
        %v1103 = vunpack.c.l.b16 %v1059
        %v1104 = vunpack.c.l.b16 %v1060
        %v1105 = vunpack.c.l.b16 %v1061
        %v1106 = vpack.c.b16 %v1085, %v1084
        %v1107 = vpack.c.b16 %v1087, %v1086
        %v1108 = vpack.c.b16 %v1089, %v1088
        %v1109 = vpack.c.b16 %v1091, %v1090
        %v1110 = vpack.c.b16 %v1093, %v1092
        %v1111 = vpack.c.b16 %v1095, %v1094
        %v1112 = vpack.c.b16 %v1097, %v1096
        %v1113 = vpack.c.b16 %v1099, %v1098
        %v1114 = vpack.c.b16 %v1101, %v1100
        %v1115 = vpack.c.b16 %v1103, %v1102
        %v1116 = vpack.c.b16 %v1105, %v1104
        %v1118 = vsel %vm623, %v1106, 0
        %v1121 = vsel %vm623, %v1107, 0
        %v1124 = vsel %vm623, %v1108, 0
        %v1127 = vsel %vm623, %v1109, 0
        %v1130 = vsel %vm623, %v1110, 0
        %v1133 = vsel %vm623, %v1111, 0
        %v1136 = vsel %vm623, %v1112, 0
        %v1139 = vsel %vm623, %v1113, 0
        %v1142 = vsel %vm623, %v1114, 0
        %v1145 = vsel %vm623, %v1115, 0
        %v1148 = vsel %vm623, %v1116, 0
        %1150 = vmatprep.subr.bf16.mxu0 0
        %1151 = vmatpush1.bf16.msra.mxu0 0
        %1152 = vmatprep.subr.bf16.mxu0 0
        %1153 = vmatpush1.bf16.msra.mxu0 0
        %1154 = vmatprep.subr.bf16.mxu0 0
        %1155 = vmatpush1.bf16.msra.mxu0 0
        %1156 = vmatprep.subr.bf16.mxu0 0
        %1157 = vmatpush1.bf16.msra.mxu0 0
        %1158 = vmatprep.subr.bf16.mxu0 0
        %1159 = vmatpush1.bf16.msra.mxu0 0
        %1160 = vmatprep.subr.bf16.mxu0 0
        %1161 = vmatpush1.bf16.msra.mxu0 0
        %1162 = vmatprep.subr.bf16.mxu0 0
        %1163 = vmatpush1.bf16.msra.mxu0 0
        %1164 = vmatprep.subr.bf16.mxu0 0
        %1165 = vmatpush1.bf16.msra.mxu0 %v662
        %1166 = vmatprep.subr.bf16.mxu0 0
        %1167 = vmatpush2.bf16.msra.mxu0 0
        %1168 = vmatprep.subr.bf16.mxu0 0
        %1169 = vmatpush2.bf16.msra.mxu0 0
        %1170 = vmatprep.subr.bf16.mxu0 0
        %1171 = vmatpush2.bf16.msra.mxu0 0
        %1172 = vmatprep.subr.bf16.mxu0 0
        %1173 = vmatpush2.bf16.msra.mxu0 0
        %1174 = vmatprep.subr.bf16.mxu0 0
        %1175 = vmatpush2.bf16.msra.mxu0 0
        %1176 = vmatprep.subr.bf16.mxu0 0
        %1177 = vmatpush2.bf16.msra.mxu0 0
        %1178 = vmatprep.subr.bf16.mxu0 0
        %1179 = vmatpush2.bf16.msra.mxu0 0
        %1180 = vmatprep.subr.bf16.mxu0 0
        %1181 = vmatpush2.bf16.msra.mxu0 0
        %1182 = vmatprep.mubr.bf16.mxu0 0
        %1183 = vmatmul.mubr.bf16.gmra.mxu0 %v1118
        %v1184 = vpop.f32.mrf.mxu0
        %v1185 = vadd.f32 0.0, %v1184
        %v1186 = vpop.f32.mrf.mxu0
        %v1187 = vpop.f32.mrf.mxu0
        %v1188 = vadd.f32 0.0, %v1187
        %v1189 = vpop.f32.mrf.mxu0
        %1190 = vmatprep.mubr.bf16.mxu0 0
        %1191 = vmatmul.mubr.bf16.gmra.mxu0 %v1121
        %v1192 = vpop.f32.mrf.mxu0
        %v1193 = vadd.f32 0.0, %v1192
        %v1194 = vpop.f32.mrf.mxu0
        %v1195 = vpop.f32.mrf.mxu0
        %v1196 = vadd.f32 0.0, %v1195
        %v1197 = vpop.f32.mrf.mxu0
        %1198 = vmatprep.mubr.bf16.mxu0 0
        %1199 = vmatmul.mubr.bf16.gmra.mxu0 %v1124
        %v1200 = vpop.f32.mrf.mxu0
        %v1201 = vadd.f32 0.0, %v1200
        %v1202 = vpop.f32.mrf.mxu0
        %v1203 = vpop.f32.mrf.mxu0
        %v1204 = vadd.f32 0.0, %v1203
        %v1205 = vpop.f32.mrf.mxu0
        %1206 = vmatprep.mubr.bf16.mxu0 0
        %1207 = vmatmul.mubr.bf16.gmra.mxu0 %v1127
        %v1208 = vpop.f32.mrf.mxu0
        %v1209 = vadd.f32 0.0, %v1208
        %v1210 = vpop.f32.mrf.mxu0
        %v1211 = vpop.f32.mrf.mxu0
        %v1212 = vadd.f32 0.0, %v1211
        %v1213 = vpop.f32.mrf.mxu0
        %1214 = vmatprep.mubr.bf16.mxu0 0
        %1215 = vmatmul.mubr.bf16.gmra.mxu0 %v1130
        %v1216 = vpop.f32.mrf.mxu0
        %v1217 = vadd.f32 0.0, %v1216
        %v1218 = vpop.f32.mrf.mxu0
        %v1219 = vpop.f32.mrf.mxu0
        %v1220 = vadd.f32 0.0, %v1219
        %v1221 = vpop.f32.mrf.mxu0
        %1222 = vmatprep.mubr.bf16.mxu0 0
        %1223 = vmatmul.mubr.bf16.gmra.mxu0 %v1133
        %v1224 = vpop.f32.mrf.mxu0
        %v1225 = vadd.f32 0.0, %v1224
        %v1226 = vpop.f32.mrf.mxu0
        %v1227 = vpop.f32.mrf.mxu0
        %v1228 = vadd.f32 0.0, %v1227
        %v1229 = vpop.f32.mrf.mxu0
        %1230 = vmatprep.mubr.bf16.mxu0 0
        %1231 = vmatmul.mubr.bf16.gmra.mxu0 %v1136
        %v1232 = vpop.f32.mrf.mxu0
        %v1233 = vadd.f32 0.0, %v1232
        %v1234 = vpop.f32.mrf.mxu0
        %v1235 = vpop.f32.mrf.mxu0
        %v1236 = vadd.f32 0.0, %v1235
        %v1237 = vpop.f32.mrf.mxu0
        %1238 = vmatprep.mubr.bf16.mxu0 0
        %1239 = vmatmul.mubr.bf16.gmra.mxu0 %v1139
        %v1240 = vpop.f32.mrf.mxu0
        %v1241 = vadd.f32 0.0, %v1240
        %v1242 = vpop.f32.mrf.mxu0
        %v1243 = vpop.f32.mrf.mxu0
        %v1244 = vadd.f32 0.0, %v1243
        %v1245 = vpop.f32.mrf.mxu0
        %1246 = vmatprep.mubr.bf16.mxu0 0
        %1247 = vmatmul.mubr.bf16.gmra.mxu0 %v1142
        %v1248 = vpop.f32.mrf.mxu0
        %v1249 = vadd.f32 0.0, %v1248
        %v1250 = vpop.f32.mrf.mxu0
        %v1251 = vpop.f32.mrf.mxu0
        %v1252 = vadd.f32 0.0, %v1251
        %v1253 = vpop.f32.mrf.mxu0
        %1254 = vmatprep.mubr.bf16.mxu0 0
        %1255 = vmatmul.mubr.bf16.gmra.mxu0 %v1145
        %v1256 = vpop.f32.mrf.mxu0
        %v1257 = vadd.f32 0.0, %v1256
        %v1258 = vpop.f32.mrf.mxu0
        %v1259 = vpop.f32.mrf.mxu0
        %v1260 = vadd.f32 0.0, %v1259
        %v1261 = vpop.f32.mrf.mxu0
        %1262 = vmatprep.mubr.bf16.mxu0 0
        %1263 = vmatmul.mubr.bf16.gmra.mxu0 %v1148
        %v1264 = vpop.f32.mrf.mxu0
        %v1265 = vadd.f32 0.0, %v1264
        %v1266 = vpop.f32.mrf.mxu0
        %v1267 = vpop.f32.mrf.mxu0
        %v1268 = vadd.f32 0.0, %v1267
        %v1269 = vpop.f32.mrf.mxu0
        %1270 = vdwg.mxu0
        %v1271 = vmax.f32 %v1017, %v1185
        %v1272 = vmax.f32 %v1018, %v1188
        %v1273 = vmax.f32 %v1019, %v1193
        %v1274 = vmax.f32 %v1020, %v1196
        %v1275 = vmax.f32 %v1021, %v1201
        %v1276 = vmax.f32 %v1022, %v1204
        %v1277 = vmax.f32 %v1023, %v1209
        %v1278 = vmax.f32 %v1024, %v1212
        %v1279 = vmax.f32 %v1025, %v1217
        %v1280 = vmax.f32 %v1026, %v1220
        %v1281 = vmax.f32 %v1027, %v1225
        %v1282 = vmax.f32 %v1028, %v1228
        %v1283 = vmax.f32 %v1029, %v1233
        %v1284 = vmax.f32 %v1030, %v1236
        %v1285 = vmax.f32 %v1031, %v1241
        %v1286 = vmax.f32 %v1032, %v1244
        %v1287 = vmax.f32 %v1033, %v1249
        %v1288 = vmax.f32 %v1034, %v1252
        %v1289 = vmax.f32 %v1035, %v1257
        %v1290 = vmax.f32 %v1036, %v1260
        %v1291 = vmax.f32 %v1037, %v1265
        %v1292 = vmax.f32 %v1038, %v1268
        %s1293 = scalar_lea.vmem %s512, 264 [#allocation2]
        %v1294 = vld [vmem:[%s1293] sm:$0xf]
        %v1295 = vld [vmem:[%s1293 + $0x4] sm:$0xf]
        %v1296 = vld [vmem:[%s1293 + $0x8] sm:$0xf]
        %v1297 = vld [vmem:[%s1293 + $0xc] sm:$0xf]
        %v1298 = vld [vmem:[%s1293 + $0x10] sm:$0xf]
        %v1299 = vld [vmem:[%s1293 + $0x14] sm:$0xf]
        %v1300 = vld [vmem:[%s1293 + $0x18] sm:$0xf]
        %v1301 = vld [vmem:[%s1293 + $0x1c] sm:$0xf]
        %v1302 = vld [vmem:[%s1293 + $0x20] sm:$0xf]
        %v1303 = vld [vmem:[%s1293 + $0x24] sm:$0xf]
        %v1304 = vld [vmem:[%s1293 + $0x28] sm:$0xf]
        %v1305 = vld [vmem:[%s1293 + $0x2c] sm:$0xf]
        %v1306 = vld [vmem:[%s1293 + $0x30] sm:$0xf]
        %v1307 = vld [vmem:[%s1293 + $0x34] sm:$0xf]
        %v1308 = vld [vmem:[%s1293 + $0x38] sm:$0xf]
        %v1309 = vld [vmem:[%s1293 + $0x3c] sm:$0xf]
        %v1310 = vld [vmem:[%s1293 + $0x40] sm:$0xf]
        %v1311 = vld [vmem:[%s1293 + $0x44] sm:$0xf]
        %v1312 = vld [vmem:[%s1293 + $0x48] sm:$0xf]
        %v1313 = vld [vmem:[%s1293 + $0x4c] sm:$0xf]
        %v1314 = vld [vmem:[%s1293 + $0x50] sm:$0xf]
        %v1315 = vld [vmem:[%s1293 + $0x54] sm:$0xf]
        %v1338 = vunpack.c.l.b16 %v1294
        %v1339 = vunpack.c.l.b16 %v1295
        %v1340 = vunpack.c.l.b16 %v1296
        %v1341 = vunpack.c.l.b16 %v1297
        %v1342 = vunpack.c.l.b16 %v1298
        %v1343 = vunpack.c.l.b16 %v1299
        %v1344 = vunpack.c.l.b16 %v1300
        %v1345 = vunpack.c.l.b16 %v1301
        %v1346 = vunpack.c.l.b16 %v1302
        %v1347 = vunpack.c.l.b16 %v1303
        %v1348 = vunpack.c.l.b16 %v1304
        %v1349 = vunpack.c.l.b16 %v1305
        %v1350 = vunpack.c.l.b16 %v1306
        %v1351 = vunpack.c.l.b16 %v1307
        %v1352 = vunpack.c.l.b16 %v1308
        %v1353 = vunpack.c.l.b16 %v1309
        %v1354 = vunpack.c.l.b16 %v1310
        %v1355 = vunpack.c.l.b16 %v1311
        %v1356 = vunpack.c.l.b16 %v1312
        %v1357 = vunpack.c.l.b16 %v1313
        %v1358 = vunpack.c.l.b16 %v1314
        %v1359 = vunpack.c.l.b16 %v1315
        %v1360 = vpack.c.b16 %v1339, %v1338
        %v1361 = vpack.c.b16 %v1341, %v1340
        %v1362 = vpack.c.b16 %v1343, %v1342
        %v1363 = vpack.c.b16 %v1345, %v1344
        %v1364 = vpack.c.b16 %v1347, %v1346
        %v1365 = vpack.c.b16 %v1349, %v1348
        %v1366 = vpack.c.b16 %v1351, %v1350
        %v1367 = vpack.c.b16 %v1353, %v1352
        %v1368 = vpack.c.b16 %v1355, %v1354
        %v1369 = vpack.c.b16 %v1357, %v1356
        %v1370 = vpack.c.b16 %v1359, %v1358
        %v1372 = vsel %vm623, %v1360, 0
        %v1375 = vsel %vm623, %v1361, 0
        %v1378 = vsel %vm623, %v1362, 0
        %v1381 = vsel %vm623, %v1363, 0
        %v1384 = vsel %vm623, %v1364, 0
        %v1387 = vsel %vm623, %v1365, 0
        %v1390 = vsel %vm623, %v1366, 0
        %v1393 = vsel %vm623, %v1367, 0
        %v1396 = vsel %vm623, %v1368, 0
        %v1399 = vsel %vm623, %v1369, 0
        %v1402 = vsel %vm623, %v1370, 0
        %1404 = vmatprep.subr.bf16.mxu0 0
        %1405 = vmatpush1.bf16.msra.mxu0 0
        %1406 = vmatprep.subr.bf16.mxu0 0
        %1407 = vmatpush1.bf16.msra.mxu0 0
        %1408 = vmatprep.subr.bf16.mxu0 0
        %1409 = vmatpush1.bf16.msra.mxu0 0
        %1410 = vmatprep.subr.bf16.mxu0 0
        %1411 = vmatpush1.bf16.msra.mxu0 0
        %1412 = vmatprep.subr.bf16.mxu0 0
        %1413 = vmatpush1.bf16.msra.mxu0 0
        %1414 = vmatprep.subr.bf16.mxu0 0
        %1415 = vmatpush1.bf16.msra.mxu0 0
        %1416 = vmatprep.subr.bf16.mxu0 0
        %1417 = vmatpush1.bf16.msra.mxu0 0
        %1418 = vmatprep.subr.bf16.mxu0 0
        %1419 = vmatpush1.bf16.msra.mxu0 %v662
        %1420 = vmatprep.subr.bf16.mxu0 0
        %1421 = vmatpush2.bf16.msra.mxu0 0
        %1422 = vmatprep.subr.bf16.mxu0 0
        %1423 = vmatpush2.bf16.msra.mxu0 0
        %1424 = vmatprep.subr.bf16.mxu0 0
        %1425 = vmatpush2.bf16.msra.mxu0 0
        %1426 = vmatprep.subr.bf16.mxu0 0
        %1427 = vmatpush2.bf16.msra.mxu0 0
        %1428 = vmatprep.subr.bf16.mxu0 0
        %1429 = vmatpush2.bf16.msra.mxu0 0
        %1430 = vmatprep.subr.bf16.mxu0 0
        %1431 = vmatpush2.bf16.msra.mxu0 0
        %1432 = vmatprep.subr.bf16.mxu0 0
        %1433 = vmatpush2.bf16.msra.mxu0 0
        %1434 = vmatprep.subr.bf16.mxu0 0
        %1435 = vmatpush2.bf16.msra.mxu0 0
        %1436 = vmatprep.mubr.bf16.mxu0 0
        %1437 = vmatmul.mubr.bf16.gmra.mxu0 %v1372
        %v1438 = vpop.f32.mrf.mxu0
        %v1439 = vadd.f32 0.0, %v1438
        %v1440 = vpop.f32.mrf.mxu0
        %v1441 = vpop.f32.mrf.mxu0
        %v1442 = vadd.f32 0.0, %v1441
        %v1443 = vpop.f32.mrf.mxu0
        %1444 = vmatprep.mubr.bf16.mxu0 0
        %1445 = vmatmul.mubr.bf16.gmra.mxu0 %v1375
        %v1446 = vpop.f32.mrf.mxu0
        %v1447 = vadd.f32 0.0, %v1446
        %v1448 = vpop.f32.mrf.mxu0
        %v1449 = vpop.f32.mrf.mxu0
        %v1450 = vadd.f32 0.0, %v1449
        %v1451 = vpop.f32.mrf.mxu0
        %1452 = vmatprep.mubr.bf16.mxu0 0
        %1453 = vmatmul.mubr.bf16.gmra.mxu0 %v1378
        %v1454 = vpop.f32.mrf.mxu0
        %v1455 = vadd.f32 0.0, %v1454
        %v1456 = vpop.f32.mrf.mxu0
        %v1457 = vpop.f32.mrf.mxu0
        %v1458 = vadd.f32 0.0, %v1457
        %v1459 = vpop.f32.mrf.mxu0
        %1460 = vmatprep.mubr.bf16.mxu0 0
        %1461 = vmatmul.mubr.bf16.gmra.mxu0 %v1381
        %v1462 = vpop.f32.mrf.mxu0
        %v1463 = vadd.f32 0.0, %v1462
        %v1464 = vpop.f32.mrf.mxu0
        %v1465 = vpop.f32.mrf.mxu0
        %v1466 = vadd.f32 0.0, %v1465
        %v1467 = vpop.f32.mrf.mxu0
        %1468 = vmatprep.mubr.bf16.mxu0 0
        %1469 = vmatmul.mubr.bf16.gmra.mxu0 %v1384
        %v1470 = vpop.f32.mrf.mxu0
        %v1471 = vadd.f32 0.0, %v1470
        %v1472 = vpop.f32.mrf.mxu0
        %v1473 = vpop.f32.mrf.mxu0
        %v1474 = vadd.f32 0.0, %v1473
        %v1475 = vpop.f32.mrf.mxu0
        %1476 = vmatprep.mubr.bf16.mxu0 0
        %1477 = vmatmul.mubr.bf16.gmra.mxu0 %v1387
        %v1478 = vpop.f32.mrf.mxu0
        %v1479 = vadd.f32 0.0, %v1478
        %v1480 = vpop.f32.mrf.mxu0
        %v1481 = vpop.f32.mrf.mxu0
        %v1482 = vadd.f32 0.0, %v1481
        %v1483 = vpop.f32.mrf.mxu0
        %1484 = vmatprep.mubr.bf16.mxu0 0
        %1485 = vmatmul.mubr.bf16.gmra.mxu0 %v1390
        %v1486 = vpop.f32.mrf.mxu0
        %v1487 = vadd.f32 0.0, %v1486
        %v1488 = vpop.f32.mrf.mxu0
        %v1489 = vpop.f32.mrf.mxu0
        %v1490 = vadd.f32 0.0, %v1489
        %v1491 = vpop.f32.mrf.mxu0
        %1492 = vmatprep.mubr.bf16.mxu0 0
        %1493 = vmatmul.mubr.bf16.gmra.mxu0 %v1393
        %v1494 = vpop.f32.mrf.mxu0
        %v1495 = vadd.f32 0.0, %v1494
        %v1496 = vpop.f32.mrf.mxu0
        %v1497 = vpop.f32.mrf.mxu0
        %v1498 = vadd.f32 0.0, %v1497
        %v1499 = vpop.f32.mrf.mxu0
        %1500 = vmatprep.mubr.bf16.mxu0 0
        %1501 = vmatmul.mubr.bf16.gmra.mxu0 %v1396
        %v1502 = vpop.f32.mrf.mxu0
        %v1503 = vadd.f32 0.0, %v1502
        %v1504 = vpop.f32.mrf.mxu0
        %v1505 = vpop.f32.mrf.mxu0
        %v1506 = vadd.f32 0.0, %v1505
        %v1507 = vpop.f32.mrf.mxu0
        %1508 = vmatprep.mubr.bf16.mxu0 0
        %1509 = vmatmul.mubr.bf16.gmra.mxu0 %v1399
        %v1510 = vpop.f32.mrf.mxu0
        %v1511 = vadd.f32 0.0, %v1510
        %v1512 = vpop.f32.mrf.mxu0
        %v1513 = vpop.f32.mrf.mxu0
        %v1514 = vadd.f32 0.0, %v1513
        %v1515 = vpop.f32.mrf.mxu0
        %1516 = vmatprep.mubr.bf16.mxu0 0
        %1517 = vmatmul.mubr.bf16.gmra.mxu0 %v1402
        %v1518 = vpop.f32.mrf.mxu0
        %v1519 = vadd.f32 0.0, %v1518
        %v1520 = vpop.f32.mrf.mxu0
        %v1521 = vpop.f32.mrf.mxu0
        %v1522 = vadd.f32 0.0, %v1521
        %v1523 = vpop.f32.mrf.mxu0
        %1524 = vdwg.mxu0
        %v1525 = vmax.f32 %v1271, %v1439
        %v1526 = vmax.f32 %v1272, %v1442
        %v1527 = vmax.f32 %v1273, %v1447
        %v1528 = vmax.f32 %v1274, %v1450
        %v1529 = vmax.f32 %v1275, %v1455
        %v1530 = vmax.f32 %v1276, %v1458
        %v1531 = vmax.f32 %v1277, %v1463
        %v1532 = vmax.f32 %v1278, %v1466
        %v1533 = vmax.f32 %v1279, %v1471
        %v1534 = vmax.f32 %v1280, %v1474
        %v1535 = vmax.f32 %v1281, %v1479
        %v1536 = vmax.f32 %v1282, %v1482
        %v1537 = vmax.f32 %v1283, %v1487
        %v1538 = vmax.f32 %v1284, %v1490
        %v1539 = vmax.f32 %v1285, %v1495
        %v1540 = vmax.f32 %v1286, %v1498
        %v1541 = vmax.f32 %v1287, %v1503
        %v1542 = vmax.f32 %v1288, %v1506
        %v1543 = vmax.f32 %v1289, %v1511
        %v1544 = vmax.f32 %v1290, %v1514
        %v1545 = vmax.f32 %v1291, %v1519
        %v1546 = vmax.f32 %v1292, %v1522
        %v1547 = vmax.f32 %v1525, 0.0
        %v1548 = vmax.f32 %v1526, 0.0
        %v1549 = vmax.f32 %v1527, 0.0
        %v1550 = vmax.f32 %v1528, 0.0
        %v1551 = vmax.f32 %v1529, 0.0
        %v1552 = vmax.f32 %v1530, 0.0
        %v1553 = vmax.f32 %v1531, 0.0
        %v1554 = vmax.f32 %v1532, 0.0
        %v1555 = vmax.f32 %v1533, 0.0
        %v1556 = vmax.f32 %v1534, 0.0
        %v1557 = vmax.f32 %v1535, 0.0
        %v1558 = vmax.f32 %v1536, 0.0
        %v1559 = vmax.f32 %v1537, 0.0
        %v1560 = vmax.f32 %v1538, 0.0
        %v1561 = vmax.f32 %v1539, 0.0
        %v1562 = vmax.f32 %v1540, 0.0
        %v1563 = vmax.f32 %v1541, 0.0
        %v1564 = vmax.f32 %v1542, 0.0
        %v1565 = vmax.f32 %v1543, 0.0
        %v1566 = vmax.f32 %v1544, 0.0
        %v1567 = vmax.f32 %v1545, 0.0
        %v1568 = vmax.f32 %v1546, 0.0
        %v1569 = vpack.c.bf16 %v1548, %v1547
        %v1570 = vpack.c.bf16 %v1550, %v1549
        %v1571 = vpack.c.bf16 %v1552, %v1551
        %v1572 = vpack.c.bf16 %v1554, %v1553
        %v1573 = vpack.c.bf16 %v1556, %v1555
        %v1574 = vpack.c.bf16 %v1558, %v1557
        %v1575 = vpack.c.bf16 %v1560, %v1559
        %v1576 = vpack.c.bf16 %v1562, %v1561
        %v1577 = vpack.c.bf16 %v1564, %v1563
        %v1578 = vpack.c.bf16 %v1566, %v1565
        %v1579 = vpack.c.bf16 %v1568, %v1567
        %v1591 = vunpack.c.l.b16 %v1569
        %v1592 = vunpack.c.h.b16 %v1569
        %v1593 = vunpack.c.l.b16 %v1570
        %v1594 = vunpack.c.h.b16 %v1570
        %v1595 = vunpack.c.l.b16 %v1571
        %v1596 = vunpack.c.h.b16 %v1571
        %v1597 = vunpack.c.l.b16 %v1572
        %v1598 = vunpack.c.h.b16 %v1572
        %v1599 = vunpack.c.l.b16 %v1573
        %v1600 = vunpack.c.h.b16 %v1573
        %v1601 = vunpack.c.l.b16 %v1574
        %v1602 = vunpack.c.h.b16 %v1574
        %v1603 = vunpack.c.l.b16 %v1575
        %v1604 = vunpack.c.h.b16 %v1575
        %v1605 = vunpack.c.l.b16 %v1576
        %v1606 = vunpack.c.h.b16 %v1576
        %v1607 = vunpack.c.l.b16 %v1577
        %v1608 = vunpack.c.h.b16 %v1577
        %v1609 = vunpack.c.l.b16 %v1578
        %v1610 = vunpack.c.h.b16 %v1578
        %v1611 = vunpack.c.l.b16 %v1579
        %v1612 = vunpack.c.h.b16 %v1579
        %v1613 = vpack.c.b16 %v1591, %v1591
        %v1614 = vpack.c.b16 %v1592, %v1592
        %v1615 = vpack.c.b16 %v1593, %v1593
        %v1616 = vpack.c.b16 %v1594, %v1594
        %v1617 = vpack.c.b16 %v1595, %v1595
        %v1618 = vpack.c.b16 %v1596, %v1596
        %v1619 = vpack.c.b16 %v1597, %v1597
        %v1620 = vpack.c.b16 %v1598, %v1598
        %v1621 = vpack.c.b16 %v1599, %v1599
        %v1622 = vpack.c.b16 %v1600, %v1600
        %v1623 = vpack.c.b16 %v1601, %v1601
        %v1624 = vpack.c.b16 %v1602, %v1602
        %v1625 = vpack.c.b16 %v1603, %v1603
        %v1626 = vpack.c.b16 %v1604, %v1604
        %v1627 = vpack.c.b16 %v1605, %v1605
        %v1628 = vpack.c.b16 %v1606, %v1606
        %v1629 = vpack.c.b16 %v1607, %v1607
        %v1630 = vpack.c.b16 %v1608, %v1608
        %v1631 = vpack.c.b16 %v1609, %v1609
        %v1632 = vpack.c.b16 %v1610, %v1610
        %v1633 = vpack.c.b16 %v1611, %v1611
        %v1634 = vpack.c.b16 %v1612, %v1612
        %vm1657 = vcmask 125952
        %1658 = vst.msk [vmem:[%s536] sm:$0xf] %vm1657, %v1613
        %1659 = vst.msk [vmem:[%s536 + $0x4] sm:$0xf] %vm1657, %v1614
        %1660 = vst.msk [vmem:[%s536 + $0x8] sm:$0xf] %vm1657, %v1615
        %1661 = vst.msk [vmem:[%s536 + $0xc] sm:$0xf] %vm1657, %v1616
        %1662 = vst.msk [vmem:[%s536 + $0x10] sm:$0xf] %vm1657, %v1617
        %1663 = vst.msk [vmem:[%s536 + $0x14] sm:$0xf] %vm1657, %v1618
        %1664 = vst.msk [vmem:[%s536 + $0x18] sm:$0xf] %vm1657, %v1619
        %1665 = vst.msk [vmem:[%s536 + $0x1c] sm:$0xf] %vm1657, %v1620
        %1666 = vst.msk [vmem:[%s536 + $0x20] sm:$0xf] %vm1657, %v1621
        %1667 = vst.msk [vmem:[%s536 + $0x24] sm:$0xf] %vm1657, %v1622
        %1668 = vst.msk [vmem:[%s536 + $0x28] sm:$0xf] %vm1657, %v1623
        %1669 = vst.msk [vmem:[%s536 + $0x2c] sm:$0xf] %vm1657, %v1624
        %1670 = vst.msk [vmem:[%s536 + $0x30] sm:$0xf] %vm1657, %v1625
        %1671 = vst.msk [vmem:[%s536 + $0x34] sm:$0xf] %vm1657, %v1626
        %1672 = vst.msk [vmem:[%s536 + $0x38] sm:$0xf] %vm1657, %v1627
        %1673 = vst.msk [vmem:[%s536 + $0x3c] sm:$0xf] %vm1657, %v1628
        %1674 = vst.msk [vmem:[%s536 + $0x40] sm:$0xf] %vm1657, %v1629
        %1675 = vst.msk [vmem:[%s536 + $0x44] sm:$0xf] %vm1657, %v1630
        %1676 = vst.msk [vmem:[%s536 + $0x48] sm:$0xf] %vm1657, %v1631
        %1677 = vst.msk [vmem:[%s536 + $0x4c] sm:$0xf] %vm1657, %v1632
        %1678 = vst.msk [vmem:[%s536 + $0x50] sm:$0xf] %vm1657, %v1633
        %1679 = vst.msk [vmem:[%s536 + $0x54] sm:$0xf] %vm1657, %v1634
        %s1680 = smul.u32 22, %s13
        %p1681 = scmp.lt.s32.totalorder %s1680, 43
        %s1682 = scalar_select %p1681, %s1680, 43
        %s1683 = smul.addr %s1682, 4
        %s1684 = scalar_lea.vmem %s2, %s1683
        // Predicated region
        $region70: #{cnn_net2_forward.3} parent=64 // pred_check
          %p1685 = pneg %p78
        $region71: #{cnn_net2_forward.3} parent=64 // pred_check_branch
          %1687 = sbr.rel (%p1685) target = $region73
        $region72: #{cnn_net2_forward.3} parent=64 // pred_region
          %s1688 = smul.u32 22, %s13
        $region73: #{cnn_net2_forward.3} parent=64 // pred_fallthru
          _
      $region65: #{cnn_net2_forward.3} parent=5 // pred_fallthru
        _
      %p1689 = scmp.le.s32.totalorder 2, %s8
      // Predicated region
      $region74: #{cnn_net2_forward.3} parent=5 // pred_check
        %p1690 = pneg %p1689
      $region75: #{cnn_net2_forward.3} parent=5 // pred_check_branch
        %1692 = sbr.rel (%p1690) target = $region77
      $region76: #{cnn_net2_forward.3} parent=5 // pred_region
        %s1693 = ssub.s32 %s8, 2
        // Predicated region
        $region78: #{cnn_net2_forward.3} parent=76 // pred_check
          %p1694 = pneg %p84
        $region79: #{cnn_net2_forward.3} parent=76 // pred_check_branch
          %1696 = sbr.rel (%p1694) target = $region81
        $region80: #{cnn_net2_forward.3} parent=76 // pred_region
          %s1697 = smul.u32 22, %s14
          %p1698 = scmp.lt.s32.totalorder %s1697, 43
          %s1699 = scalar_select %p1698, %s1697, 43
          %s1700 = smul.addr %s1699, 4
          %s1701 = scalar_lea.vmem %s2, %s1700
        $region81: #{cnn_net2_forward.3} parent=76 // pred_fallthru
          _
      $region77: #{cnn_net2_forward.3} parent=5 // pred_fallthru
        _
    $region6: #{cnn_net2_forward.3} parent=1 // loop_footer
      %s12 = sadd.s32 1, %s8
    $region7: #{cnn_net2_forward.3} parent=1 // loop_footer_branch
      %7 = sbr.rel target = $region3
    $region8: #{cnn_net2_forward.3} parent=1 // loop_exit
      _

// kernel: cnn_net2_forward.4
$region0: #{cnn_net2_forward.4}
  #allocation0 [shape = 'u32[]', space=smem, size = 0x4, offset = 0x4, fixed_abs, tag = 'smem constant byte address 0x4 - core index']
  #allocation1 [shape = 'u32[144,128]{1,0:T(1,128)}', space=vmem, size = 0x12000, scoped, tag = 'internal scratch']
  %s0 = inlined_call_operand.vmem [shape: bf16[4,96,144], index: 0, kind: input, shape index: {}]
  %s1 = inlined_call_operand.vmem [shape: bf16[144,32], index: 1, kind: input, shape index: {}]
  %s2 = inlined_call_operand.vmem [shape: bf16[96,32], index: 2, kind: output, shape index: {}]
  %s3 = sld [smem:[#allocation0]]
  $region79: #{cnn_net2_forward.4} parent=0
    _
  %s5 = ssub.s32 1, %s3
  %s6 = scalar_select 0, %s5, %s3
  $region1: #{cnn_net2_forward.4} parent=0
    #allocation2 [shape = 'u8[196608]{0}', space=vmem, size = 0x30000, scoped, tag = 'input window, operand 0']
    loop: start=0, step=1, limit=4
    $region2: #{cnn_net2_forward.4} parent=1 // loop_pre_header
      _
    $region3: #{cnn_net2_forward.4} parent=1 // loop_header
      %s8 = sphi 0, %s12
      %p9 = scmp.ge.s32.totalorder %s8, 4
      %s18 = sphi 0, %s20
      %s21 = sphi 0, %s18
      %s22 = sphi 0, %s21
      %s38 = sphi 0, %s22
      %s42 = sphi 0, %s42
      %s44 = sphi 0, %s42
      %s45 = sphi 0, %s44
      %s59 = sphi 0, %s45
      %s65 = sphi 0, %s67
      %s68 = sphi 0, %s65
      %s69 = sphi 0, %s68
      %s85 = sphi 0, %s69
    $region4: #{cnn_net2_forward.4} parent=1 // loop_header_branch
      %11 = sbr.rel (%p9) target = $region8
    $region5: #{cnn_net2_forward.4} parent=1 // loop_body
      %s13 = ssub.s32 %s8, 1
      %s14 = ssub.s32 %s8, 2
      %s15 = sadd.s32 %s8, 1
      %s16 = ssub.s32 %s8, %s15
      %p17 = scmp.eq.s32.totalorder %s16, 0
      %s19 = sadd.s32 %s18, 1
      %s20 = scalar_select %p17, %s18, %s19
      %p23 = pneg %p17
      %p24 = scmp.eq.s32.totalorder %s8, 1
      %p25 = por %p23, %p24
      %p26 = scmp.ne.s32.totalorder %s18, %s21
      %p27 = scmp.eq.s32.totalorder %s8, 0
      %p28 = por %p26, %p27
      %p29 = scmp.ne.s32.totalorder %s18, %s21
      %p30 = scmp.eq.s32.totalorder %s13, 1
      %p31 = por %p29, %p30
      %p32 = scmp.ne.s32.totalorder %s21, %s22
      %p33 = scmp.eq.s32.totalorder %s13, 0
      %p34 = por %p32, %p33
      %p35 = scmp.ne.s32.totalorder %s21, %s22
      %p36 = scmp.eq.s32.totalorder %s14, 1
      %p37 = por %p35, %p36
      %p39 = scmp.ne.s32.totalorder %s22, %s38
      %p40 = scmp.eq.s32.totalorder %s14, 0
      %p41 = por %p39, %p40
      %s43 = sadd.s32 %s42, 1
      %p46 = scmp.eq.s32.totalorder %s8, 1
      %p47 = scmp.ne.s32.totalorder %s42, %s44
      %p48 = scmp.eq.s32.totalorder %s8, 0
      %p49 = por %p47, %p48
      %p50 = scmp.ne.s32.totalorder %s42, %s44
      %p51 = scmp.eq.s32.totalorder %s13, 1
      %p52 = por %p50, %p51
      %p53 = scmp.ne.s32.totalorder %s44, %s45
      %p54 = scmp.eq.s32.totalorder %s13, 0
      %p55 = por %p53, %p54
      %p56 = scmp.ne.s32.totalorder %s44, %s45
      %p57 = scmp.eq.s32.totalorder %s14, 1
      %p58 = por %p56, %p57
      %p60 = scmp.ne.s32.totalorder %s45, %s59
      %p61 = scmp.eq.s32.totalorder %s14, 0
      %p62 = por %p60, %p61
      %s63 = ssub.s32 %s8, %s15
      %p64 = scmp.eq.s32.totalorder %s63, 0
      %s66 = sadd.s32 %s65, 1
      %s67 = scalar_select %p64, %s65, %s66
      %p70 = pneg %p64
      %p71 = scmp.eq.s32.totalorder %s8, 1
      %p72 = por %p70, %p71
      %p73 = scmp.ne.s32.totalorder %s65, %s68
      %p74 = scmp.eq.s32.totalorder %s8, 0
      %p75 = por %p73, %p74
      %p76 = scmp.ne.s32.totalorder %s65, %s68
      %p77 = scmp.eq.s32.totalorder %s13, 1
      %p78 = por %p76, %p77
      %p79 = scmp.ne.s32.totalorder %s68, %s69
      %p80 = scmp.eq.s32.totalorder %s13, 0
      %p81 = por %p79, %p80
      %p82 = scmp.ne.s32.totalorder %s68, %s69
      %p83 = scmp.eq.s32.totalorder %s14, 1
      %p84 = por %p82, %p83
      %p86 = scmp.ne.s32.totalorder %s69, %s85
      %p87 = scmp.eq.s32.totalorder %s14, 0
      %p88 = por %p86, %p87
      %p89 = scmp.le.s32.totalorder 1, %s8
      %p90 = scmp.lt.s32.totalorder %s8, 3
      %p91 = pnand %p89, %p90
      %p92 = pneg %p91
      // Predicated region
      $region9: #{cnn_net2_forward.4} parent=5 // pred_check
        _
      $region10: #{cnn_net2_forward.4} parent=5 // pred_check_branch
        %94 = sbr.rel (%p91) target = $region12
      $region11: #{cnn_net2_forward.4} parent=5 // pred_region
        %s95 = ssub.s32 %s8, 1
        // Predicated region
        $region13: #{cnn_net2_forward.4} parent=11 // pred_check
          %p96 = pneg %p55
        $region14: #{cnn_net2_forward.4} parent=11 // pred_check_branch
          %98 = sbr.rel (%p96) target = $region16
        $region15: #{cnn_net2_forward.4} parent=11 // pred_region
          _
        $region16: #{cnn_net2_forward.4} parent=11 // pred_fallthru
          _
      $region12: #{cnn_net2_forward.4} parent=5 // pred_fallthru
        _
      %p99 = scmp.lt.s32.totalorder %s8, 2
      // Predicated region
      $region17: #{cnn_net2_forward.4} parent=5 // pred_check
        %p100 = pneg %p99
      $region18: #{cnn_net2_forward.4} parent=5 // pred_check_branch
        %102 = sbr.rel (%p100) target = $region20
      $region19: #{cnn_net2_forward.4} parent=5 // pred_region
        // Predicated region
        $region21: #{cnn_net2_forward.4} parent=19 // pred_check
          %p103 = pneg %p28
        $region22: #{cnn_net2_forward.4} parent=19 // pred_check_branch
          %105 = sbr.rel (%p103) target = $region24
        $region23: #{cnn_net2_forward.4} parent=19 // pred_region
          %s106 = sand.u32 %s18, 1
          %s107 = sand.u32 %s18, 1
          %s108 = smul.addr %s107, 192
          %s109 = scalar_lea.vmem [#allocation2], %s108
          %s110 = smul.u32 6, %s8
          %s111 = smul.addr %s110, 2
          %s112 = smul.addr %s111, 4
          %s113 = scalar_lea.vmem %s0, %s112
          // Predicated region
          $region25: #{cnn_net2_forward.4} parent=23 // pred_check
            _
          $region26: #{cnn_net2_forward.4} parent=23 // pred_check_branch
            %115 = sbr.rel (0) target = $region28
          $region27: #{cnn_net2_forward.4} parent=23 // pred_region
            // Predicated region
            $region29: #{cnn_net2_forward.4} parent=27 // pred_check
              _
            $region30: #{cnn_net2_forward.4} parent=27 // pred_check_branch
              %117 = sbr.rel (0) target = $region32
            $region31: #{cnn_net2_forward.4} parent=27 // pred_region
              // Predicated region
              $region44: #{cnn_net2_forward.4} parent=31 // pred_check
                _
              $region45: #{cnn_net2_forward.4} parent=31 // pred_check_branch
                %179 = sbr.rel (0) target = $region47
              $region46: #{cnn_net2_forward.4} parent=31 // pred_region
                loop: start=0, step=1, limit=1
                $region48: #{cnn_net2_forward.4} parent=46 // loop_pre_header
                  _
                $region49: #{cnn_net2_forward.4} parent=46 // loop_header
                  %s181 = sphi 0, %s185
                  %p182 = scmp.ge.s32.totalorder %s181, 1
                  %s186 = sphi %s113, %s113
                  %s187 = sphi %s109, %s109
                $region50: #{cnn_net2_forward.4} parent=46 // loop_header_branch
                  %184 = sbr.rel (%p182) target = $region54
                $region51: #{cnn_net2_forward.4} parent=46 // loop_body
                  %v188 = vld [vmem:[%s186] sm:$0xff]
                  %189 = vst [vmem:[%s187] sm:$0xff] %v188
                  %v190 = vld [vmem:[%s186 + $0x8] sm:$0xff]
                  %191 = vst [vmem:[%s187 + $0x8] sm:$0xff] %v190
                  %v192 = vld [vmem:[%s186 + $0x10] sm:$0xff]
                  %193 = vst [vmem:[%s187 + $0x10] sm:$0xff] %v192
                  %v194 = vld [vmem:[%s186 + $0x18] sm:$0xff]
                  %195 = vst [vmem:[%s187 + $0x18] sm:$0xff] %v194
                  %v196 = vld [vmem:[%s186 + $0x20] sm:$0xff]
                  %197 = vst [vmem:[%s187 + $0x20] sm:$0xff] %v196
                  %v198 = vld [vmem:[%s186 + $0x28] sm:$0xff]
                  %199 = vst [vmem:[%s187 + $0x28] sm:$0xff] %v198
                  %v200 = vld [vmem:[%s186 + $0x60] sm:$0xff]
                  %201 = vst [vmem:[%s187 + $0x30] sm:$0xff] %v200
                  %v202 = vld [vmem:[%s186 + $0x68] sm:$0xff]
                  %203 = vst [vmem:[%s187 + $0x38] sm:$0xff] %v202
                  %v204 = vld [vmem:[%s186 + $0x70] sm:$0xff]
                  %205 = vst [vmem:[%s187 + $0x40] sm:$0xff] %v204
                  %v206 = vld [vmem:[%s186 + $0x78] sm:$0xff]
                  %207 = vst [vmem:[%s187 + $0x48] sm:$0xff] %v206
                  %v208 = vld [vmem:[%s186 + $0x80] sm:$0xff]
                  %209 = vst [vmem:[%s187 + $0x50] sm:$0xff] %v208
                  %v210 = vld [vmem:[%s186 + $0x88] sm:$0xff]
                  %211 = vst [vmem:[%s187 + $0x58] sm:$0xff] %v210
                  %v212 = vld [vmem:[%s186 + $0xc0] sm:$0xff]
                  %213 = vst [vmem:[%s187 + $0x60] sm:$0xff] %v212
                  %v214 = vld [vmem:[%s186 + $0xc8] sm:$0xff]
                  %215 = vst [vmem:[%s187 + $0x68] sm:$0xff] %v214
                  %v216 = vld [vmem:[%s186 + $0xd0] sm:$0xff]
                  %217 = vst [vmem:[%s187 + $0x70] sm:$0xff] %v216
                  %v218 = vld [vmem:[%s186 + $0xd8] sm:$0xff]
                  %219 = vst [vmem:[%s187 + $0x78] sm:$0xff] %v218
                  %v220 = vld [vmem:[%s186 + $0xe0] sm:$0xff]
                  %221 = vst [vmem:[%s187 + $0x80] sm:$0xff] %v220
                  %v222 = vld [vmem:[%s186 + $0xe8] sm:$0xff]
                  %223 = vst [vmem:[%s187 + $0x88] sm:$0xff] %v222
                  %v224 = vld [vmem:[%s186 + $0x120] sm:$0xff]
                  %225 = vst [vmem:[%s187 + $0x90] sm:$0xff] %v224
                  %v226 = vld [vmem:[%s186 + $0x128] sm:$0xff]
                  %227 = vst [vmem:[%s187 + $0x98] sm:$0xff] %v226
                  %v228 = vld [vmem:[%s186 + $0x130] sm:$0xff]
                  %229 = vst [vmem:[%s187 + $0xa0] sm:$0xff] %v228
                  %v230 = vld [vmem:[%s186 + $0x138] sm:$0xff]
                  %231 = vst [vmem:[%s187 + $0xa8] sm:$0xff] %v230
                  %v232 = vld [vmem:[%s186 + $0x140] sm:$0xff]
                  %233 = vst [vmem:[%s187 + $0xb0] sm:$0xff] %v232
                  %v234 = vld [vmem:[%s186 + $0x148] sm:$0xff]
                  %235 = vst [vmem:[%s187 + $0xb8] sm:$0xff] %v234
                $region52: #{cnn_net2_forward.4} parent=46 // loop_footer
                  %s185 = sadd.s32 1, %s181
                $region53: #{cnn_net2_forward.4} parent=46 // loop_footer_branch
                  %180 = sbr.rel target = $region49
                $region54: #{cnn_net2_forward.4} parent=46 // loop_exit
                  _
              $region47: #{cnn_net2_forward.4} parent=31 // pred_fallthru
                _
              // Predicated region
              $region55: #{cnn_net2_forward.4} parent=31 // pred_check
                _
              $region56: #{cnn_net2_forward.4} parent=31 // pred_check_branch
                %237 = sbr.rel target = $region58
              $region57: #{cnn_net2_forward.4} parent=31 // pred_region
                _
              $region58: #{cnn_net2_forward.4} parent=31 // pred_fallthru
                _
            $region32: #{cnn_net2_forward.4} parent=27 // pred_fallthru
              _
            // Predicated region
            $region33: #{cnn_net2_forward.4} parent=27 // pred_check
              _
            $region34: #{cnn_net2_forward.4} parent=27 // pred_check_branch
              %119 = sbr.rel target = $region36
            $region35: #{cnn_net2_forward.4} parent=27 // pred_region
              %s121 = ssub.s32 256, 1
              loop: start=0, step=1, limit=1
              $region37: #{cnn_net2_forward.4} parent=35 // loop_pre_header
                _
              $region38: #{cnn_net2_forward.4} parent=35 // loop_header
                %s123 = sphi 0, %s127
                %p124 = scmp.ge.s32.totalorder %s123, 1
                %s128 = sphi %s113, %s113
                %s129 = sphi %s109, %s109
              $region39: #{cnn_net2_forward.4} parent=35 // loop_header_branch
                %126 = sbr.rel (%p124) target = $region43
              $region40: #{cnn_net2_forward.4} parent=35 // loop_body
                %v130 = vld [vmem:[%s128] sm:%s121]
                %131 = vst [vmem:[%s129] sm:%s121] %v130
                %v132 = vld [vmem:[%s128 + $0x8] sm:%s121]
                %133 = vst [vmem:[%s129 + $0x8] sm:%s121] %v132
                %v134 = vld [vmem:[%s128 + $0x10] sm:%s121]
                %135 = vst [vmem:[%s129 + $0x10] sm:%s121] %v134
                %v136 = vld [vmem:[%s128 + $0x18] sm:%s121]
                %137 = vst [vmem:[%s129 + $0x18] sm:%s121] %v136
                %v138 = vld [vmem:[%s128 + $0x20] sm:%s121]
                %139 = vst [vmem:[%s129 + $0x20] sm:%s121] %v138
                %v140 = vld [vmem:[%s128 + $0x28] sm:%s121]
                %141 = vst [vmem:[%s129 + $0x28] sm:%s121] %v140
                %v142 = vld [vmem:[%s128 + $0x60] sm:%s121]
                %143 = vst [vmem:[%s129 + $0x30] sm:%s121] %v142
                %v144 = vld [vmem:[%s128 + $0x68] sm:%s121]
                %145 = vst [vmem:[%s129 + $0x38] sm:%s121] %v144
                %v146 = vld [vmem:[%s128 + $0x70] sm:%s121]
                %147 = vst [vmem:[%s129 + $0x40] sm:%s121] %v146
                %v148 = vld [vmem:[%s128 + $0x78] sm:%s121]
                %149 = vst [vmem:[%s129 + $0x48] sm:%s121] %v148
                %v150 = vld [vmem:[%s128 + $0x80] sm:%s121]
                %151 = vst [vmem:[%s129 + $0x50] sm:%s121] %v150
                %v152 = vld [vmem:[%s128 + $0x88] sm:%s121]
                %153 = vst [vmem:[%s129 + $0x58] sm:%s121] %v152
                %v154 = vld [vmem:[%s128 + $0xc0] sm:%s121]
                %155 = vst [vmem:[%s129 + $0x60] sm:%s121] %v154
                %v156 = vld [vmem:[%s128 + $0xc8] sm:%s121]
                %157 = vst [vmem:[%s129 + $0x68] sm:%s121] %v156
                %v158 = vld [vmem:[%s128 + $0xd0] sm:%s121]
                %159 = vst [vmem:[%s129 + $0x70] sm:%s121] %v158
                %v160 = vld [vmem:[%s128 + $0xd8] sm:%s121]
                %161 = vst [vmem:[%s129 + $0x78] sm:%s121] %v160
                %v162 = vld [vmem:[%s128 + $0xe0] sm:%s121]
                %163 = vst [vmem:[%s129 + $0x80] sm:%s121] %v162
                %v164 = vld [vmem:[%s128 + $0xe8] sm:%s121]
                %165 = vst [vmem:[%s129 + $0x88] sm:%s121] %v164
                %v166 = vld [vmem:[%s128 + $0x120] sm:%s121]
                %167 = vst [vmem:[%s129 + $0x90] sm:%s121] %v166
                %v168 = vld [vmem:[%s128 + $0x128] sm:%s121]
                %169 = vst [vmem:[%s129 + $0x98] sm:%s121] %v168
                %v170 = vld [vmem:[%s128 + $0x130] sm:%s121]
                %171 = vst [vmem:[%s129 + $0xa0] sm:%s121] %v170
                %v172 = vld [vmem:[%s128 + $0x138] sm:%s121]
                %173 = vst [vmem:[%s129 + $0xa8] sm:%s121] %v172
                %v174 = vld [vmem:[%s128 + $0x140] sm:%s121]
                %175 = vst [vmem:[%s129 + $0xb0] sm:%s121] %v174
                %v176 = vld [vmem:[%s128 + $0x148] sm:%s121]
                %177 = vst [vmem:[%s129 + $0xb8] sm:%s121] %v176
              $region41: #{cnn_net2_forward.4} parent=35 // loop_footer
                %s127 = sadd.s32 1, %s123
              $region42: #{cnn_net2_forward.4} parent=35 // loop_footer_branch
                %122 = sbr.rel target = $region38
              $region43: #{cnn_net2_forward.4} parent=35 // loop_exit
                _
            $region36: #{cnn_net2_forward.4} parent=27 // pred_fallthru
              _
          $region28: #{cnn_net2_forward.4} parent=23 // pred_fallthru
            _
          %238 = vnop
        $region24: #{cnn_net2_forward.4} parent=19 // pred_fallthru
          _
      $region20: #{cnn_net2_forward.4} parent=5 // pred_fallthru
        _
      %p239 = scmp.le.s32.totalorder 1, %s8
      %p240 = scmp.lt.s32.totalorder %s8, 3
      %p241 = pnand %p239, %p240
      %p242 = pneg %p241
      // Predicated region
      $region59: #{cnn_net2_forward.4} parent=5 // pred_check
        _
      $region60: #{cnn_net2_forward.4} parent=5 // pred_check_branch
        %244 = sbr.rel (%p241) target = $region62
      $region61: #{cnn_net2_forward.4} parent=5 // pred_region
        %s245 = ssub.s32 %s8, 1
        %s246 = sand.u32 %s21, 1
        %s247 = sand.u32 %s21, 1
        %s248 = smul.addr %s247, 192
        %s249 = scalar_lea.vmem [#allocation2], %s248
        // Predicated region
        $region63: #{cnn_net2_forward.4} parent=61 // pred_check
          %p250 = pneg %p34
        $region64: #{cnn_net2_forward.4} parent=61 // pred_check_branch
          %252 = sbr.rel (%p250) target = $region66
        $region65: #{cnn_net2_forward.4} parent=61 // pred_region
          _
        $region66: #{cnn_net2_forward.4} parent=61 // pred_fallthru
          _
        %s253 = sand.u32 %s21, 1
        %s254 = sand.u32 %s21, 1
        %s255 = smul.addr %s254, 192
        %s256 = scalar_lea.vmem [#allocation2], %s255
        %p257 = pneg %p34
        %p258 = pneg %p31
        %p259 = pneg %p55
        %p260 = pneg %p52
        %p261 = pneg %p81
        %p262 = pneg %p78
        %s263 = smul.u32 6, %s13
        %p264 = scmp.lt.s32.totalorder %s263, 11
        %s265 = scalar_select %p264, %s263, 11
        %s266 = smul.addr %s265, 4
        %s267 = scalar_lea.vmem %s2, %s266
        %s268 = smul.u32 6, %s13
        %s269 = smul.u32 6, %s13
        %p270 = scmp.lt.s32.totalorder %s269, 11
        %s271 = scalar_select %p270, %s269, 11
        %s272 = smul.addr %s271, 4
        %s273 = scalar_lea.vmem %s2, %s272
        %s274 = smul.u32 6, %s13
        %v276 = vld [vmem:[%s1] sm:$0xf]
        %v277 = vld [vmem:[%s1 + $0x4] sm:$0xf]
        %v278 = vld [vmem:[%s1 + $0x8] sm:$0xf]
        %v279 = vld [vmem:[%s1 + $0xc] sm:$0xf]
        %v280 = vld [vmem:[%s1 + $0x10] sm:$0xf]
        %v281 = vld [vmem:[%s1 + $0x14] sm:$0xf]
        %v282 = vld [vmem:[%s1 + $0x18] sm:$0xf]
        %v283 = vld [vmem:[%s1 + $0x1c] sm:$0xf]
        %v284 = vld [vmem:[%s1 + $0x20] sm:$0xf]
        %v285 = vld [vmem:[%s1 + $0x24] sm:$0xf]
        %v286 = vld [vmem:[%s1 + $0x28] sm:$0xf]
        %v287 = vld [vmem:[%s1 + $0x2c] sm:$0xf]
        %v288 = vld [vmem:[%s1 + $0x30] sm:$0xf]
        %v289 = vld [vmem:[%s1 + $0x34] sm:$0xf]
        %v290 = vld [vmem:[%s1 + $0x38] sm:$0xf]
        %v291 = vld [vmem:[%s1 + $0x3c] sm:$0xf]
        %v292 = vld [vmem:[%s1 + $0x40] sm:$0xf]
        %v293 = vld [vmem:[%s1 + $0x44] sm:$0xf]
        %v294 = vld [vmem:[%s249] sm:$0xff]
        %v295 = vld [vmem:[%s249 + $0x8] sm:$0xff]
        %v296 = vld [vmem:[%s249 + $0x10] sm:$0xff]
        %v297 = vld [vmem:[%s249 + $0x18] sm:$0xff]
        %v298 = vld [vmem:[%s249 + $0x20] sm:$0xff]
        %v299 = vld [vmem:[%s249 + $0x28] sm:$0xff]
        %v306 = vunpack.c.l.b16 %v294
        %v307 = vunpack.c.h.b16 %v294
        %v308 = vunpack.c.l.b16 %v295
        %v309 = vunpack.c.h.b16 %v295
        %v310 = vunpack.c.l.b16 %v296
        %v311 = vunpack.c.h.b16 %v296
        %v312 = vunpack.c.l.b16 %v297
        %v313 = vunpack.c.h.b16 %v297
        %v314 = vunpack.c.l.b16 %v298
        %v315 = vunpack.c.h.b16 %v298
        %v316 = vunpack.c.l.b16 %v299
        %v317 = vunpack.c.h.b16 %v299
        %v318 = vpack.c.b16 %v308, %v306
        %v319 = vpack.c.b16 %v309, %v307
        %v320 = vpack.c.b16 %v312, %v310
        %v321 = vpack.c.b16 %v313, %v311
        %v322 = vpack.c.b16 %v316, %v314
        %v323 = vpack.c.b16 %v317, %v315
        %v345 = vunpack.c.l.b16 %v276
        %v346 = vunpack.c.l.b16 %v277
        %v347 = vunpack.c.l.b16 %v278
        %v348 = vunpack.c.l.b16 %v279
        %v349 = vunpack.c.l.b16 %v280
        %v350 = vunpack.c.l.b16 %v281
        %v351 = vunpack.c.l.b16 %v282
        %v352 = vunpack.c.l.b16 %v283
        %v353 = vunpack.c.l.b16 %v284
        %v354 = vunpack.c.l.b16 %v285
        %v355 = vunpack.c.l.b16 %v286
        %v356 = vunpack.c.l.b16 %v287
        %v357 = vunpack.c.l.b16 %v288
        %v358 = vunpack.c.l.b16 %v289
        %v359 = vunpack.c.l.b16 %v290
        %v360 = vunpack.c.l.b16 %v291
        %v361 = vunpack.c.l.b16 %v292
        %v362 = vunpack.c.l.b16 %v293
        %v363 = vpack.c.b16 %v346, %v345
        %v364 = vpack.c.b16 %v348, %v347
        %v365 = vpack.c.b16 %v350, %v349
        %v366 = vpack.c.b16 %v352, %v351
        %v367 = vpack.c.b16 %v354, %v353
        %v368 = vpack.c.b16 %v356, %v355
        %v369 = vpack.c.b16 %v358, %v357
        %v370 = vpack.c.b16 %v360, %v359
        %v371 = vpack.c.b16 %v362, %v361
        %vm381 = vcmask 130048
        %v383 = vsel %vm381, %v319, 0
        %v386 = vsel %vm381, %v321, 0
        %v389 = vsel %vm381, %v323, 0
        %391 = vmatprep.subr.bf16.mxu0 0
        %392 = vmatpush1.bf16.msra.mxu0 %v370
        %393 = vmatprep.subr.bf16.mxu0 0
        %394 = vmatpush1.bf16.msra.mxu0 %v369
        %395 = vmatprep.subr.bf16.mxu0 0
        %396 = vmatpush1.bf16.msra.mxu0 %v368
        %397 = vmatprep.subr.bf16.mxu0 0
        %398 = vmatpush1.bf16.msra.mxu0 %v367
        %399 = vmatprep.subr.bf16.mxu0 0
        %400 = vmatpush1.bf16.msra.mxu0 %v366
        %401 = vmatprep.subr.bf16.mxu0 0
        %402 = vmatpush1.bf16.msra.mxu0 %v365
        %403 = vmatprep.subr.bf16.mxu0 0
        %404 = vmatpush1.bf16.msra.mxu0 %v364
        %405 = vmatprep.subr.bf16.mxu0 0
        %406 = vmatpush1.bf16.msra.mxu0 %v363
        %407 = vmatprep.subr.bf16.mxu0 0
        %408 = vmatpush2.bf16.msra.mxu0 0
        %409 = vmatprep.subr.bf16.mxu0 0
        %410 = vmatpush2.bf16.msra.mxu0 0
        %411 = vmatprep.subr.bf16.mxu0 0
        %412 = vmatpush2.bf16.msra.mxu0 0
        %413 = vmatprep.subr.bf16.mxu0 0
        %414 = vmatpush2.bf16.msra.mxu0 0
        %415 = vmatprep.subr.bf16.mxu0 0
        %416 = vmatpush2.bf16.msra.mxu0 0
        %417 = vmatprep.subr.bf16.mxu0 0
        %418 = vmatpush2.bf16.msra.mxu0 0
        %419 = vmatprep.subr.bf16.mxu0 0
        %420 = vmatpush2.bf16.msra.mxu0 0
        %421 = vmatprep.subr.bf16.mxu0 0
        %422 = vmatpush2.bf16.msra.mxu0 %v371
        %423 = vmatprep.mubr.bf16.mxu0 %v383
        %424 = vmatmul.mubr.bf16.gmra.mxu0 %v318
        %v425 = vpop.f32.mrf.mxu0
        %v426 = vadd.f32 0.0, %v425
        %v427 = vpop.f32.mrf.mxu0
        %v428 = vpop.f32.mrf.mxu0
        %v429 = vadd.f32 0.0, %v428
        %v430 = vpop.f32.mrf.mxu0
        %431 = vmatprep.mubr.bf16.mxu0 %v386
        %432 = vmatmul.mubr.bf16.gmra.mxu0 %v320
        %v433 = vpop.f32.mrf.mxu0
        %v434 = vadd.f32 0.0, %v433
        %v435 = vpop.f32.mrf.mxu0
        %v436 = vpop.f32.mrf.mxu0
        %v437 = vadd.f32 0.0, %v436
        %v438 = vpop.f32.mrf.mxu0
        %439 = vmatprep.mubr.bf16.mxu0 %v389
        %440 = vmatmul.mubr.bf16.gmra.mxu0 %v322
        %v441 = vpop.f32.mrf.mxu0
        %v442 = vadd.f32 0.0, %v441
        %v443 = vpop.f32.mrf.mxu0
        %v444 = vpop.f32.mrf.mxu0
        %v445 = vadd.f32 0.0, %v444
        %v446 = vpop.f32.mrf.mxu0
        %447 = vdwg.mxu0
        %s448 = scalar_lea.vmem %s249, 48 [#allocation2]
        %v449 = vld [vmem:[%s448] sm:$0xff]
        %v450 = vld [vmem:[%s448 + $0x8] sm:$0xff]
        %v451 = vld [vmem:[%s448 + $0x10] sm:$0xff]
        %v452 = vld [vmem:[%s448 + $0x18] sm:$0xff]
        %v453 = vld [vmem:[%s448 + $0x20] sm:$0xff]
        %v454 = vld [vmem:[%s448 + $0x28] sm:$0xff]
        %v461 = vunpack.c.l.b16 %v449
        %v462 = vunpack.c.h.b16 %v449
        %v463 = vunpack.c.l.b16 %v450
        %v464 = vunpack.c.h.b16 %v450
        %v465 = vunpack.c.l.b16 %v451
        %v466 = vunpack.c.h.b16 %v451
        %v467 = vunpack.c.l.b16 %v452
        %v468 = vunpack.c.h.b16 %v452
        %v469 = vunpack.c.l.b16 %v453
        %v470 = vunpack.c.h.b16 %v453
        %v471 = vunpack.c.l.b16 %v454
        %v472 = vunpack.c.h.b16 %v454
        %v473 = vpack.c.b16 %v463, %v461
        %v474 = vpack.c.b16 %v464, %v462
        %v475 = vpack.c.b16 %v467, %v465
        %v476 = vpack.c.b16 %v468, %v466
        %v477 = vpack.c.b16 %v471, %v469
        %v478 = vpack.c.b16 %v472, %v470
        %v483 = vsel %vm381, %v474, 0
        %v486 = vsel %vm381, %v476, 0
        %v489 = vsel %vm381, %v478, 0
        %491 = vmatprep.subr.bf16.mxu0 0
        %492 = vmatpush1.bf16.msra.mxu0 %v370
        %493 = vmatprep.subr.bf16.mxu0 0
        %494 = vmatpush1.bf16.msra.mxu0 %v369
        %495 = vmatprep.subr.bf16.mxu0 0
        %496 = vmatpush1.bf16.msra.mxu0 %v368
        %497 = vmatprep.subr.bf16.mxu0 0
        %498 = vmatpush1.bf16.msra.mxu0 %v367
        %499 = vmatprep.subr.bf16.mxu0 0
        %500 = vmatpush1.bf16.msra.mxu0 %v366
        %501 = vmatprep.subr.bf16.mxu0 0
        %502 = vmatpush1.bf16.msra.mxu0 %v365
        %503 = vmatprep.subr.bf16.mxu0 0
        %504 = vmatpush1.bf16.msra.mxu0 %v364
        %505 = vmatprep.subr.bf16.mxu0 0
        %506 = vmatpush1.bf16.msra.mxu0 %v363
        %507 = vmatprep.subr.bf16.mxu0 0
        %508 = vmatpush2.bf16.msra.mxu0 0
        %509 = vmatprep.subr.bf16.mxu0 0
        %510 = vmatpush2.bf16.msra.mxu0 0
        %511 = vmatprep.subr.bf16.mxu0 0
        %512 = vmatpush2.bf16.msra.mxu0 0
        %513 = vmatprep.subr.bf16.mxu0 0
        %514 = vmatpush2.bf16.msra.mxu0 0
        %515 = vmatprep.subr.bf16.mxu0 0
        %516 = vmatpush2.bf16.msra.mxu0 0
        %517 = vmatprep.subr.bf16.mxu0 0
        %518 = vmatpush2.bf16.msra.mxu0 0
        %519 = vmatprep.subr.bf16.mxu0 0
        %520 = vmatpush2.bf16.msra.mxu0 0
        %521 = vmatprep.subr.bf16.mxu0 0
        %522 = vmatpush2.bf16.msra.mxu0 %v371
        %523 = vmatprep.mubr.bf16.mxu0 %v483
        %524 = vmatmul.mubr.bf16.gmra.mxu0 %v473
        %v525 = vpop.f32.mrf.mxu0
        %v526 = vadd.f32 0.0, %v525
        %v527 = vpop.f32.mrf.mxu0
        %v528 = vpop.f32.mrf.mxu0
        %v529 = vadd.f32 0.0, %v528
        %v530 = vpop.f32.mrf.mxu0
        %531 = vmatprep.mubr.bf16.mxu0 %v486
        %532 = vmatmul.mubr.bf16.gmra.mxu0 %v475
        %v533 = vpop.f32.mrf.mxu0
        %v534 = vadd.f32 0.0, %v533
        %v535 = vpop.f32.mrf.mxu0
        %v536 = vpop.f32.mrf.mxu0
        %v537 = vadd.f32 0.0, %v536
        %v538 = vpop.f32.mrf.mxu0
        %539 = vmatprep.mubr.bf16.mxu0 %v489
        %540 = vmatmul.mubr.bf16.gmra.mxu0 %v477
        %v541 = vpop.f32.mrf.mxu0
        %v542 = vadd.f32 0.0, %v541
        %v543 = vpop.f32.mrf.mxu0
        %v544 = vpop.f32.mrf.mxu0
        %v545 = vadd.f32 0.0, %v544
        %v546 = vpop.f32.mrf.mxu0
        %547 = vdwg.mxu0
        %v548 = vmax.f32 %v426, %v526
        %v549 = vmax.f32 %v429, %v529
        %v550 = vmax.f32 %v434, %v534
        %v551 = vmax.f32 %v437, %v537
        %v552 = vmax.f32 %v442, %v542
        %v553 = vmax.f32 %v445, %v545
        %s554 = scalar_lea.vmem %s249, 96 [#allocation2]
        %v555 = vld [vmem:[%s554] sm:$0xff]
        %v556 = vld [vmem:[%s554 + $0x8] sm:$0xff]
        %v557 = vld [vmem:[%s554 + $0x10] sm:$0xff]
        %v558 = vld [vmem:[%s554 + $0x18] sm:$0xff]
        %v559 = vld [vmem:[%s554 + $0x20] sm:$0xff]
        %v560 = vld [vmem:[%s554 + $0x28] sm:$0xff]
        %v567 = vunpack.c.l.b16 %v555
        %v568 = vunpack.c.h.b16 %v555
        %v569 = vunpack.c.l.b16 %v556
        %v570 = vunpack.c.h.b16 %v556
        %v571 = vunpack.c.l.b16 %v557
        %v572 = vunpack.c.h.b16 %v557
        %v573 = vunpack.c.l.b16 %v558
        %v574 = vunpack.c.h.b16 %v558
        %v575 = vunpack.c.l.b16 %v559
        %v576 = vunpack.c.h.b16 %v559
        %v577 = vunpack.c.l.b16 %v560
        %v578 = vunpack.c.h.b16 %v560
        %v579 = vpack.c.b16 %v569, %v567
        %v580 = vpack.c.b16 %v570, %v568
        %v581 = vpack.c.b16 %v573, %v571
        %v582 = vpack.c.b16 %v574, %v572
        %v583 = vpack.c.b16 %v577, %v575
        %v584 = vpack.c.b16 %v578, %v576
        %v589 = vsel %vm381, %v580, 0
        %v592 = vsel %vm381, %v582, 0
        %v595 = vsel %vm381, %v584, 0
        %597 = vmatprep.subr.bf16.mxu0 0
        %598 = vmatpush1.bf16.msra.mxu0 %v370
        %599 = vmatprep.subr.bf16.mxu0 0
        %600 = vmatpush1.bf16.msra.mxu0 %v369
        %601 = vmatprep.subr.bf16.mxu0 0
        %602 = vmatpush1.bf16.msra.mxu0 %v368
        %603 = vmatprep.subr.bf16.mxu0 0
        %604 = vmatpush1.bf16.msra.mxu0 %v367
        %605 = vmatprep.subr.bf16.mxu0 0
        %606 = vmatpush1.bf16.msra.mxu0 %v366
        %607 = vmatprep.subr.bf16.mxu0 0
        %608 = vmatpush1.bf16.msra.mxu0 %v365
        %609 = vmatprep.subr.bf16.mxu0 0
        %610 = vmatpush1.bf16.msra.mxu0 %v364
        %611 = vmatprep.subr.bf16.mxu0 0
        %612 = vmatpush1.bf16.msra.mxu0 %v363
        %613 = vmatprep.subr.bf16.mxu0 0
        %614 = vmatpush2.bf16.msra.mxu0 0
        %615 = vmatprep.subr.bf16.mxu0 0
        %616 = vmatpush2.bf16.msra.mxu0 0
        %617 = vmatprep.subr.bf16.mxu0 0
        %618 = vmatpush2.bf16.msra.mxu0 0
        %619 = vmatprep.subr.bf16.mxu0 0
        %620 = vmatpush2.bf16.msra.mxu0 0
        %621 = vmatprep.subr.bf16.mxu0 0
        %622 = vmatpush2.bf16.msra.mxu0 0
        %623 = vmatprep.subr.bf16.mxu0 0
        %624 = vmatpush2.bf16.msra.mxu0 0
        %625 = vmatprep.subr.bf16.mxu0 0
        %626 = vmatpush2.bf16.msra.mxu0 0
        %627 = vmatprep.subr.bf16.mxu0 0
        %628 = vmatpush2.bf16.msra.mxu0 %v371
        %629 = vmatprep.mubr.bf16.mxu0 %v589
        %630 = vmatmul.mubr.bf16.gmra.mxu0 %v579
        %v631 = vpop.f32.mrf.mxu0
        %v632 = vadd.f32 0.0, %v631
        %v633 = vpop.f32.mrf.mxu0
        %v634 = vpop.f32.mrf.mxu0
        %v635 = vadd.f32 0.0, %v634
        %v636 = vpop.f32.mrf.mxu0
        %637 = vmatprep.mubr.bf16.mxu0 %v592
        %638 = vmatmul.mubr.bf16.gmra.mxu0 %v581
        %v639 = vpop.f32.mrf.mxu0
        %v640 = vadd.f32 0.0, %v639
        %v641 = vpop.f32.mrf.mxu0
        %v642 = vpop.f32.mrf.mxu0
        %v643 = vadd.f32 0.0, %v642
        %v644 = vpop.f32.mrf.mxu0
        %645 = vmatprep.mubr.bf16.mxu0 %v595
        %646 = vmatmul.mubr.bf16.gmra.mxu0 %v583
        %v647 = vpop.f32.mrf.mxu0
        %v648 = vadd.f32 0.0, %v647
        %v649 = vpop.f32.mrf.mxu0
        %v650 = vpop.f32.mrf.mxu0
        %v651 = vadd.f32 0.0, %v650
        %v652 = vpop.f32.mrf.mxu0
        %653 = vdwg.mxu0
        %v654 = vmax.f32 %v548, %v632
        %v655 = vmax.f32 %v549, %v635
        %v656 = vmax.f32 %v550, %v640
        %v657 = vmax.f32 %v551, %v643
        %v658 = vmax.f32 %v552, %v648
        %v659 = vmax.f32 %v553, %v651
        %s660 = scalar_lea.vmem %s249, 144 [#allocation2]
        %v661 = vld [vmem:[%s660] sm:$0xff]
        %v662 = vld [vmem:[%s660 + $0x8] sm:$0xff]
        %v663 = vld [vmem:[%s660 + $0x10] sm:$0xff]
        %v664 = vld [vmem:[%s660 + $0x18] sm:$0xff]
        %v665 = vld [vmem:[%s660 + $0x20] sm:$0xff]
        %v666 = vld [vmem:[%s660 + $0x28] sm:$0xff]
        %v673 = vunpack.c.l.b16 %v661
        %v674 = vunpack.c.h.b16 %v661
        %v675 = vunpack.c.l.b16 %v662
        %v676 = vunpack.c.h.b16 %v662
        %v677 = vunpack.c.l.b16 %v663
        %v678 = vunpack.c.h.b16 %v663
        %v679 = vunpack.c.l.b16 %v664
        %v680 = vunpack.c.h.b16 %v664
        %v681 = vunpack.c.l.b16 %v665
        %v682 = vunpack.c.h.b16 %v665
        %v683 = vunpack.c.l.b16 %v666
        %v684 = vunpack.c.h.b16 %v666
        %v685 = vpack.c.b16 %v675, %v673
        %v686 = vpack.c.b16 %v676, %v674
        %v687 = vpack.c.b16 %v679, %v677
        %v688 = vpack.c.b16 %v680, %v678
        %v689 = vpack.c.b16 %v683, %v681
        %v690 = vpack.c.b16 %v684, %v682
        %v695 = vsel %vm381, %v686, 0
        %v698 = vsel %vm381, %v688, 0
        %v701 = vsel %vm381, %v690, 0
        %703 = vmatprep.subr.bf16.mxu0 0
        %704 = vmatpush1.bf16.msra.mxu0 %v370
        %705 = vmatprep.subr.bf16.mxu0 0
        %706 = vmatpush1.bf16.msra.mxu0 %v369
        %707 = vmatprep.subr.bf16.mxu0 0
        %708 = vmatpush1.bf16.msra.mxu0 %v368
        %709 = vmatprep.subr.bf16.mxu0 0
        %710 = vmatpush1.bf16.msra.mxu0 %v367
        %711 = vmatprep.subr.bf16.mxu0 0
        %712 = vmatpush1.bf16.msra.mxu0 %v366
        %713 = vmatprep.subr.bf16.mxu0 0
        %714 = vmatpush1.bf16.msra.mxu0 %v365
        %715 = vmatprep.subr.bf16.mxu0 0
        %716 = vmatpush1.bf16.msra.mxu0 %v364
        %717 = vmatprep.subr.bf16.mxu0 0
        %718 = vmatpush1.bf16.msra.mxu0 %v363
        %719 = vmatprep.subr.bf16.mxu0 0
        %720 = vmatpush2.bf16.msra.mxu0 0
        %721 = vmatprep.subr.bf16.mxu0 0
        %722 = vmatpush2.bf16.msra.mxu0 0
        %723 = vmatprep.subr.bf16.mxu0 0
        %724 = vmatpush2.bf16.msra.mxu0 0
        %725 = vmatprep.subr.bf16.mxu0 0
        %726 = vmatpush2.bf16.msra.mxu0 0
        %727 = vmatprep.subr.bf16.mxu0 0
        %728 = vmatpush2.bf16.msra.mxu0 0
        %729 = vmatprep.subr.bf16.mxu0 0
        %730 = vmatpush2.bf16.msra.mxu0 0
        %731 = vmatprep.subr.bf16.mxu0 0
        %732 = vmatpush2.bf16.msra.mxu0 0
        %733 = vmatprep.subr.bf16.mxu0 0
        %734 = vmatpush2.bf16.msra.mxu0 %v371
        %735 = vmatprep.mubr.bf16.mxu0 %v695
        %736 = vmatmul.mubr.bf16.gmra.mxu0 %v685
        %v737 = vpop.f32.mrf.mxu0
        %v738 = vadd.f32 0.0, %v737
        %v739 = vpop.f32.mrf.mxu0
        %v740 = vpop.f32.mrf.mxu0
        %v741 = vadd.f32 0.0, %v740
        %v742 = vpop.f32.mrf.mxu0
        %743 = vmatprep.mubr.bf16.mxu0 %v698
        %744 = vmatmul.mubr.bf16.gmra.mxu0 %v687
        %v745 = vpop.f32.mrf.mxu0
        %v746 = vadd.f32 0.0, %v745
        %v747 = vpop.f32.mrf.mxu0
        %v748 = vpop.f32.mrf.mxu0
        %v749 = vadd.f32 0.0, %v748
        %v750 = vpop.f32.mrf.mxu0
        %751 = vmatprep.mubr.bf16.mxu0 %v701
        %752 = vmatmul.mubr.bf16.gmra.mxu0 %v689
        %v753 = vpop.f32.mrf.mxu0
        %v754 = vadd.f32 0.0, %v753
        %v755 = vpop.f32.mrf.mxu0
        %v756 = vpop.f32.mrf.mxu0
        %v757 = vadd.f32 0.0, %v756
        %v758 = vpop.f32.mrf.mxu0
        %759 = vdwg.mxu0
        %v760 = vmax.f32 %v654, %v738
        %v761 = vmax.f32 %v655, %v741
        %v762 = vmax.f32 %v656, %v746
        %v763 = vmax.f32 %v657, %v749
        %v764 = vmax.f32 %v658, %v754
        %v765 = vmax.f32 %v659, %v757
        %v766 = vmax.f32 %v760, 0.0
        %v767 = vmax.f32 %v761, 0.0
        %v768 = vmax.f32 %v762, 0.0
        %v769 = vmax.f32 %v763, 0.0
        %v770 = vmax.f32 %v764, 0.0
        %v771 = vmax.f32 %v765, 0.0
        %v772 = vpack.c.bf16 %v767, %v766
        %v773 = vpack.c.bf16 %v769, %v768
        %v774 = vpack.c.bf16 %v771, %v770
        %v778 = vunpack.c.l.b16 %v772
        %v779 = vunpack.c.h.b16 %v772
        %v780 = vunpack.c.l.b16 %v773
        %v781 = vunpack.c.h.b16 %v773
        %v782 = vunpack.c.l.b16 %v774
        %v783 = vunpack.c.h.b16 %v774
        %v784 = vpack.c.b16 %v778, %v778
        %v785 = vpack.c.b16 %v779, %v779
        %v786 = vpack.c.b16 %v780, %v780
        %v787 = vpack.c.b16 %v781, %v781
        %v788 = vpack.c.b16 %v782, %v782
        %v789 = vpack.c.b16 %v783, %v783
        %vm796 = vcmask 257024
        %797 = vst.msk [vmem:[%s273] sm:$0xf] %vm796, %v784
        %798 = vst.msk [vmem:[%s273 + $0x4] sm:$0xf] %vm796, %v785
        %799 = vst.msk [vmem:[%s273 + $0x8] sm:$0xf] %vm796, %v786
        %800 = vst.msk [vmem:[%s273 + $0xc] sm:$0xf] %vm796, %v787
        %801 = vst.msk [vmem:[%s273 + $0x10] sm:$0xf] %vm796, %v788
        %802 = vst.msk [vmem:[%s273 + $0x14] sm:$0xf] %vm796, %v789
        %s803 = smul.u32 6, %s13
        %p804 = scmp.lt.s32.totalorder %s803, 11
        %s805 = scalar_select %p804, %s803, 11
        %s806 = smul.addr %s805, 4
        %s807 = scalar_lea.vmem %s2, %s806
        // Predicated region
        $region67: #{cnn_net2_forward.4} parent=61 // pred_check
          %p808 = pneg %p78
        $region68: #{cnn_net2_forward.4} parent=61 // pred_check_branch
          %810 = sbr.rel (%p808) target = $region70
        $region69: #{cnn_net2_forward.4} parent=61 // pred_region
          %s811 = smul.u32 6, %s13
        $region70: #{cnn_net2_forward.4} parent=61 // pred_fallthru
          _
      $region62: #{cnn_net2_forward.4} parent=5 // pred_fallthru
        _
      %p812 = scmp.le.s32.totalorder 2, %s8
      // Predicated region
      $region71: #{cnn_net2_forward.4} parent=5 // pred_check
        %p813 = pneg %p812
      $region72: #{cnn_net2_forward.4} parent=5 // pred_check_branch
        %815 = sbr.rel (%p813) target = $region74
      $region73: #{cnn_net2_forward.4} parent=5 // pred_region
        %s816 = ssub.s32 %s8, 2
        // Predicated region
        $region75: #{cnn_net2_forward.4} parent=73 // pred_check
          %p817 = pneg %p84
        $region76: #{cnn_net2_forward.4} parent=73 // pred_check_branch
          %819 = sbr.rel (%p817) target = $region78
        $region77: #{cnn_net2_forward.4} parent=73 // pred_region
          %s820 = smul.u32 6, %s14
          %p821 = scmp.lt.s32.totalorder %s820, 11
          %s822 = scalar_select %p821, %s820, 11
          %s823 = smul.addr %s822, 4
          %s824 = scalar_lea.vmem %s2, %s823
        $region78: #{cnn_net2_forward.4} parent=73 // pred_fallthru
          _
      $region74: #{cnn_net2_forward.4} parent=5 // pred_fallthru
        _
    $region6: #{cnn_net2_forward.4} parent=1 // loop_footer
      %s12 = sadd.s32 1, %s8
    $region7: #{cnn_net2_forward.4} parent=1 // loop_footer_branch
      %7 = sbr.rel target = $region3
    $region8: #{cnn_net2_forward.4} parent=1 // loop_exit
      _

// kernel: cnn_net2_forward.5
$region0: #{cnn_net2_forward.5}
  #allocation0 [shape = 'u32[]', space=smem, size = 0x4, offset = 0x4, fixed_abs, tag = 'smem constant byte address 0x4 - core index']
  #allocation1 [shape = 'u32[144,128]{1,0:T(1,128)}', space=vmem, size = 0x12000, scoped, tag = 'internal scratch']
  %s0 = inlined_call_operand.vmem [shape: bf16[4,72,288], index: 0, kind: input, shape index: {}]
  %s1 = inlined_call_operand.vmem [shape: bf16[288,64], index: 1, kind: input, shape index: {}]
  %s2 = inlined_call_operand.vmem [shape: bf16[9,64,64], index: 2, kind: input, shape index: {}]
  %s3 = inlined_call_operand.vmem [shape: f32[1,64], index: 3, kind: input, shape index: {}]
  %s4 = inlined_call_operand.vmem [shape: bf16[64,10], index: 4, kind: input, shape index: {}]
  %s5 = inlined_call_operand.vmem [shape: f32[1,10], index: 5, kind: input, shape index: {}]
  %s6 = inlined_call_operand.vmem [shape: f32[8,10], index: 6, kind: output, shape index: {}]
  %s7 = sld [smem:[#allocation0]]
  $region34: #{cnn_net2_forward.5} parent=0
    _
  %s9 = ssub.s32 1, %s7
  %s10 = scalar_select 0, %s9, %s7
  // Predicated region
  $region2: #{cnn_net2_forward.5} parent=0 // pred_check
    _
  $region3: #{cnn_net2_forward.5} parent=0 // pred_check_branch
    %12 = sbr.rel (0) target = $region5
  $region4: #{cnn_net2_forward.5} parent=0 // pred_region
    _
  $region5: #{cnn_net2_forward.5} parent=0 // pred_fallthru
    _
  // Predicated region
  $region6: #{cnn_net2_forward.5} parent=0 // pred_check
    _
  $region7: #{cnn_net2_forward.5} parent=0 // pred_check_branch
    %14 = sbr.rel (0) target = $region9
  $region8: #{cnn_net2_forward.5} parent=0 // pred_region
    _
  $region9: #{cnn_net2_forward.5} parent=0 // pred_fallthru
    _
  // Predicated region
  $region10: #{cnn_net2_forward.5} parent=0 // pred_check
    _
  $region11: #{cnn_net2_forward.5} parent=0 // pred_check_branch
    %16 = sbr.rel (0) target = $region13
  $region12: #{cnn_net2_forward.5} parent=0 // pred_region
    _
  $region13: #{cnn_net2_forward.5} parent=0 // pred_fallthru
    _
  // Predicated region
  $region14: #{cnn_net2_forward.5} parent=0 // pred_check
    _
  $region15: #{cnn_net2_forward.5} parent=0 // pred_check_branch
    %18 = sbr.rel (0) target = $region17
  $region16: #{cnn_net2_forward.5} parent=0 // pred_region
    _
  $region17: #{cnn_net2_forward.5} parent=0 // pred_fallthru
    _
  // Predicated region
  $region18: #{cnn_net2_forward.5} parent=0 // pred_check
    _
  $region19: #{cnn_net2_forward.5} parent=0 // pred_check_branch
    %20 = sbr.rel (0) target = $region21
  $region20: #{cnn_net2_forward.5} parent=0 // pred_region
    _
  $region21: #{cnn_net2_forward.5} parent=0 // pred_fallthru
    _
  // Predicated region
  $region22: #{cnn_net2_forward.5} parent=0 // pred_check
    _
  $region23: #{cnn_net2_forward.5} parent=0 // pred_check_branch
    %22 = sbr.rel (0) target = $region25
  $region24: #{cnn_net2_forward.5} parent=0 // pred_region
    _
  $region25: #{cnn_net2_forward.5} parent=0 // pred_fallthru
    _
  %v24 = vld [vmem:[%s1] sm:$0xf]
  %v25 = vld [vmem:[%s1 + $0x4] sm:$0xf]
  %v26 = vld [vmem:[%s1 + $0x8] sm:$0xf]
  %v27 = vld [vmem:[%s1 + $0xc] sm:$0xf]
  %v28 = vld [vmem:[%s1 + $0x10] sm:$0xf]
  %v29 = vld [vmem:[%s1 + $0x14] sm:$0xf]
  %v30 = vld [vmem:[%s1 + $0x18] sm:$0xf]
  %v31 = vld [vmem:[%s1 + $0x1c] sm:$0xf]
  %v32 = vld [vmem:[%s1 + $0x20] sm:$0xf]
  %v33 = vld [vmem:[%s1 + $0x24] sm:$0xf]
  %v34 = vld [vmem:[%s1 + $0x28] sm:$0xf]
  %v35 = vld [vmem:[%s1 + $0x2c] sm:$0xf]
  %v36 = vld [vmem:[%s1 + $0x30] sm:$0xf]
  %v37 = vld [vmem:[%s1 + $0x34] sm:$0xf]
  %v38 = vld [vmem:[%s1 + $0x38] sm:$0xf]
  %v39 = vld [vmem:[%s1 + $0x3c] sm:$0xf]
  %v40 = vld [vmem:[%s1 + $0x40] sm:$0xf]
  %v41 = vld [vmem:[%s1 + $0x44] sm:$0xf]
  %v42 = vld [vmem:[%s1 + $0x48] sm:$0xf]
  %v43 = vld [vmem:[%s1 + $0x4c] sm:$0xf]
  %v44 = vld [vmem:[%s1 + $0x50] sm:$0xf]
  %v45 = vld [vmem:[%s1 + $0x54] sm:$0xf]
  %v46 = vld [vmem:[%s1 + $0x58] sm:$0xf]
  %v47 = vld [vmem:[%s1 + $0x5c] sm:$0xf]
  %v48 = vld [vmem:[%s1 + $0x60] sm:$0xf]
  %v49 = vld [vmem:[%s1 + $0x64] sm:$0xf]
  %v50 = vld [vmem:[%s1 + $0x68] sm:$0xf]
  %v51 = vld [vmem:[%s1 + $0x6c] sm:$0xf]
  %v52 = vld [vmem:[%s1 + $0x70] sm:$0xf]
  %v53 = vld [vmem:[%s1 + $0x74] sm:$0xf]
  %v54 = vld [vmem:[%s1 + $0x78] sm:$0xf]
  %v55 = vld [vmem:[%s1 + $0x7c] sm:$0xf]
  %v56 = vld [vmem:[%s1 + $0x80] sm:$0xf]
  %v57 = vld [vmem:[%s1 + $0x84] sm:$0xf]
  %v58 = vld [vmem:[%s1 + $0x88] sm:$0xf]
  %v59 = vld [vmem:[%s1 + $0x8c] sm:$0xf]
  %v60 = vld [vmem:[%s0] sm:$0xff]
  %v61 = vld [vmem:[%s0 + $0x8] sm:$0xf]
  %v62 = vld [vmem:[%s0 + $0xc] sm:$0xff]
  %v63 = vld [vmem:[%s0 + $0x14] sm:$0xf]
  %v64 = vld [vmem:[%s0 + $0x18] sm:$0xff]
  %v65 = vld [vmem:[%s0 + $0x20] sm:$0xf]
  %v66 = vld [vmem:[%s0 + $0x24] sm:$0xff]
  %v67 = vld [vmem:[%s0 + $0x2c] sm:$0xf]
  %v68 = vld [vmem:[%s0 + $0x30] sm:$0xff]
  %v69 = vld [vmem:[%s0 + $0x38] sm:$0xf]
  %v70 = vld [vmem:[%s0 + $0x3c] sm:$0xff]
  %v71 = vld [vmem:[%s0 + $0x44] sm:$0xf]
  %v72 = vld [vmem:[%s0 + $0x48] sm:$0xff]
  %v73 = vld [vmem:[%s0 + $0x50] sm:$0xf]
  %v74 = vld [vmem:[%s0 + $0x54] sm:$0xff]
  %v75 = vld [vmem:[%s0 + $0x5c] sm:$0xf]
  %v76 = vld [vmem:[%s0 + $0x60] sm:$0xff]
  %v77 = vld [vmem:[%s0 + $0x68] sm:$0xf]
  %v96 = vunpack.c.l.b16 %v60
  %v97 = vunpack.c.h.b16 %v60
  %v98 = vunpack.c.l.b16 %v61
  %v99 = vunpack.c.l.b16 %v62
  %v100 = vunpack.c.h.b16 %v62
  %v101 = vunpack.c.l.b16 %v63
  %v102 = vunpack.c.l.b16 %v64
  %v103 = vunpack.c.h.b16 %v64
  %v104 = vunpack.c.l.b16 %v65
  %v105 = vunpack.c.l.b16 %v66
  %v106 = vunpack.c.h.b16 %v66
  %v107 = vunpack.c.l.b16 %v67
  %v108 = vunpack.c.l.b16 %v68
  %v109 = vunpack.c.h.b16 %v68
  %v110 = vunpack.c.l.b16 %v69
  %v111 = vunpack.c.l.b16 %v70
  %v112 = vunpack.c.h.b16 %v70
  %v113 = vunpack.c.l.b16 %v71
  %v114 = vunpack.c.l.b16 %v72
  %v115 = vunpack.c.h.b16 %v72
  %v116 = vunpack.c.l.b16 %v73
  %v117 = vunpack.c.l.b16 %v74
  %v118 = vunpack.c.h.b16 %v74
  %v119 = vunpack.c.l.b16 %v75
  %v120 = vunpack.c.l.b16 %v76
  %v121 = vunpack.c.h.b16 %v76
  %v122 = vunpack.c.l.b16 %v77
  %v123 = vpack.c.b16 %v99, %v96
  %v124 = vpack.c.b16 %v100, %v97
  %v125 = vpack.c.b16 %v101, %v98
  %v126 = vpack.c.b16 %v105, %v102
  %v127 = vpack.c.b16 %v106, %v103
  %v128 = vpack.c.b16 %v107, %v104
  %v129 = vpack.c.b16 %v111, %v108
  %v130 = vpack.c.b16 %v112, %v109
  %v131 = vpack.c.b16 %v113, %v110
  %v132 = vpack.c.b16 %v117, %v114
  %v133 = vpack.c.b16 %v118, %v115
  %v134 = vpack.c.b16 %v119, %v116
  %v135 = vpack.c.b16 %v120, %v120
  %v136 = vpack.c.b16 %v121, %v121
  %v137 = vpack.c.b16 %v122, %v122
  %v184 = vunpack.c.l.b16 %v24
  %v185 = vunpack.c.l.b16 %v25
  %v186 = vunpack.c.l.b16 %v26
  %v187 = vunpack.c.l.b16 %v27
  %v188 = vunpack.c.l.b16 %v28
  %v189 = vunpack.c.l.b16 %v29
  %v190 = vunpack.c.l.b16 %v30
  %v191 = vunpack.c.l.b16 %v31
  %v192 = vunpack.c.l.b16 %v32
  %v193 = vunpack.c.l.b16 %v33
  %v194 = vunpack.c.l.b16 %v34
  %v195 = vunpack.c.l.b16 %v35
  %v196 = vunpack.c.l.b16 %v36
  %v197 = vunpack.c.l.b16 %v37
  %v198 = vunpack.c.l.b16 %v38
  %v199 = vunpack.c.l.b16 %v39
  %v200 = vunpack.c.l.b16 %v40
  %v201 = vunpack.c.l.b16 %v41
  %v202 = vunpack.c.l.b16 %v42
  %v203 = vunpack.c.l.b16 %v43
  %v204 = vunpack.c.l.b16 %v44
  %v205 = vunpack.c.l.b16 %v45
  %v206 = vunpack.c.l.b16 %v46
  %v207 = vunpack.c.l.b16 %v47
  %v208 = vunpack.c.l.b16 %v48
  %v209 = vunpack.c.l.b16 %v49
  %v210 = vunpack.c.l.b16 %v50
  %v211 = vunpack.c.l.b16 %v51
  %v212 = vunpack.c.l.b16 %v52
  %v213 = vunpack.c.l.b16 %v53
  %v214 = vunpack.c.l.b16 %v54
  %v215 = vunpack.c.l.b16 %v55
  %v216 = vunpack.c.l.b16 %v56
  %v217 = vunpack.c.l.b16 %v57
  %v218 = vunpack.c.l.b16 %v58
  %v219 = vunpack.c.l.b16 %v59
  %v220 = vpack.c.b16 %v185, %v184
  %v221 = vpack.c.b16 %v187, %v186
  %v222 = vpack.c.b16 %v189, %v188
  %v223 = vpack.c.b16 %v191, %v190
  %v224 = vpack.c.b16 %v193, %v192
  %v225 = vpack.c.b16 %v195, %v194
  %v226 = vpack.c.b16 %v197, %v196
  %v227 = vpack.c.b16 %v199, %v198
  %v228 = vpack.c.b16 %v201, %v200
  %v229 = vpack.c.b16 %v203, %v202
  %v230 = vpack.c.b16 %v205, %v204
  %v231 = vpack.c.b16 %v207, %v206
  %v232 = vpack.c.b16 %v209, %v208
  %v233 = vpack.c.b16 %v211, %v210
  %v234 = vpack.c.b16 %v213, %v212
  %v235 = vpack.c.b16 %v215, %v214
  %v236 = vpack.c.b16 %v217, %v216
  %v237 = vpack.c.b16 %v219, %v218
  %vm256 = vcmask 261120
  %v258 = vsel %vm256, %v125, 0
  %v261 = vsel %vm256, %v128, 0
  %v264 = vsel %vm256, %v131, 0
  %v267 = vsel %vm256, %v134, 0
  %v270 = vsel %vm256, %v137, 0
  %272 = vmatprep.subr.bf16.mxu0 0
  %273 = vmatpush1.bf16.msra.mxu0 %v227
  %274 = vmatprep.subr.bf16.mxu0 0
  %275 = vmatpush1.bf16.msra.mxu0 %v226
  %276 = vmatprep.subr.bf16.mxu0 0
  %277 = vmatpush1.bf16.msra.mxu0 %v225
  %278 = vmatprep.subr.bf16.mxu0 0
  %279 = vmatpush1.bf16.msra.mxu0 %v224
  %280 = vmatprep.subr.bf16.mxu0 0
  %281 = vmatpush1.bf16.msra.mxu0 %v223
  %282 = vmatprep.subr.bf16.mxu0 0
  %283 = vmatpush1.bf16.msra.mxu0 %v222
  %284 = vmatprep.subr.bf16.mxu0 0
  %285 = vmatpush1.bf16.msra.mxu0 %v221
  %286 = vmatprep.subr.bf16.mxu0 0
  %287 = vmatpush1.bf16.msra.mxu0 %v220
  %288 = vmatprep.subr.bf16.mxu0 0
  %289 = vmatpush2.bf16.msra.mxu0 %v235
  %290 = vmatprep.subr.bf16.mxu0 0
  %291 = vmatpush2.bf16.msra.mxu0 %v234
  %292 = vmatprep.subr.bf16.mxu0 0
  %293 = vmatpush2.bf16.msra.mxu0 %v233
  %294 = vmatprep.subr.bf16.mxu0 0
  %295 = vmatpush2.bf16.msra.mxu0 %v232
  %296 = vmatprep.subr.bf16.mxu0 0
  %297 = vmatpush2.bf16.msra.mxu0 %v231
  %298 = vmatprep.subr.bf16.mxu0 0
  %299 = vmatpush2.bf16.msra.mxu0 %v230
  %300 = vmatprep.subr.bf16.mxu0 0
  %301 = vmatpush2.bf16.msra.mxu0 %v229
  %302 = vmatprep.subr.bf16.mxu0 0
  %303 = vmatpush2.bf16.msra.mxu0 %v228
  %304 = vmatprep.mubr.bf16.mxu0 %v124
  %305 = vmatmul.mubr.bf16.gmra.mxu0 %v123
  %v306 = vpop.f32.mrf.mxu0
  %v307 = vadd.f32 0.0, %v306
  %v308 = vpop.f32.mrf.mxu0
  %v309 = vpop.f32.mrf.mxu0
  %v310 = vadd.f32 0.0, %v309
  %v311 = vpop.f32.mrf.mxu0
  %312 = vmatprep.mubr.bf16.mxu0 %v127
  %313 = vmatmul.mubr.bf16.gmra.mxu0 %v126
  %v314 = vpop.f32.mrf.mxu0
  %v315 = vadd.f32 0.0, %v314
  %v316 = vpop.f32.mrf.mxu0
  %v317 = vpop.f32.mrf.mxu0
  %v318 = vadd.f32 0.0, %v317
  %v319 = vpop.f32.mrf.mxu0
  %320 = vmatprep.mubr.bf16.mxu0 %v130
  %321 = vmatmul.mubr.bf16.gmra.mxu0 %v129
  %v322 = vpop.f32.mrf.mxu0
  %v323 = vadd.f32 0.0, %v322
  %v324 = vpop.f32.mrf.mxu0
  %v325 = vpop.f32.mrf.mxu0
  %v326 = vadd.f32 0.0, %v325
  %v327 = vpop.f32.mrf.mxu0
  %328 = vmatprep.mubr.bf16.mxu0 %v133
  %329 = vmatmul.mubr.bf16.gmra.mxu0 %v132
  %v330 = vpop.f32.mrf.mxu0
  %v331 = vadd.f32 0.0, %v330
  %v332 = vpop.f32.mrf.mxu0
  %v333 = vpop.f32.mrf.mxu0
  %v334 = vadd.f32 0.0, %v333
  %v335 = vpop.f32.mrf.mxu0
  %336 = vmatprep.mubr.bf16.mxu0 %v136
  %337 = vmatmul.mubr.bf16.gmra.mxu0 %v135
  %v338 = vpop.f32.mrf.mxu0
  %v339 = vadd.f32 0.0, %v338
  %v340 = vpop.f32.mrf.mxu0
  %v341 = vpop.f32.mrf.mxu0
  %v342 = vpop.f32.mrf.mxu0
  %343 = vdwg.mxu0
  %344 = vmatprep.subr.bf16.mxu0 0
  %345 = vmatpush1.bf16.msra.mxu0 0
  %346 = vmatprep.subr.bf16.mxu0 0
  %347 = vmatpush1.bf16.msra.mxu0 0
  %348 = vmatprep.subr.bf16.mxu0 0
  %349 = vmatpush1.bf16.msra.mxu0 0
  %350 = vmatprep.subr.bf16.mxu0 0
  %351 = vmatpush1.bf16.msra.mxu0 0
  %352 = vmatprep.subr.bf16.mxu0 0
  %353 = vmatpush1.bf16.msra.mxu0 0
  %354 = vmatprep.subr.bf16.mxu0 0
  %355 = vmatpush1.bf16.msra.mxu0 0
  %356 = vmatprep.subr.bf16.mxu0 0
  %357 = vmatpush1.bf16.msra.mxu0 %v237
  %358 = vmatprep.subr.bf16.mxu0 0
  %359 = vmatpush1.bf16.msra.mxu0 %v236
  %360 = vmatprep.subr.bf16.mxu0 0
  %361 = vmatpush2.bf16.msra.mxu0 0
  %362 = vmatprep.subr.bf16.mxu0 0
  %363 = vmatpush2.bf16.msra.mxu0 0
  %364 = vmatprep.subr.bf16.mxu0 0
  %365 = vmatpush2.bf16.msra.mxu0 0
  %366 = vmatprep.subr.bf16.mxu0 0
  %367 = vmatpush2.bf16.msra.mxu0 0
  %368 = vmatprep.subr.bf16.mxu0 0
  %369 = vmatpush2.bf16.msra.mxu0 0
  %370 = vmatprep.subr.bf16.mxu0 0
  %371 = vmatpush2.bf16.msra.mxu0 0
  %372 = vmatprep.subr.bf16.mxu0 0
  %373 = vmatpush2.bf16.msra.mxu0 0
  %374 = vmatprep.subr.bf16.mxu0 0
  %375 = vmatpush2.bf16.msra.mxu0 0
  %376 = vmatprep.mubr.bf16.mxu0 0
  %377 = vmatmul.mubr.bf16.gmra.mxu0 %v258
  %v378 = vpop.f32.mrf.mxu0
  %v379 = vadd.f32 %v307, %v378
  %v380 = vpop.f32.mrf.mxu0
  %v381 = vpop.f32.mrf.mxu0
  %v382 = vadd.f32 %v310, %v381
  %v383 = vpop.f32.mrf.mxu0
  %384 = vmatprep.mubr.bf16.mxu0 0
  %385 = vmatmul.mubr.bf16.gmra.mxu0 %v261
  %v386 = vpop.f32.mrf.mxu0
  %v387 = vadd.f32 %v315, %v386
  %v388 = vpop.f32.mrf.mxu0
  %v389 = vpop.f32.mrf.mxu0
  %v390 = vadd.f32 %v318, %v389
  %v391 = vpop.f32.mrf.mxu0
  %392 = vmatprep.mubr.bf16.mxu0 0
  %393 = vmatmul.mubr.bf16.gmra.mxu0 %v264
  %v394 = vpop.f32.mrf.mxu0
  %v395 = vadd.f32 %v323, %v394
  %v396 = vpop.f32.mrf.mxu0
  %v397 = vpop.f32.mrf.mxu0
  %v398 = vadd.f32 %v326, %v397
  %v399 = vpop.f32.mrf.mxu0
  %400 = vmatprep.mubr.bf16.mxu0 0
  %401 = vmatmul.mubr.bf16.gmra.mxu0 %v267
  %v402 = vpop.f32.mrf.mxu0
  %v403 = vadd.f32 %v331, %v402
  %v404 = vpop.f32.mrf.mxu0
  %v405 = vpop.f32.mrf.mxu0
  %v406 = vadd.f32 %v334, %v405
  %v407 = vpop.f32.mrf.mxu0
  %408 = vmatprep.mubr.bf16.mxu0 0
  %409 = vmatmul.mubr.bf16.gmra.mxu0 %v270
  %v410 = vpop.f32.mrf.mxu0
  %v411 = vadd.f32 %v339, %v410
  %v412 = vpop.f32.mrf.mxu0
  %v413 = vpop.f32.mrf.mxu0
  %v414 = vpop.f32.mrf.mxu0
  %415 = vdwg.mxu0
  %s416 = scalar_lea.vmem %s0, 108
  %v417 = vld [vmem:[%s416] sm:$0xff]
  %v418 = vld [vmem:[%s416 + $0x8] sm:$0xf]
  %v419 = vld [vmem:[%s416 + $0xc] sm:$0xff]
  %v420 = vld [vmem:[%s416 + $0x14] sm:$0xf]
  %v421 = vld [vmem:[%s416 + $0x18] sm:$0xff]
  %v422 = vld [vmem:[%s416 + $0x20] sm:$0xf]
  %v423 = vld [vmem:[%s416 + $0x24] sm:$0xff]
  %v424 = vld [vmem:[%s416 + $0x2c] sm:$0xf]
  %v425 = vld [vmem:[%s416 + $0x30] sm:$0xff]
  %v426 = vld [vmem:[%s416 + $0x38] sm:$0xf]
  %v427 = vld [vmem:[%s416 + $0x3c] sm:$0xff]
  %v428 = vld [vmem:[%s416 + $0x44] sm:$0xf]
  %v429 = vld [vmem:[%s416 + $0x48] sm:$0xff]
  %v430 = vld [vmem:[%s416 + $0x50] sm:$0xf]
  %v431 = vld [vmem:[%s416 + $0x54] sm:$0xff]
  %v432 = vld [vmem:[%s416 + $0x5c] sm:$0xf]
  %v433 = vld [vmem:[%s416 + $0x60] sm:$0xff]
  %v434 = vld [vmem:[%s416 + $0x68] sm:$0xf]
  %v453 = vunpack.c.l.b16 %v417
  %v454 = vunpack.c.h.b16 %v417
  %v455 = vunpack.c.l.b16 %v418
  %v456 = vunpack.c.l.b16 %v419
  %v457 = vunpack.c.h.b16 %v419
  %v458 = vunpack.c.l.b16 %v420
  %v459 = vunpack.c.l.b16 %v421
  %v460 = vunpack.c.h.b16 %v421
  %v461 = vunpack.c.l.b16 %v422
  %v462 = vunpack.c.l.b16 %v423
  %v463 = vunpack.c.h.b16 %v423
  %v464 = vunpack.c.l.b16 %v424
  %v465 = vunpack.c.l.b16 %v425
  %v466 = vunpack.c.h.b16 %v425
  %v467 = vunpack.c.l.b16 %v426
  %v468 = vunpack.c.l.b16 %v427
  %v469 = vunpack.c.h.b16 %v427
  %v470 = vunpack.c.l.b16 %v428
  %v471 = vunpack.c.l.b16 %v429
  %v472 = vunpack.c.h.b16 %v429
  %v473 = vunpack.c.l.b16 %v430
  %v474 = vunpack.c.l.b16 %v431
  %v475 = vunpack.c.h.b16 %v431
  %v476 = vunpack.c.l.b16 %v432
  %v477 = vunpack.c.l.b16 %v433
  %v478 = vunpack.c.h.b16 %v433
  %v479 = vunpack.c.l.b16 %v434
  %v480 = vpack.c.b16 %v456, %v453
  %v481 = vpack.c.b16 %v457, %v454
  %v482 = vpack.c.b16 %v458, %v455
  %v483 = vpack.c.b16 %v462, %v459
  %v484 = vpack.c.b16 %v463, %v460
  %v485 = vpack.c.b16 %v464, %v461
  %v486 = vpack.c.b16 %v468, %v465
  %v487 = vpack.c.b16 %v469, %v466
  %v488 = vpack.c.b16 %v470, %v467
  %v489 = vpack.c.b16 %v474, %v471
  %v490 = vpack.c.b16 %v475, %v472
  %v491 = vpack.c.b16 %v476, %v473
  %v492 = vpack.c.b16 %v477, %v477
  %v493 = vpack.c.b16 %v478, %v478
  %v494 = vpack.c.b16 %v479, %v479
  %v506 = vsel %vm256, %v482, 0
  %v509 = vsel %vm256, %v485, 0
  %v512 = vsel %vm256, %v488, 0
  %v515 = vsel %vm256, %v491, 0
  %v518 = vsel %vm256, %v494, 0
  %520 = vmatprep.subr.bf16.mxu0 0
  %521 = vmatpush1.bf16.msra.mxu0 %v227
  %522 = vmatprep.subr.bf16.mxu0 0
  %523 = vmatpush1.bf16.msra.mxu0 %v226
  %524 = vmatprep.subr.bf16.mxu0 0
  %525 = vmatpush1.bf16.msra.mxu0 %v225
  %526 = vmatprep.subr.bf16.mxu0 0
  %527 = vmatpush1.bf16.msra.mxu0 %v224
  %528 = vmatprep.subr.bf16.mxu0 0
  %529 = vmatpush1.bf16.msra.mxu0 %v223
  %530 = vmatprep.subr.bf16.mxu0 0
  %531 = vmatpush1.bf16.msra.mxu0 %v222
  %532 = vmatprep.subr.bf16.mxu0 0
  %533 = vmatpush1.bf16.msra.mxu0 %v221
  %534 = vmatprep.subr.bf16.mxu0 0
  %535 = vmatpush1.bf16.msra.mxu0 %v220
  %536 = vmatprep.subr.bf16.mxu0 0
  %537 = vmatpush2.bf16.msra.mxu0 %v235
  %538 = vmatprep.subr.bf16.mxu0 0
  %539 = vmatpush2.bf16.msra.mxu0 %v234
  %540 = vmatprep.subr.bf16.mxu0 0
  %541 = vmatpush2.bf16.msra.mxu0 %v233
  %542 = vmatprep.subr.bf16.mxu0 0
  %543 = vmatpush2.bf16.msra.mxu0 %v232
  %544 = vmatprep.subr.bf16.mxu0 0
  %545 = vmatpush2.bf16.msra.mxu0 %v231
  %546 = vmatprep.subr.bf16.mxu0 0
  %547 = vmatpush2.bf16.msra.mxu0 %v230
  %548 = vmatprep.subr.bf16.mxu0 0
  %549 = vmatpush2.bf16.msra.mxu0 %v229
  %550 = vmatprep.subr.bf16.mxu0 0
  %551 = vmatpush2.bf16.msra.mxu0 %v228
  %552 = vmatprep.mubr.bf16.mxu0 %v481
  %553 = vmatmul.mubr.bf16.gmra.mxu0 %v480
  %v554 = vpop.f32.mrf.mxu0
  %v555 = vadd.f32 0.0, %v554
  %v556 = vpop.f32.mrf.mxu0
  %v557 = vpop.f32.mrf.mxu0
  %v558 = vadd.f32 0.0, %v557
  %v559 = vpop.f32.mrf.mxu0
  %560 = vmatprep.mubr.bf16.mxu0 %v484
  %561 = vmatmul.mubr.bf16.gmra.mxu0 %v483
  %v562 = vpop.f32.mrf.mxu0
  %v563 = vadd.f32 0.0, %v562
  %v564 = vpop.f32.mrf.mxu0
  %v565 = vpop.f32.mrf.mxu0
  %v566 = vadd.f32 0.0, %v565
  %v567 = vpop.f32.mrf.mxu0
  %568 = vmatprep.mubr.bf16.mxu0 %v487
  %569 = vmatmul.mubr.bf16.gmra.mxu0 %v486
  %v570 = vpop.f32.mrf.mxu0
  %v571 = vadd.f32 0.0, %v570
  %v572 = vpop.f32.mrf.mxu0
  %v573 = vpop.f32.mrf.mxu0
  %v574 = vadd.f32 0.0, %v573
  %v575 = vpop.f32.mrf.mxu0
  %576 = vmatprep.mubr.bf16.mxu0 %v490
  %577 = vmatmul.mubr.bf16.gmra.mxu0 %v489
  %v578 = vpop.f32.mrf.mxu0
  %v579 = vadd.f32 0.0, %v578
  %v580 = vpop.f32.mrf.mxu0
  %v581 = vpop.f32.mrf.mxu0
  %v582 = vadd.f32 0.0, %v581
  %v583 = vpop.f32.mrf.mxu0
  %584 = vmatprep.mubr.bf16.mxu0 %v493
  %585 = vmatmul.mubr.bf16.gmra.mxu0 %v492
  %v586 = vpop.f32.mrf.mxu0
  %v587 = vadd.f32 0.0, %v586
  %v588 = vpop.f32.mrf.mxu0
  %v589 = vpop.f32.mrf.mxu0
  %v590 = vpop.f32.mrf.mxu0
  %591 = vdwg.mxu0
  %592 = vmatprep.subr.bf16.mxu0 0
  %593 = vmatpush1.bf16.msra.mxu0 0
  %594 = vmatprep.subr.bf16.mxu0 0
  %595 = vmatpush1.bf16.msra.mxu0 0
  %596 = vmatprep.subr.bf16.mxu0 0
  %597 = vmatpush1.bf16.msra.mxu0 0
  %598 = vmatprep.subr.bf16.mxu0 0
  %599 = vmatpush1.bf16.msra.mxu0 0
  %600 = vmatprep.subr.bf16.mxu0 0
  %601 = vmatpush1.bf16.msra.mxu0 0
  %602 = vmatprep.subr.bf16.mxu0 0
  %603 = vmatpush1.bf16.msra.mxu0 0
  %604 = vmatprep.subr.bf16.mxu0 0
  %605 = vmatpush1.bf16.msra.mxu0 %v237
  %606 = vmatprep.subr.bf16.mxu0 0
  %607 = vmatpush1.bf16.msra.mxu0 %v236
  %608 = vmatprep.subr.bf16.mxu0 0
  %609 = vmatpush2.bf16.msra.mxu0 0
  %610 = vmatprep.subr.bf16.mxu0 0
  %611 = vmatpush2.bf16.msra.mxu0 0
  %612 = vmatprep.subr.bf16.mxu0 0
  %613 = vmatpush2.bf16.msra.mxu0 0
  %614 = vmatprep.subr.bf16.mxu0 0
  %615 = vmatpush2.bf16.msra.mxu0 0
  %616 = vmatprep.subr.bf16.mxu0 0
  %617 = vmatpush2.bf16.msra.mxu0 0
  %618 = vmatprep.subr.bf16.mxu0 0
  %619 = vmatpush2.bf16.msra.mxu0 0
  %620 = vmatprep.subr.bf16.mxu0 0
  %621 = vmatpush2.bf16.msra.mxu0 0
  %622 = vmatprep.subr.bf16.mxu0 0
  %623 = vmatpush2.bf16.msra.mxu0 0
  %624 = vmatprep.mubr.bf16.mxu0 0
  %625 = vmatmul.mubr.bf16.gmra.mxu0 %v506
  %v626 = vpop.f32.mrf.mxu0
  %v627 = vadd.f32 %v555, %v626
  %v628 = vpop.f32.mrf.mxu0
  %v629 = vpop.f32.mrf.mxu0
  %v630 = vadd.f32 %v558, %v629
  %v631 = vpop.f32.mrf.mxu0
  %632 = vmatprep.mubr.bf16.mxu0 0
  %633 = vmatmul.mubr.bf16.gmra.mxu0 %v509
  %v634 = vpop.f32.mrf.mxu0
  %v635 = vadd.f32 %v563, %v634
  %v636 = vpop.f32.mrf.mxu0
  %v637 = vpop.f32.mrf.mxu0
  %v638 = vadd.f32 %v566, %v637
  %v639 = vpop.f32.mrf.mxu0
  %640 = vmatprep.mubr.bf16.mxu0 0
  %641 = vmatmul.mubr.bf16.gmra.mxu0 %v512
  %v642 = vpop.f32.mrf.mxu0
  %v643 = vadd.f32 %v571, %v642
  %v644 = vpop.f32.mrf.mxu0
  %v645 = vpop.f32.mrf.mxu0
  %v646 = vadd.f32 %v574, %v645
  %v647 = vpop.f32.mrf.mxu0
  %648 = vmatprep.mubr.bf16.mxu0 0
  %649 = vmatmul.mubr.bf16.gmra.mxu0 %v515
  %v650 = vpop.f32.mrf.mxu0
  %v651 = vadd.f32 %v579, %v650
  %v652 = vpop.f32.mrf.mxu0
  %v653 = vpop.f32.mrf.mxu0
  %v654 = vadd.f32 %v582, %v653
  %v655 = vpop.f32.mrf.mxu0
  %656 = vmatprep.mubr.bf16.mxu0 0
  %657 = vmatmul.mubr.bf16.gmra.mxu0 %v518
  %v658 = vpop.f32.mrf.mxu0
  %v659 = vadd.f32 %v587, %v658
  %v660 = vpop.f32.mrf.mxu0
  %v661 = vpop.f32.mrf.mxu0
  %v662 = vpop.f32.mrf.mxu0
  %663 = vdwg.mxu0
  %v664 = vmax.f32 %v379, %v627
  %v665 = vmax.f32 %v382, %v630
  %v666 = vmax.f32 %v387, %v635
  %v667 = vmax.f32 %v390, %v638
  %v668 = vmax.f32 %v395, %v643
  %v669 = vmax.f32 %v398, %v646
  %v670 = vmax.f32 %v403, %v651
  %v671 = vmax.f32 %v406, %v654
  %v672 = vmax.f32 %v411, %v659
  %s673 = scalar_lea.vmem %s0, 216
  %v674 = vld [vmem:[%s673] sm:$0xff]
  %v675 = vld [vmem:[%s673 + $0x8] sm:$0xf]
  %v676 = vld [vmem:[%s673 + $0xc] sm:$0xff]
  %v677 = vld [vmem:[%s673 + $0x14] sm:$0xf]
  %v678 = vld [vmem:[%s673 + $0x18] sm:$0xff]
  %v679 = vld [vmem:[%s673 + $0x20] sm:$0xf]
  %v680 = vld [vmem:[%s673 + $0x24] sm:$0xff]
  %v681 = vld [vmem:[%s673 + $0x2c] sm:$0xf]
  %v682 = vld [vmem:[%s673 + $0x30] sm:$0xff]
  %v683 = vld [vmem:[%s673 + $0x38] sm:$0xf]
  %v684 = vld [vmem:[%s673 + $0x3c] sm:$0xff]
  %v685 = vld [vmem:[%s673 + $0x44] sm:$0xf]
  %v686 = vld [vmem:[%s673 + $0x48] sm:$0xff]
  %v687 = vld [vmem:[%s673 + $0x50] sm:$0xf]
  %v688 = vld [vmem:[%s673 + $0x54] sm:$0xff]
  %v689 = vld [vmem:[%s673 + $0x5c] sm:$0xf]
  %v690 = vld [vmem:[%s673 + $0x60] sm:$0xff]
  %v691 = vld [vmem:[%s673 + $0x68] sm:$0xf]
  %v710 = vunpack.c.l.b16 %v674
  %v711 = vunpack.c.h.b16 %v674
  %v712 = vunpack.c.l.b16 %v675
  %v713 = vunpack.c.l.b16 %v676
  %v714 = vunpack.c.h.b16 %v676
  %v715 = vunpack.c.l.b16 %v677
  %v716 = vunpack.c.l.b16 %v678
  %v717 = vunpack.c.h.b16 %v678
  %v718 = vunpack.c.l.b16 %v679
  %v719 = vunpack.c.l.b16 %v680
  %v720 = vunpack.c.h.b16 %v680
  %v721 = vunpack.c.l.b16 %v681
  %v722 = vunpack.c.l.b16 %v682
  %v723 = vunpack.c.h.b16 %v682
  %v724 = vunpack.c.l.b16 %v683
  %v725 = vunpack.c.l.b16 %v684
  %v726 = vunpack.c.h.b16 %v684
  %v727 = vunpack.c.l.b16 %v685
  %v728 = vunpack.c.l.b16 %v686
  %v729 = vunpack.c.h.b16 %v686
  %v730 = vunpack.c.l.b16 %v687
  %v731 = vunpack.c.l.b16 %v688
  %v732 = vunpack.c.h.b16 %v688
  %v733 = vunpack.c.l.b16 %v689
  %v734 = vunpack.c.l.b16 %v690
  %v735 = vunpack.c.h.b16 %v690
  %v736 = vunpack.c.l.b16 %v691
  %v737 = vpack.c.b16 %v713, %v710
  %v738 = vpack.c.b16 %v714, %v711
  %v739 = vpack.c.b16 %v715, %v712
  %v740 = vpack.c.b16 %v719, %v716
  %v741 = vpack.c.b16 %v720, %v717
  %v742 = vpack.c.b16 %v721, %v718
  %v743 = vpack.c.b16 %v725, %v722
  %v744 = vpack.c.b16 %v726, %v723
  %v745 = vpack.c.b16 %v727, %v724
  %v746 = vpack.c.b16 %v731, %v728
  %v747 = vpack.c.b16 %v732, %v729
  %v748 = vpack.c.b16 %v733, %v730
  %v749 = vpack.c.b16 %v734, %v734
  %v750 = vpack.c.b16 %v735, %v735
  %v751 = vpack.c.b16 %v736, %v736
  %v763 = vsel %vm256, %v739, 0
  %v766 = vsel %vm256, %v742, 0
  %v769 = vsel %vm256, %v745, 0
  %v772 = vsel %vm256, %v748, 0
  %v775 = vsel %vm256, %v751, 0
  %777 = vmatprep.subr.bf16.mxu0 0
  %778 = vmatpush1.bf16.msra.mxu0 %v227
  %779 = vmatprep.subr.bf16.mxu0 0
  %780 = vmatpush1.bf16.msra.mxu0 %v226
  %781 = vmatprep.subr.bf16.mxu0 0
  %782 = vmatpush1.bf16.msra.mxu0 %v225
  %783 = vmatprep.subr.bf16.mxu0 0
  %784 = vmatpush1.bf16.msra.mxu0 %v224
  %785 = vmatprep.subr.bf16.mxu0 0
  %786 = vmatpush1.bf16.msra.mxu0 %v223
  %787 = vmatprep.subr.bf16.mxu0 0
  %788 = vmatpush1.bf16.msra.mxu0 %v222
  %789 = vmatprep.subr.bf16.mxu0 0
  %790 = vmatpush1.bf16.msra.mxu0 %v221
  %791 = vmatprep.subr.bf16.mxu0 0
  %792 = vmatpush1.bf16.msra.mxu0 %v220
  %793 = vmatprep.subr.bf16.mxu0 0
  %794 = vmatpush2.bf16.msra.mxu0 %v235
  %795 = vmatprep.subr.bf16.mxu0 0
  %796 = vmatpush2.bf16.msra.mxu0 %v234
  %797 = vmatprep.subr.bf16.mxu0 0
  %798 = vmatpush2.bf16.msra.mxu0 %v233
  %799 = vmatprep.subr.bf16.mxu0 0
  %800 = vmatpush2.bf16.msra.mxu0 %v232
  %801 = vmatprep.subr.bf16.mxu0 0
  %802 = vmatpush2.bf16.msra.mxu0 %v231
  %803 = vmatprep.subr.bf16.mxu0 0
  %804 = vmatpush2.bf16.msra.mxu0 %v230
  %805 = vmatprep.subr.bf16.mxu0 0
  %806 = vmatpush2.bf16.msra.mxu0 %v229
  %807 = vmatprep.subr.bf16.mxu0 0
  %808 = vmatpush2.bf16.msra.mxu0 %v228
  %809 = vmatprep.mubr.bf16.mxu0 %v738
  %810 = vmatmul.mubr.bf16.gmra.mxu0 %v737
  %v811 = vpop.f32.mrf.mxu0
  %v812 = vadd.f32 0.0, %v811
  %v813 = vpop.f32.mrf.mxu0
  %v814 = vpop.f32.mrf.mxu0
  %v815 = vadd.f32 0.0, %v814
  %v816 = vpop.f32.mrf.mxu0
  %817 = vmatprep.mubr.bf16.mxu0 %v741
  %818 = vmatmul.mubr.bf16.gmra.mxu0 %v740
  %v819 = vpop.f32.mrf.mxu0
  %v820 = vadd.f32 0.0, %v819
  %v821 = vpop.f32.mrf.mxu0
  %v822 = vpop.f32.mrf.mxu0
  %v823 = vadd.f32 0.0, %v822
  %v824 = vpop.f32.mrf.mxu0
  %825 = vmatprep.mubr.bf16.mxu0 %v744
  %826 = vmatmul.mubr.bf16.gmra.mxu0 %v743
  %v827 = vpop.f32.mrf.mxu0
  %v828 = vadd.f32 0.0, %v827
  %v829 = vpop.f32.mrf.mxu0
  %v830 = vpop.f32.mrf.mxu0
  %v831 = vadd.f32 0.0, %v830
  %v832 = vpop.f32.mrf.mxu0
  %833 = vmatprep.mubr.bf16.mxu0 %v747
  %834 = vmatmul.mubr.bf16.gmra.mxu0 %v746
  %v835 = vpop.f32.mrf.mxu0
  %v836 = vadd.f32 0.0, %v835
  %v837 = vpop.f32.mrf.mxu0
  %v838 = vpop.f32.mrf.mxu0
  %v839 = vadd.f32 0.0, %v838
  %v840 = vpop.f32.mrf.mxu0
  %841 = vmatprep.mubr.bf16.mxu0 %v750
  %842 = vmatmul.mubr.bf16.gmra.mxu0 %v749
  %v843 = vpop.f32.mrf.mxu0
  %v844 = vadd.f32 0.0, %v843
  %v845 = vpop.f32.mrf.mxu0
  %v846 = vpop.f32.mrf.mxu0
  %v847 = vpop.f32.mrf.mxu0
  %848 = vdwg.mxu0
  %849 = vmatprep.subr.bf16.mxu0 0
  %850 = vmatpush1.bf16.msra.mxu0 0
  %851 = vmatprep.subr.bf16.mxu0 0
  %852 = vmatpush1.bf16.msra.mxu0 0
  %853 = vmatprep.subr.bf16.mxu0 0
  %854 = vmatpush1.bf16.msra.mxu0 0
  %855 = vmatprep.subr.bf16.mxu0 0
  %856 = vmatpush1.bf16.msra.mxu0 0
  %857 = vmatprep.subr.bf16.mxu0 0
  %858 = vmatpush1.bf16.msra.mxu0 0
  %859 = vmatprep.subr.bf16.mxu0 0
  %860 = vmatpush1.bf16.msra.mxu0 0
  %861 = vmatprep.subr.bf16.mxu0 0
  %862 = vmatpush1.bf16.msra.mxu0 %v237
  %863 = vmatprep.subr.bf16.mxu0 0
  %864 = vmatpush1.bf16.msra.mxu0 %v236
  %865 = vmatprep.subr.bf16.mxu0 0
  %866 = vmatpush2.bf16.msra.mxu0 0
  %867 = vmatprep.subr.bf16.mxu0 0
  %868 = vmatpush2.bf16.msra.mxu0 0
  %869 = vmatprep.subr.bf16.mxu0 0
  %870 = vmatpush2.bf16.msra.mxu0 0
  %871 = vmatprep.subr.bf16.mxu0 0
  %872 = vmatpush2.bf16.msra.mxu0 0
  %873 = vmatprep.subr.bf16.mxu0 0
  %874 = vmatpush2.bf16.msra.mxu0 0
  %875 = vmatprep.subr.bf16.mxu0 0
  %876 = vmatpush2.bf16.msra.mxu0 0
  %877 = vmatprep.subr.bf16.mxu0 0
  %878 = vmatpush2.bf16.msra.mxu0 0
  %879 = vmatprep.subr.bf16.mxu0 0
  %880 = vmatpush2.bf16.msra.mxu0 0
  %881 = vmatprep.mubr.bf16.mxu0 0
  %882 = vmatmul.mubr.bf16.gmra.mxu0 %v763
  %v883 = vpop.f32.mrf.mxu0
  %v884 = vadd.f32 %v812, %v883
  %v885 = vpop.f32.mrf.mxu0
  %v886 = vpop.f32.mrf.mxu0
  %v887 = vadd.f32 %v815, %v886
  %v888 = vpop.f32.mrf.mxu0
  %889 = vmatprep.mubr.bf16.mxu0 0
  %890 = vmatmul.mubr.bf16.gmra.mxu0 %v766
  %v891 = vpop.f32.mrf.mxu0
  %v892 = vadd.f32 %v820, %v891
  %v893 = vpop.f32.mrf.mxu0
  %v894 = vpop.f32.mrf.mxu0
  %v895 = vadd.f32 %v823, %v894
  %v896 = vpop.f32.mrf.mxu0
  %897 = vmatprep.mubr.bf16.mxu0 0
  %898 = vmatmul.mubr.bf16.gmra.mxu0 %v769
  %v899 = vpop.f32.mrf.mxu0
  %v900 = vadd.f32 %v828, %v899
  %v901 = vpop.f32.mrf.mxu0
  %v902 = vpop.f32.mrf.mxu0
  %v903 = vadd.f32 %v831, %v902
  %v904 = vpop.f32.mrf.mxu0
  %905 = vmatprep.mubr.bf16.mxu0 0
  %906 = vmatmul.mubr.bf16.gmra.mxu0 %v772
  %v907 = vpop.f32.mrf.mxu0
  %v908 = vadd.f32 %v836, %v907
  %v909 = vpop.f32.mrf.mxu0
  %v910 = vpop.f32.mrf.mxu0
  %v911 = vadd.f32 %v839, %v910
  %v912 = vpop.f32.mrf.mxu0
  %913 = vmatprep.mubr.bf16.mxu0 0
  %914 = vmatmul.mubr.bf16.gmra.mxu0 %v775
  %v915 = vpop.f32.mrf.mxu0
  %v916 = vadd.f32 %v844, %v915
  %v917 = vpop.f32.mrf.mxu0
  %v918 = vpop.f32.mrf.mxu0
  %v919 = vpop.f32.mrf.mxu0
  %920 = vdwg.mxu0
  %v921 = vmax.f32 %v664, %v884
  %v922 = vmax.f32 %v665, %v887
  %v923 = vmax.f32 %v666, %v892
  %v924 = vmax.f32 %v667, %v895
  %v925 = vmax.f32 %v668, %v900
  %v926 = vmax.f32 %v669, %v903
  %v927 = vmax.f32 %v670, %v908
  %v928 = vmax.f32 %v671, %v911
  %v929 = vmax.f32 %v672, %v916
  %s930 = scalar_lea.vmem %s0, 324
  %v931 = vld [vmem:[%s930] sm:$0xff]
  %v932 = vld [vmem:[%s930 + $0x8] sm:$0xf]
  %v933 = vld [vmem:[%s930 + $0xc] sm:$0xff]
  %v934 = vld [vmem:[%s930 + $0x14] sm:$0xf]
  %v935 = vld [vmem:[%s930 + $0x18] sm:$0xff]
  %v936 = vld [vmem:[%s930 + $0x20] sm:$0xf]
  %v937 = vld [vmem:[%s930 + $0x24] sm:$0xff]
  %v938 = vld [vmem:[%s930 + $0x2c] sm:$0xf]
  %v939 = vld [vmem:[%s930 + $0x30] sm:$0xff]
  %v940 = vld [vmem:[%s930 + $0x38] sm:$0xf]
  %v941 = vld [vmem:[%s930 + $0x3c] sm:$0xff]
  %v942 = vld [vmem:[%s930 + $0x44] sm:$0xf]
  %v943 = vld [vmem:[%s930 + $0x48] sm:$0xff]
  %v944 = vld [vmem:[%s930 + $0x50] sm:$0xf]
  %v945 = vld [vmem:[%s930 + $0x54] sm:$0xff]
  %v946 = vld [vmem:[%s930 + $0x5c] sm:$0xf]
  %v947 = vld [vmem:[%s930 + $0x60] sm:$0xff]
  %v948 = vld [vmem:[%s930 + $0x68] sm:$0xf]
  %v967 = vunpack.c.l.b16 %v931
  %v968 = vunpack.c.h.b16 %v931
  %v969 = vunpack.c.l.b16 %v932
  %v970 = vunpack.c.l.b16 %v933
  %v971 = vunpack.c.h.b16 %v933
  %v972 = vunpack.c.l.b16 %v934
  %v973 = vunpack.c.l.b16 %v935
  %v974 = vunpack.c.h.b16 %v935
  %v975 = vunpack.c.l.b16 %v936
  %v976 = vunpack.c.l.b16 %v937
  %v977 = vunpack.c.h.b16 %v937
  %v978 = vunpack.c.l.b16 %v938
  %v979 = vunpack.c.l.b16 %v939
  %v980 = vunpack.c.h.b16 %v939
  %v981 = vunpack.c.l.b16 %v940
  %v982 = vunpack.c.l.b16 %v941
  %v983 = vunpack.c.h.b16 %v941
  %v984 = vunpack.c.l.b16 %v942
  %v985 = vunpack.c.l.b16 %v943
  %v986 = vunpack.c.h.b16 %v943
  %v987 = vunpack.c.l.b16 %v944
  %v988 = vunpack.c.l.b16 %v945
  %v989 = vunpack.c.h.b16 %v945
  %v990 = vunpack.c.l.b16 %v946
  %v991 = vunpack.c.l.b16 %v947
  %v992 = vunpack.c.h.b16 %v947
  %v993 = vunpack.c.l.b16 %v948
  %v994 = vpack.c.b16 %v970, %v967
  %v995 = vpack.c.b16 %v971, %v968
  %v996 = vpack.c.b16 %v972, %v969
  %v997 = vpack.c.b16 %v976, %v973
  %v998 = vpack.c.b16 %v977, %v974
  %v999 = vpack.c.b16 %v978, %v975
  %v1000 = vpack.c.b16 %v982, %v979
  %v1001 = vpack.c.b16 %v983, %v980
  %v1002 = vpack.c.b16 %v984, %v981
  %v1003 = vpack.c.b16 %v988, %v985
  %v1004 = vpack.c.b16 %v989, %v986
  %v1005 = vpack.c.b16 %v990, %v987
  %v1006 = vpack.c.b16 %v991, %v991
  %v1007 = vpack.c.b16 %v992, %v992
  %v1008 = vpack.c.b16 %v993, %v993
  %v1020 = vsel %vm256, %v996, 0
  %v1023 = vsel %vm256, %v999, 0
  %v1026 = vsel %vm256, %v1002, 0
  %v1029 = vsel %vm256, %v1005, 0
  %v1032 = vsel %vm256, %v1008, 0
  %1034 = vmatprep.subr.bf16.mxu0 0
  %1035 = vmatpush1.bf16.msra.mxu0 %v227
  %1036 = vmatprep.subr.bf16.mxu0 0
  %1037 = vmatpush1.bf16.msra.mxu0 %v226
  %1038 = vmatprep.subr.bf16.mxu0 0
  %1039 = vmatpush1.bf16.msra.mxu0 %v225
  %1040 = vmatprep.subr.bf16.mxu0 0
  %1041 = vmatpush1.bf16.msra.mxu0 %v224
  %1042 = vmatprep.subr.bf16.mxu0 0
  %1043 = vmatpush1.bf16.msra.mxu0 %v223
  %1044 = vmatprep.subr.bf16.mxu0 0
  %1045 = vmatpush1.bf16.msra.mxu0 %v222
  %1046 = vmatprep.subr.bf16.mxu0 0
  %1047 = vmatpush1.bf16.msra.mxu0 %v221
  %1048 = vmatprep.subr.bf16.mxu0 0
  %1049 = vmatpush1.bf16.msra.mxu0 %v220
  %1050 = vmatprep.subr.bf16.mxu0 0
  %1051 = vmatpush2.bf16.msra.mxu0 %v235
  %1052 = vmatprep.subr.bf16.mxu0 0
  %1053 = vmatpush2.bf16.msra.mxu0 %v234
  %1054 = vmatprep.subr.bf16.mxu0 0
  %1055 = vmatpush2.bf16.msra.mxu0 %v233
  %1056 = vmatprep.subr.bf16.mxu0 0
  %1057 = vmatpush2.bf16.msra.mxu0 %v232
  %1058 = vmatprep.subr.bf16.mxu0 0
  %1059 = vmatpush2.bf16.msra.mxu0 %v231
  %1060 = vmatprep.subr.bf16.mxu0 0
  %1061 = vmatpush2.bf16.msra.mxu0 %v230
  %1062 = vmatprep.subr.bf16.mxu0 0
  %1063 = vmatpush2.bf16.msra.mxu0 %v229
  %1064 = vmatprep.subr.bf16.mxu0 0
  %1065 = vmatpush2.bf16.msra.mxu0 %v228
  %1066 = vmatprep.mubr.bf16.mxu0 %v995
  %1067 = vmatmul.mubr.bf16.gmra.mxu0 %v994
  %v1068 = vpop.f32.mrf.mxu0
  %v1069 = vadd.f32 0.0, %v1068
  %v1070 = vpop.f32.mrf.mxu0
  %v1071 = vpop.f32.mrf.mxu0
  %v1072 = vadd.f32 0.0, %v1071
  %v1073 = vpop.f32.mrf.mxu0
  %1074 = vmatprep.mubr.bf16.mxu0 %v998
  %1075 = vmatmul.mubr.bf16.gmra.mxu0 %v997
  %v1076 = vpop.f32.mrf.mxu0
  %v1077 = vadd.f32 0.0, %v1076
  %v1078 = vpop.f32.mrf.mxu0
  %v1079 = vpop.f32.mrf.mxu0
  %v1080 = vadd.f32 0.0, %v1079
  %v1081 = vpop.f32.mrf.mxu0
  %1082 = vmatprep.mubr.bf16.mxu0 %v1001
  %1083 = vmatmul.mubr.bf16.gmra.mxu0 %v1000
  %v1084 = vpop.f32.mrf.mxu0
  %v1085 = vadd.f32 0.0, %v1084
  %v1086 = vpop.f32.mrf.mxu0
  %v1087 = vpop.f32.mrf.mxu0
  %v1088 = vadd.f32 0.0, %v1087
  %v1089 = vpop.f32.mrf.mxu0
  %1090 = vmatprep.mubr.bf16.mxu0 %v1004
  %1091 = vmatmul.mubr.bf16.gmra.mxu0 %v1003
  %v1092 = vpop.f32.mrf.mxu0
  %v1093 = vadd.f32 0.0, %v1092
  %v1094 = vpop.f32.mrf.mxu0
  %v1095 = vpop.f32.mrf.mxu0
  %v1096 = vadd.f32 0.0, %v1095
  %v1097 = vpop.f32.mrf.mxu0
  %1098 = vmatprep.mubr.bf16.mxu0 %v1007
  %1099 = vmatmul.mubr.bf16.gmra.mxu0 %v1006
  %v1100 = vpop.f32.mrf.mxu0
  %v1101 = vadd.f32 0.0, %v1100
  %v1102 = vpop.f32.mrf.mxu0
  %v1103 = vpop.f32.mrf.mxu0
  %v1104 = vpop.f32.mrf.mxu0
  %1105 = vdwg.mxu0
  %1106 = vmatprep.subr.bf16.mxu0 0
  %1107 = vmatpush1.bf16.msra.mxu0 0
  %1108 = vmatprep.subr.bf16.mxu0 0
  %1109 = vmatpush1.bf16.msra.mxu0 0
  %1110 = vmatprep.subr.bf16.mxu0 0
  %1111 = vmatpush1.bf16.msra.mxu0 0
  %1112 = vmatprep.subr.bf16.mxu0 0
  %1113 = vmatpush1.bf16.msra.mxu0 0
  %1114 = vmatprep.subr.bf16.mxu0 0
  %1115 = vmatpush1.bf16.msra.mxu0 0
  %1116 = vmatprep.subr.bf16.mxu0 0
  %1117 = vmatpush1.bf16.msra.mxu0 0
  %1118 = vmatprep.subr.bf16.mxu0 0
  %1119 = vmatpush1.bf16.msra.mxu0 %v237
  %1120 = vmatprep.subr.bf16.mxu0 0
  %1121 = vmatpush1.bf16.msra.mxu0 %v236
  %1122 = vmatprep.subr.bf16.mxu0 0
  %1123 = vmatpush2.bf16.msra.mxu0 0
  %1124 = vmatprep.subr.bf16.mxu0 0
  %1125 = vmatpush2.bf16.msra.mxu0 0
  %1126 = vmatprep.subr.bf16.mxu0 0
  %1127 = vmatpush2.bf16.msra.mxu0 0
  %1128 = vmatprep.subr.bf16.mxu0 0
  %1129 = vmatpush2.bf16.msra.mxu0 0
  %1130 = vmatprep.subr.bf16.mxu0 0
  %1131 = vmatpush2.bf16.msra.mxu0 0
  %1132 = vmatprep.subr.bf16.mxu0 0
  %1133 = vmatpush2.bf16.msra.mxu0 0
  %1134 = vmatprep.subr.bf16.mxu0 0
  %1135 = vmatpush2.bf16.msra.mxu0 0
  %1136 = vmatprep.subr.bf16.mxu0 0
  %1137 = vmatpush2.bf16.msra.mxu0 0
  %1138 = vmatprep.mubr.bf16.mxu0 0
  %1139 = vmatmul.mubr.bf16.gmra.mxu0 %v1020
  %v1140 = vpop.f32.mrf.mxu0
  %v1141 = vadd.f32 %v1069, %v1140
  %v1142 = vpop.f32.mrf.mxu0
  %v1143 = vpop.f32.mrf.mxu0
  %v1144 = vadd.f32 %v1072, %v1143
  %v1145 = vpop.f32.mrf.mxu0
  %1146 = vmatprep.mubr.bf16.mxu0 0
  %1147 = vmatmul.mubr.bf16.gmra.mxu0 %v1023
  %v1148 = vpop.f32.mrf.mxu0
  %v1149 = vadd.f32 %v1077, %v1148
  %v1150 = vpop.f32.mrf.mxu0
  %v1151 = vpop.f32.mrf.mxu0
  %v1152 = vadd.f32 %v1080, %v1151
  %v1153 = vpop.f32.mrf.mxu0
  %1154 = vmatprep.mubr.bf16.mxu0 0
  %1155 = vmatmul.mubr.bf16.gmra.mxu0 %v1026
  %v1156 = vpop.f32.mrf.mxu0
  %v1157 = vadd.f32 %v1085, %v1156
  %v1158 = vpop.f32.mrf.mxu0
  %v1159 = vpop.f32.mrf.mxu0
  %v1160 = vadd.f32 %v1088, %v1159
  %v1161 = vpop.f32.mrf.mxu0
  %1162 = vmatprep.mubr.bf16.mxu0 0
  %1163 = vmatmul.mubr.bf16.gmra.mxu0 %v1029
  %v1164 = vpop.f32.mrf.mxu0
  %v1165 = vadd.f32 %v1093, %v1164
  %v1166 = vpop.f32.mrf.mxu0
  %v1167 = vpop.f32.mrf.mxu0
  %v1168 = vadd.f32 %v1096, %v1167
  %v1169 = vpop.f32.mrf.mxu0
  %1170 = vmatprep.mubr.bf16.mxu0 0
  %1171 = vmatmul.mubr.bf16.gmra.mxu0 %v1032
  %v1172 = vpop.f32.mrf.mxu0
  %v1173 = vadd.f32 %v1101, %v1172
  %v1174 = vpop.f32.mrf.mxu0
  %v1175 = vpop.f32.mrf.mxu0
  %v1176 = vpop.f32.mrf.mxu0
  %1177 = vdwg.mxu0
  %v1178 = vmax.f32 %v921, %v1141
  %v1179 = vmax.f32 %v922, %v1144
  %v1180 = vmax.f32 %v923, %v1149
  %v1181 = vmax.f32 %v924, %v1152
  %v1182 = vmax.f32 %v925, %v1157
  %v1183 = vmax.f32 %v926, %v1160
  %v1184 = vmax.f32 %v927, %v1165
  %v1185 = vmax.f32 %v928, %v1168
  %v1186 = vmax.f32 %v929, %v1173
  %v1187 = vmax.f32 %v1178, 0.0
  %v1188 = vmax.f32 %v1179, 0.0
  %v1189 = vmax.f32 %v1180, 0.0
  %v1190 = vmax.f32 %v1181, 0.0
  %v1191 = vmax.f32 %v1182, 0.0
  %v1192 = vmax.f32 %v1183, 0.0
  %v1193 = vmax.f32 %v1184, 0.0
  %v1194 = vmax.f32 %v1185, 0.0
  %v1195 = vmax.f32 %v1186, 0.0
  %v1196 = vpack.c.bf16 %v1187, %v1187
  %v1197 = vld [vmem:[%s2] sm:$0xf]
  %v1198 = vld [vmem:[%s2 + $0x4] sm:$0xf]
  %v1199 = vld [vmem:[%s2 + $0x8] sm:$0xf]
  %v1200 = vld [vmem:[%s2 + $0xc] sm:$0xf]
  %v1201 = vld [vmem:[%s2 + $0x10] sm:$0xf]
  %v1202 = vld [vmem:[%s2 + $0x14] sm:$0xf]
  %v1203 = vld [vmem:[%s2 + $0x18] sm:$0xf]
  %v1204 = vld [vmem:[%s2 + $0x1c] sm:$0xf]
  %v1205 = vpack.c.bf16 %v1188, %v1188
  %s1206 = scalar_lea.vmem %s2, 32
  %v1207 = vld [vmem:[%s1206] sm:$0xf]
  %v1208 = vld [vmem:[%s1206 + $0x4] sm:$0xf]
  %v1209 = vld [vmem:[%s1206 + $0x8] sm:$0xf]
  %v1210 = vld [vmem:[%s1206 + $0xc] sm:$0xf]
  %v1211 = vld [vmem:[%s1206 + $0x10] sm:$0xf]
  %v1212 = vld [vmem:[%s1206 + $0x14] sm:$0xf]
  %v1213 = vld [vmem:[%s1206 + $0x18] sm:$0xf]
  %v1214 = vld [vmem:[%s1206 + $0x1c] sm:$0xf]
  %v1223 = vunpack.c.l.b16 %v1207
  %v1224 = vunpack.c.l.b16 %v1208
  %v1225 = vunpack.c.l.b16 %v1209
  %v1226 = vunpack.c.l.b16 %v1210
  %v1227 = vunpack.c.l.b16 %v1211
  %v1228 = vunpack.c.l.b16 %v1212
  %v1229 = vunpack.c.l.b16 %v1213
  %v1230 = vunpack.c.l.b16 %v1214
  %v1231 = vpack.c.b16 %v1224, %v1223
  %v1232 = vpack.c.b16 %v1226, %v1225
  %v1233 = vpack.c.b16 %v1228, %v1227
  %v1234 = vpack.c.b16 %v1230, %v1229
  %vm1239 = vcmask 523264
  %v1241 = vsel %vm1239, %v1205, 0
  %1243 = vmatprep.subr.bf16.mxu0 0
  %1244 = vmatpush1.bf16.msra.mxu0 0
  %1245 = vmatprep.subr.bf16.mxu0 0
  %1246 = vmatpush1.bf16.msra.mxu0 0
  %1247 = vmatprep.subr.bf16.mxu0 0
  %1248 = vmatpush1.bf16.msra.mxu0 0
  %1249 = vmatprep.subr.bf16.mxu0 0
  %1250 = vmatpush1.bf16.msra.mxu0 0
  %1251 = vmatprep.subr.bf16.mxu0 0
  %1252 = vmatpush1.bf16.msra.mxu0 %v1234
  %1253 = vmatprep.subr.bf16.mxu0 0
  %1254 = vmatpush1.bf16.msra.mxu0 %v1233
  %1255 = vmatprep.subr.bf16.mxu0 0
  %1256 = vmatpush1.bf16.msra.mxu0 %v1232
  %1257 = vmatprep.subr.bf16.mxu0 0
  %1258 = vmatpush1.bf16.msra.mxu0 %v1231
  %1259 = vmatprep.subr.bf16.mxu0 0
  %1260 = vmatpush2.bf16.msra.mxu0 0
  %1261 = vmatprep.subr.bf16.mxu0 0
  %1262 = vmatpush2.bf16.msra.mxu0 0
  %1263 = vmatprep.subr.bf16.mxu0 0
  %1264 = vmatpush2.bf16.msra.mxu0 0
  %1265 = vmatprep.subr.bf16.mxu0 0
  %1266 = vmatpush2.bf16.msra.mxu0 0
  %1267 = vmatprep.subr.bf16.mxu0 0
  %1268 = vmatpush2.bf16.msra.mxu0 0
  %1269 = vmatprep.subr.bf16.mxu0 0
  %1270 = vmatpush2.bf16.msra.mxu0 0
  %1271 = vmatprep.subr.bf16.mxu0 0
  %1272 = vmatpush2.bf16.msra.mxu0 0
  %1273 = vmatprep.subr.bf16.mxu0 0
  %1274 = vmatpush2.bf16.msra.mxu0 0
  %1275 = vmatprep.mubr.bf16.mxu0 0
  %1276 = vmatmul.mubr.bf16.gmra.mxu0 %v1241
  %v1277 = vpop.f32.mrf.mxu0
  %v1278 = vadd.f32 0.0, %v1277
  %v1279 = vpop.f32.mrf.mxu0
  %v1280 = vpop.f32.mrf.mxu0
  %v1281 = vpop.f32.mrf.mxu0
  %1282 = vdwg.mxu0
  %v1291 = vunpack.c.l.b16 %v1197
  %v1292 = vunpack.c.l.b16 %v1198
  %v1293 = vunpack.c.l.b16 %v1199
  %v1294 = vunpack.c.l.b16 %v1200
  %v1295 = vunpack.c.l.b16 %v1201
  %v1296 = vunpack.c.l.b16 %v1202
  %v1297 = vunpack.c.l.b16 %v1203
  %v1298 = vunpack.c.l.b16 %v1204
  %v1299 = vpack.c.b16 %v1292, %v1291
  %v1300 = vpack.c.b16 %v1294, %v1293
  %v1301 = vpack.c.b16 %v1296, %v1295
  %v1302 = vpack.c.b16 %v1298, %v1297
  %v1308 = vsel %vm1239, %v1196, 0
  %1310 = vmatprep.subr.bf16.mxu0 0
  %1311 = vmatpush1.bf16.msra.mxu0 0
  %1312 = vmatprep.subr.bf16.mxu0 0
  %1313 = vmatpush1.bf16.msra.mxu0 0
  %1314 = vmatprep.subr.bf16.mxu0 0
  %1315 = vmatpush1.bf16.msra.mxu0 0
  %1316 = vmatprep.subr.bf16.mxu0 0
  %1317 = vmatpush1.bf16.msra.mxu0 0
  %1318 = vmatprep.subr.bf16.mxu0 0
  %1319 = vmatpush1.bf16.msra.mxu0 %v1302
  %1320 = vmatprep.subr.bf16.mxu0 0
  %1321 = vmatpush1.bf16.msra.mxu0 %v1301
  %1322 = vmatprep.subr.bf16.mxu0 0
  %1323 = vmatpush1.bf16.msra.mxu0 %v1300
  %1324 = vmatprep.subr.bf16.mxu0 0
  %1325 = vmatpush1.bf16.msra.mxu0 %v1299
  %1326 = vmatprep.subr.bf16.mxu0 0
  %1327 = vmatpush2.bf16.msra.mxu0 0
  %1328 = vmatprep.subr.bf16.mxu0 0
  %1329 = vmatpush2.bf16.msra.mxu0 0
  %1330 = vmatprep.subr.bf16.mxu0 0
  %1331 = vmatpush2.bf16.msra.mxu0 0
  %1332 = vmatprep.subr.bf16.mxu0 0
  %1333 = vmatpush2.bf16.msra.mxu0 0
  %1334 = vmatprep.subr.bf16.mxu0 0
  %1335 = vmatpush2.bf16.msra.mxu0 0
  %1336 = vmatprep.subr.bf16.mxu0 0
  %1337 = vmatpush2.bf16.msra.mxu0 0
  %1338 = vmatprep.subr.bf16.mxu0 0
  %1339 = vmatpush2.bf16.msra.mxu0 0
  %1340 = vmatprep.subr.bf16.mxu0 0
  %1341 = vmatpush2.bf16.msra.mxu0 0
  %1342 = vmatprep.mubr.bf16.mxu0 0
  %1343 = vmatmul.mubr.bf16.gmra.mxu0 %v1308
  %v1344 = vpop.f32.mrf.mxu0
  %v1345 = vadd.f32 %v1278, %v1344
  %v1346 = vpop.f32.mrf.mxu0
  %v1347 = vpop.f32.mrf.mxu0
  %v1348 = vpop.f32.mrf.mxu0
  %1349 = vdwg.mxu0
  %v1350 = vpack.c.bf16 %v1189, %v1189
  %s1351 = scalar_lea.vmem %s2, 64
  %v1352 = vld [vmem:[%s1351] sm:$0xf]
  %v1353 = vld [vmem:[%s1351 + $0x4] sm:$0xf]
  %v1354 = vld [vmem:[%s1351 + $0x8] sm:$0xf]
  %v1355 = vld [vmem:[%s1351 + $0xc] sm:$0xf]
  %v1356 = vld [vmem:[%s1351 + $0x10] sm:$0xf]
  %v1357 = vld [vmem:[%s1351 + $0x14] sm:$0xf]
  %v1358 = vld [vmem:[%s1351 + $0x18] sm:$0xf]
  %v1359 = vld [vmem:[%s1351 + $0x1c] sm:$0xf]
  %v1368 = vunpack.c.l.b16 %v1352
  %v1369 = vunpack.c.l.b16 %v1353
  %v1370 = vunpack.c.l.b16 %v1354
  %v1371 = vunpack.c.l.b16 %v1355
  %v1372 = vunpack.c.l.b16 %v1356
  %v1373 = vunpack.c.l.b16 %v1357
  %v1374 = vunpack.c.l.b16 %v1358
  %v1375 = vunpack.c.l.b16 %v1359
  %v1376 = vpack.c.b16 %v1369, %v1368
  %v1377 = vpack.c.b16 %v1371, %v1370
  %v1378 = vpack.c.b16 %v1373, %v1372
  %v1379 = vpack.c.b16 %v1375, %v1374
  %v1385 = vsel %vm1239, %v1350, 0
  %1387 = vmatprep.subr.bf16.mxu0 0
  %1388 = vmatpush1.bf16.msra.mxu0 0
  %1389 = vmatprep.subr.bf16.mxu0 0
  %1390 = vmatpush1.bf16.msra.mxu0 0
  %1391 = vmatprep.subr.bf16.mxu0 0
  %1392 = vmatpush1.bf16.msra.mxu0 0
  %1393 = vmatprep.subr.bf16.mxu0 0
  %1394 = vmatpush1.bf16.msra.mxu0 0
  %1395 = vmatprep.subr.bf16.mxu0 0
  %1396 = vmatpush1.bf16.msra.mxu0 %v1379
  %1397 = vmatprep.subr.bf16.mxu0 0
  %1398 = vmatpush1.bf16.msra.mxu0 %v1378
  %1399 = vmatprep.subr.bf16.mxu0 0
  %1400 = vmatpush1.bf16.msra.mxu0 %v1377
  %1401 = vmatprep.subr.bf16.mxu0 0
  %1402 = vmatpush1.bf16.msra.mxu0 %v1376
  %1403 = vmatprep.subr.bf16.mxu0 0
  %1404 = vmatpush2.bf16.msra.mxu0 0
  %1405 = vmatprep.subr.bf16.mxu0 0
  %1406 = vmatpush2.bf16.msra.mxu0 0
  %1407 = vmatprep.subr.bf16.mxu0 0
  %1408 = vmatpush2.bf16.msra.mxu0 0
  %1409 = vmatprep.subr.bf16.mxu0 0
  %1410 = vmatpush2.bf16.msra.mxu0 0
  %1411 = vmatprep.subr.bf16.mxu0 0
  %1412 = vmatpush2.bf16.msra.mxu0 0
  %1413 = vmatprep.subr.bf16.mxu0 0
  %1414 = vmatpush2.bf16.msra.mxu0 0
  %1415 = vmatprep.subr.bf16.mxu0 0
  %1416 = vmatpush2.bf16.msra.mxu0 0
  %1417 = vmatprep.subr.bf16.mxu0 0
  %1418 = vmatpush2.bf16.msra.mxu0 0
  %1419 = vmatprep.mubr.bf16.mxu0 0
  %1420 = vmatmul.mubr.bf16.gmra.mxu0 %v1385
  %v1421 = vpop.f32.mrf.mxu0
  %v1422 = vadd.f32 0.0, %v1421
  %v1423 = vpop.f32.mrf.mxu0
  %v1424 = vpop.f32.mrf.mxu0
  %v1425 = vpop.f32.mrf.mxu0
  %1426 = vdwg.mxu0
  %v1427 = vadd.f32 %v1345, %v1422
  %v1428 = vpack.c.bf16 %v1190, %v1190
  %s1429 = scalar_lea.vmem %s2, 96
  %v1430 = vld [vmem:[%s1429] sm:$0xf]
  %v1431 = vld [vmem:[%s1429 + $0x4] sm:$0xf]
  %v1432 = vld [vmem:[%s1429 + $0x8] sm:$0xf]
  %v1433 = vld [vmem:[%s1429 + $0xc] sm:$0xf]
  %v1434 = vld [vmem:[%s1429 + $0x10] sm:$0xf]
  %v1435 = vld [vmem:[%s1429 + $0x14] sm:$0xf]
  %v1436 = vld [vmem:[%s1429 + $0x18] sm:$0xf]
  %v1437 = vld [vmem:[%s1429 + $0x1c] sm:$0xf]
  %v1446 = vunpack.c.l.b16 %v1430
  %v1447 = vunpack.c.l.b16 %v1431
  %v1448 = vunpack.c.l.b16 %v1432
  %v1449 = vunpack.c.l.b16 %v1433
  %v1450 = vunpack.c.l.b16 %v1434
  %v1451 = vunpack.c.l.b16 %v1435
  %v1452 = vunpack.c.l.b16 %v1436
  %v1453 = vunpack.c.l.b16 %v1437
  %v1454 = vpack.c.b16 %v1447, %v1446
  %v1455 = vpack.c.b16 %v1449, %v1448
  %v1456 = vpack.c.b16 %v1451, %v1450
  %v1457 = vpack.c.b16 %v1453, %v1452
  %v1463 = vsel %vm1239, %v1428, 0
  %1465 = vmatprep.subr.bf16.mxu0 0
  %1466 = vmatpush1.bf16.msra.mxu0 0
  %1467 = vmatprep.subr.bf16.mxu0 0
  %1468 = vmatpush1.bf16.msra.mxu0 0
  %1469 = vmatprep.subr.bf16.mxu0 0
  %1470 = vmatpush1.bf16.msra.mxu0 0
  %1471 = vmatprep.subr.bf16.mxu0 0
  %1472 = vmatpush1.bf16.msra.mxu0 0
  %1473 = vmatprep.subr.bf16.mxu0 0
  %1474 = vmatpush1.bf16.msra.mxu0 %v1457
  %1475 = vmatprep.subr.bf16.mxu0 0
  %1476 = vmatpush1.bf16.msra.mxu0 %v1456
  %1477 = vmatprep.subr.bf16.mxu0 0
  %1478 = vmatpush1.bf16.msra.mxu0 %v1455
  %1479 = vmatprep.subr.bf16.mxu0 0
  %1480 = vmatpush1.bf16.msra.mxu0 %v1454
  %1481 = vmatprep.subr.bf16.mxu0 0
  %1482 = vmatpush2.bf16.msra.mxu0 0
  %1483 = vmatprep.subr.bf16.mxu0 0
  %1484 = vmatpush2.bf16.msra.mxu0 0
  %1485 = vmatprep.subr.bf16.mxu0 0
  %1486 = vmatpush2.bf16.msra.mxu0 0
  %1487 = vmatprep.subr.bf16.mxu0 0
  %1488 = vmatpush2.bf16.msra.mxu0 0
  %1489 = vmatprep.subr.bf16.mxu0 0
  %1490 = vmatpush2.bf16.msra.mxu0 0
  %1491 = vmatprep.subr.bf16.mxu0 0
  %1492 = vmatpush2.bf16.msra.mxu0 0
  %1493 = vmatprep.subr.bf16.mxu0 0
  %1494 = vmatpush2.bf16.msra.mxu0 0
  %1495 = vmatprep.subr.bf16.mxu0 0
  %1496 = vmatpush2.bf16.msra.mxu0 0
  %1497 = vmatprep.mubr.bf16.mxu0 0
  %1498 = vmatmul.mubr.bf16.gmra.mxu0 %v1463
  %v1499 = vpop.f32.mrf.mxu0
  %v1500 = vadd.f32 0.0, %v1499
  %v1501 = vpop.f32.mrf.mxu0
  %v1502 = vpop.f32.mrf.mxu0
  %v1503 = vpop.f32.mrf.mxu0
  %1504 = vdwg.mxu0
  %v1505 = vadd.f32 %v1427, %v1500
  %v1506 = vpack.c.bf16 %v1191, %v1191
  %s1507 = scalar_lea.vmem %s2, 128
  %v1508 = vld [vmem:[%s1507] sm:$0xf]
  %v1509 = vld [vmem:[%s1507 + $0x4] sm:$0xf]
  %v1510 = vld [vmem:[%s1507 + $0x8] sm:$0xf]
  %v1511 = vld [vmem:[%s1507 + $0xc] sm:$0xf]
  %v1512 = vld [vmem:[%s1507 + $0x10] sm:$0xf]
  %v1513 = vld [vmem:[%s1507 + $0x14] sm:$0xf]
  %v1514 = vld [vmem:[%s1507 + $0x18] sm:$0xf]
  %v1515 = vld [vmem:[%s1507 + $0x1c] sm:$0xf]
  %v1524 = vunpack.c.l.b16 %v1508
  %v1525 = vunpack.c.l.b16 %v1509
  %v1526 = vunpack.c.l.b16 %v1510
  %v1527 = vunpack.c.l.b16 %v1511
  %v1528 = vunpack.c.l.b16 %v1512
  %v1529 = vunpack.c.l.b16 %v1513
  %v1530 = vunpack.c.l.b16 %v1514
  %v1531 = vunpack.c.l.b16 %v1515
  %v1532 = vpack.c.b16 %v1525, %v1524
  %v1533 = vpack.c.b16 %v1527, %v1526
  %v1534 = vpack.c.b16 %v1529, %v1528
  %v1535 = vpack.c.b16 %v1531, %v1530
  %v1541 = vsel %vm1239, %v1506, 0
  %1543 = vmatprep.subr.bf16.mxu0 0
  %1544 = vmatpush1.bf16.msra.mxu0 0
  %1545 = vmatprep.subr.bf16.mxu0 0
  %1546 = vmatpush1.bf16.msra.mxu0 0
  %1547 = vmatprep.subr.bf16.mxu0 0
  %1548 = vmatpush1.bf16.msra.mxu0 0
  %1549 = vmatprep.subr.bf16.mxu0 0
  %1550 = vmatpush1.bf16.msra.mxu0 0
  %1551 = vmatprep.subr.bf16.mxu0 0
  %1552 = vmatpush1.bf16.msra.mxu0 %v1535
  %1553 = vmatprep.subr.bf16.mxu0 0
  %1554 = vmatpush1.bf16.msra.mxu0 %v1534
  %1555 = vmatprep.subr.bf16.mxu0 0
  %1556 = vmatpush1.bf16.msra.mxu0 %v1533
  %1557 = vmatprep.subr.bf16.mxu0 0
  %1558 = vmatpush1.bf16.msra.mxu0 %v1532
  %1559 = vmatprep.subr.bf16.mxu0 0
  %1560 = vmatpush2.bf16.msra.mxu0 0
  %1561 = vmatprep.subr.bf16.mxu0 0
  %1562 = vmatpush2.bf16.msra.mxu0 0
  %1563 = vmatprep.subr.bf16.mxu0 0
  %1564 = vmatpush2.bf16.msra.mxu0 0
  %1565 = vmatprep.subr.bf16.mxu0 0
  %1566 = vmatpush2.bf16.msra.mxu0 0
  %1567 = vmatprep.subr.bf16.mxu0 0
  %1568 = vmatpush2.bf16.msra.mxu0 0
  %1569 = vmatprep.subr.bf16.mxu0 0
  %1570 = vmatpush2.bf16.msra.mxu0 0
  %1571 = vmatprep.subr.bf16.mxu0 0
  %1572 = vmatpush2.bf16.msra.mxu0 0
  %1573 = vmatprep.subr.bf16.mxu0 0
  %1574 = vmatpush2.bf16.msra.mxu0 0
  %1575 = vmatprep.mubr.bf16.mxu0 0
  %1576 = vmatmul.mubr.bf16.gmra.mxu0 %v1541
  %v1577 = vpop.f32.mrf.mxu0
  %v1578 = vadd.f32 0.0, %v1577
  %v1579 = vpop.f32.mrf.mxu0
  %v1580 = vpop.f32.mrf.mxu0
  %v1581 = vpop.f32.mrf.mxu0
  %1582 = vdwg.mxu0
  %v1583 = vadd.f32 %v1505, %v1578
  %v1584 = vpack.c.bf16 %v1192, %v1192
  %s1585 = scalar_lea.vmem %s2, 160
  %v1586 = vld [vmem:[%s1585] sm:$0xf]
  %v1587 = vld [vmem:[%s1585 + $0x4] sm:$0xf]
  %v1588 = vld [vmem:[%s1585 + $0x8] sm:$0xf]
  %v1589 = vld [vmem:[%s1585 + $0xc] sm:$0xf]
  %v1590 = vld [vmem:[%s1585 + $0x10] sm:$0xf]
  %v1591 = vld [vmem:[%s1585 + $0x14] sm:$0xf]
  %v1592 = vld [vmem:[%s1585 + $0x18] sm:$0xf]
  %v1593 = vld [vmem:[%s1585 + $0x1c] sm:$0xf]
  %v1602 = vunpack.c.l.b16 %v1586
  %v1603 = vunpack.c.l.b16 %v1587
  %v1604 = vunpack.c.l.b16 %v1588
  %v1605 = vunpack.c.l.b16 %v1589
  %v1606 = vunpack.c.l.b16 %v1590
  %v1607 = vunpack.c.l.b16 %v1591
  %v1608 = vunpack.c.l.b16 %v1592
  %v1609 = vunpack.c.l.b16 %v1593
  %v1610 = vpack.c.b16 %v1603, %v1602
  %v1611 = vpack.c.b16 %v1605, %v1604
  %v1612 = vpack.c.b16 %v1607, %v1606
  %v1613 = vpack.c.b16 %v1609, %v1608
  %v1619 = vsel %vm1239, %v1584, 0
  %1621 = vmatprep.subr.bf16.mxu0 0
  %1622 = vmatpush1.bf16.msra.mxu0 0
  %1623 = vmatprep.subr.bf16.mxu0 0
  %1624 = vmatpush1.bf16.msra.mxu0 0
  %1625 = vmatprep.subr.bf16.mxu0 0
  %1626 = vmatpush1.bf16.msra.mxu0 0
  %1627 = vmatprep.subr.bf16.mxu0 0
  %1628 = vmatpush1.bf16.msra.mxu0 0
  %1629 = vmatprep.subr.bf16.mxu0 0
  %1630 = vmatpush1.bf16.msra.mxu0 %v1613
  %1631 = vmatprep.subr.bf16.mxu0 0
  %1632 = vmatpush1.bf16.msra.mxu0 %v1612
  %1633 = vmatprep.subr.bf16.mxu0 0
  %1634 = vmatpush1.bf16.msra.mxu0 %v1611
  %1635 = vmatprep.subr.bf16.mxu0 0
  %1636 = vmatpush1.bf16.msra.mxu0 %v1610
  %1637 = vmatprep.subr.bf16.mxu0 0
  %1638 = vmatpush2.bf16.msra.mxu0 0
  %1639 = vmatprep.subr.bf16.mxu0 0
  %1640 = vmatpush2.bf16.msra.mxu0 0
  %1641 = vmatprep.subr.bf16.mxu0 0
  %1642 = vmatpush2.bf16.msra.mxu0 0
  %1643 = vmatprep.subr.bf16.mxu0 0
  %1644 = vmatpush2.bf16.msra.mxu0 0
  %1645 = vmatprep.subr.bf16.mxu0 0
  %1646 = vmatpush2.bf16.msra.mxu0 0
  %1647 = vmatprep.subr.bf16.mxu0 0
  %1648 = vmatpush2.bf16.msra.mxu0 0
  %1649 = vmatprep.subr.bf16.mxu0 0
  %1650 = vmatpush2.bf16.msra.mxu0 0
  %1651 = vmatprep.subr.bf16.mxu0 0
  %1652 = vmatpush2.bf16.msra.mxu0 0
  %1653 = vmatprep.mubr.bf16.mxu0 0
  %1654 = vmatmul.mubr.bf16.gmra.mxu0 %v1619
  %v1655 = vpop.f32.mrf.mxu0
  %v1656 = vadd.f32 0.0, %v1655
  %v1657 = vpop.f32.mrf.mxu0
  %v1658 = vpop.f32.mrf.mxu0
  %v1659 = vpop.f32.mrf.mxu0
  %1660 = vdwg.mxu0
  %v1661 = vadd.f32 %v1583, %v1656
  %v1662 = vpack.c.bf16 %v1193, %v1193
  %s1663 = scalar_lea.vmem %s2, 192
  %v1664 = vld [vmem:[%s1663] sm:$0xf]
  %v1665 = vld [vmem:[%s1663 + $0x4] sm:$0xf]
  %v1666 = vld [vmem:[%s1663 + $0x8] sm:$0xf]
  %v1667 = vld [vmem:[%s1663 + $0xc] sm:$0xf]
  %v1668 = vld [vmem:[%s1663 + $0x10] sm:$0xf]
  %v1669 = vld [vmem:[%s1663 + $0x14] sm:$0xf]
  %v1670 = vld [vmem:[%s1663 + $0x18] sm:$0xf]
  %v1671 = vld [vmem:[%s1663 + $0x1c] sm:$0xf]
  %v1680 = vunpack.c.l.b16 %v1664
  %v1681 = vunpack.c.l.b16 %v1665
  %v1682 = vunpack.c.l.b16 %v1666
  %v1683 = vunpack.c.l.b16 %v1667
  %v1684 = vunpack.c.l.b16 %v1668
  %v1685 = vunpack.c.l.b16 %v1669
  %v1686 = vunpack.c.l.b16 %v1670
  %v1687 = vunpack.c.l.b16 %v1671
  %v1688 = vpack.c.b16 %v1681, %v1680
  %v1689 = vpack.c.b16 %v1683, %v1682
  %v1690 = vpack.c.b16 %v1685, %v1684
  %v1691 = vpack.c.b16 %v1687, %v1686
  %v1697 = vsel %vm1239, %v1662, 0
  %1699 = vmatprep.subr.bf16.mxu0 0
  %1700 = vmatpush1.bf16.msra.mxu0 0
  %1701 = vmatprep.subr.bf16.mxu0 0
  %1702 = vmatpush1.bf16.msra.mxu0 0
  %1703 = vmatprep.subr.bf16.mxu0 0
  %1704 = vmatpush1.bf16.msra.mxu0 0
  %1705 = vmatprep.subr.bf16.mxu0 0
  %1706 = vmatpush1.bf16.msra.mxu0 0
  %1707 = vmatprep.subr.bf16.mxu0 0
  %1708 = vmatpush1.bf16.msra.mxu0 %v1691
  %1709 = vmatprep.subr.bf16.mxu0 0
  %1710 = vmatpush1.bf16.msra.mxu0 %v1690
  %1711 = vmatprep.subr.bf16.mxu0 0
  %1712 = vmatpush1.bf16.msra.mxu0 %v1689
  %1713 = vmatprep.subr.bf16.mxu0 0
  %1714 = vmatpush1.bf16.msra.mxu0 %v1688
  %1715 = vmatprep.subr.bf16.mxu0 0
  %1716 = vmatpush2.bf16.msra.mxu0 0
  %1717 = vmatprep.subr.bf16.mxu0 0
  %1718 = vmatpush2.bf16.msra.mxu0 0
  %1719 = vmatprep.subr.bf16.mxu0 0
  %1720 = vmatpush2.bf16.msra.mxu0 0
  %1721 = vmatprep.subr.bf16.mxu0 0
  %1722 = vmatpush2.bf16.msra.mxu0 0
  %1723 = vmatprep.subr.bf16.mxu0 0
  %1724 = vmatpush2.bf16.msra.mxu0 0
  %1725 = vmatprep.subr.bf16.mxu0 0
  %1726 = vmatpush2.bf16.msra.mxu0 0
  %1727 = vmatprep.subr.bf16.mxu0 0
  %1728 = vmatpush2.bf16.msra.mxu0 0
  %1729 = vmatprep.subr.bf16.mxu0 0
  %1730 = vmatpush2.bf16.msra.mxu0 0
  %1731 = vmatprep.mubr.bf16.mxu0 0
  %1732 = vmatmul.mubr.bf16.gmra.mxu0 %v1697
  %v1733 = vpop.f32.mrf.mxu0
  %v1734 = vadd.f32 0.0, %v1733
  %v1735 = vpop.f32.mrf.mxu0
  %v1736 = vpop.f32.mrf.mxu0
  %v1737 = vpop.f32.mrf.mxu0
  %1738 = vdwg.mxu0
  %v1739 = vadd.f32 %v1661, %v1734
  %v1740 = vpack.c.bf16 %v1194, %v1194
  %s1741 = scalar_lea.vmem %s2, 224
  %v1742 = vld [vmem:[%s1741] sm:$0xf]
  %v1743 = vld [vmem:[%s1741 + $0x4] sm:$0xf]
  %v1744 = vld [vmem:[%s1741 + $0x8] sm:$0xf]
  %v1745 = vld [vmem:[%s1741 + $0xc] sm:$0xf]
  %v1746 = vld [vmem:[%s1741 + $0x10] sm:$0xf]
  %v1747 = vld [vmem:[%s1741 + $0x14] sm:$0xf]
  %v1748 = vld [vmem:[%s1741 + $0x18] sm:$0xf]
  %v1749 = vld [vmem:[%s1741 + $0x1c] sm:$0xf]
  %v1758 = vunpack.c.l.b16 %v1742
  %v1759 = vunpack.c.l.b16 %v1743
  %v1760 = vunpack.c.l.b16 %v1744
  %v1761 = vunpack.c.l.b16 %v1745
  %v1762 = vunpack.c.l.b16 %v1746
  %v1763 = vunpack.c.l.b16 %v1747
  %v1764 = vunpack.c.l.b16 %v1748
  %v1765 = vunpack.c.l.b16 %v1749
  %v1766 = vpack.c.b16 %v1759, %v1758
  %v1767 = vpack.c.b16 %v1761, %v1760
  %v1768 = vpack.c.b16 %v1763, %v1762
  %v1769 = vpack.c.b16 %v1765, %v1764
  %v1775 = vsel %vm1239, %v1740, 0
  %1777 = vmatprep.subr.bf16.mxu0 0
  %1778 = vmatpush1.bf16.msra.mxu0 0
  %1779 = vmatprep.subr.bf16.mxu0 0
  %1780 = vmatpush1.bf16.msra.mxu0 0
  %1781 = vmatprep.subr.bf16.mxu0 0
  %1782 = vmatpush1.bf16.msra.mxu0 0
  %1783 = vmatprep.subr.bf16.mxu0 0
  %1784 = vmatpush1.bf16.msra.mxu0 0
  %1785 = vmatprep.subr.bf16.mxu0 0
  %1786 = vmatpush1.bf16.msra.mxu0 %v1769
  %1787 = vmatprep.subr.bf16.mxu0 0
  %1788 = vmatpush1.bf16.msra.mxu0 %v1768
  %1789 = vmatprep.subr.bf16.mxu0 0
  %1790 = vmatpush1.bf16.msra.mxu0 %v1767
  %1791 = vmatprep.subr.bf16.mxu0 0
  %1792 = vmatpush1.bf16.msra.mxu0 %v1766
  %1793 = vmatprep.subr.bf16.mxu0 0
  %1794 = vmatpush2.bf16.msra.mxu0 0
  %1795 = vmatprep.subr.bf16.mxu0 0
  %1796 = vmatpush2.bf16.msra.mxu0 0
  %1797 = vmatprep.subr.bf16.mxu0 0
  %1798 = vmatpush2.bf16.msra.mxu0 0
  %1799 = vmatprep.subr.bf16.mxu0 0
  %1800 = vmatpush2.bf16.msra.mxu0 0
  %1801 = vmatprep.subr.bf16.mxu0 0
  %1802 = vmatpush2.bf16.msra.mxu0 0
  %1803 = vmatprep.subr.bf16.mxu0 0
  %1804 = vmatpush2.bf16.msra.mxu0 0
  %1805 = vmatprep.subr.bf16.mxu0 0
  %1806 = vmatpush2.bf16.msra.mxu0 0
  %1807 = vmatprep.subr.bf16.mxu0 0
  %1808 = vmatpush2.bf16.msra.mxu0 0
  %1809 = vmatprep.mubr.bf16.mxu0 0
  %1810 = vmatmul.mubr.bf16.gmra.mxu0 %v1775
  %v1811 = vpop.f32.mrf.mxu0
  %v1812 = vadd.f32 0.0, %v1811
  %v1813 = vpop.f32.mrf.mxu0
  %v1814 = vpop.f32.mrf.mxu0
  %v1815 = vpop.f32.mrf.mxu0
  %1816 = vdwg.mxu0
  %v1817 = vadd.f32 %v1739, %v1812
  %v1818 = vpack.c.bf16 %v1195, %v1195
  %s1819 = scalar_lea.vmem %s2, 256
  %v1820 = vld [vmem:[%s1819] sm:$0xf]
  %v1821 = vld [vmem:[%s1819 + $0x4] sm:$0xf]
  %v1822 = vld [vmem:[%s1819 + $0x8] sm:$0xf]
  %v1823 = vld [vmem:[%s1819 + $0xc] sm:$0xf]
  %v1824 = vld [vmem:[%s1819 + $0x10] sm:$0xf]
  %v1825 = vld [vmem:[%s1819 + $0x14] sm:$0xf]
  %v1826 = vld [vmem:[%s1819 + $0x18] sm:$0xf]
  %v1827 = vld [vmem:[%s1819 + $0x1c] sm:$0xf]
  %v1836 = vunpack.c.l.b16 %v1820
  %v1837 = vunpack.c.l.b16 %v1821
  %v1838 = vunpack.c.l.b16 %v1822
  %v1839 = vunpack.c.l.b16 %v1823
  %v1840 = vunpack.c.l.b16 %v1824
  %v1841 = vunpack.c.l.b16 %v1825
  %v1842 = vunpack.c.l.b16 %v1826
  %v1843 = vunpack.c.l.b16 %v1827
  %v1844 = vpack.c.b16 %v1837, %v1836
  %v1845 = vpack.c.b16 %v1839, %v1838
  %v1846 = vpack.c.b16 %v1841, %v1840
  %v1847 = vpack.c.b16 %v1843, %v1842
  %v1853 = vsel %vm1239, %v1818, 0
  %1855 = vmatprep.subr.bf16.mxu0 0
  %1856 = vmatpush1.bf16.msra.mxu0 0
  %1857 = vmatprep.subr.bf16.mxu0 0
  %1858 = vmatpush1.bf16.msra.mxu0 0
  %1859 = vmatprep.subr.bf16.mxu0 0
  %1860 = vmatpush1.bf16.msra.mxu0 0
  %1861 = vmatprep.subr.bf16.mxu0 0
  %1862 = vmatpush1.bf16.msra.mxu0 0
  %1863 = vmatprep.subr.bf16.mxu0 0
  %1864 = vmatpush1.bf16.msra.mxu0 %v1847
  %1865 = vmatprep.subr.bf16.mxu0 0
  %1866 = vmatpush1.bf16.msra.mxu0 %v1846
  %1867 = vmatprep.subr.bf16.mxu0 0
  %1868 = vmatpush1.bf16.msra.mxu0 %v1845
  %1869 = vmatprep.subr.bf16.mxu0 0
  %1870 = vmatpush1.bf16.msra.mxu0 %v1844
  %1871 = vmatprep.subr.bf16.mxu0 0
  %1872 = vmatpush2.bf16.msra.mxu0 0
  %1873 = vmatprep.subr.bf16.mxu0 0
  %1874 = vmatpush2.bf16.msra.mxu0 0
  %1875 = vmatprep.subr.bf16.mxu0 0
  %1876 = vmatpush2.bf16.msra.mxu0 0
  %1877 = vmatprep.subr.bf16.mxu0 0
  %1878 = vmatpush2.bf16.msra.mxu0 0
  %1879 = vmatprep.subr.bf16.mxu0 0
  %1880 = vmatpush2.bf16.msra.mxu0 0
  %1881 = vmatprep.subr.bf16.mxu0 0
  %1882 = vmatpush2.bf16.msra.mxu0 0
  %1883 = vmatprep.subr.bf16.mxu0 0
  %1884 = vmatpush2.bf16.msra.mxu0 0
  %1885 = vmatprep.subr.bf16.mxu0 0
  %1886 = vmatpush2.bf16.msra.mxu0 0
  %1887 = vmatprep.mubr.bf16.mxu0 0
  %1888 = vmatmul.mubr.bf16.gmra.mxu0 %v1853
  %v1889 = vpop.f32.mrf.mxu0
  %v1890 = vadd.f32 0.0, %v1889
  %v1891 = vpop.f32.mrf.mxu0
  %v1892 = vpop.f32.mrf.mxu0
  %v1893 = vpop.f32.mrf.mxu0
  %1894 = vdwg.mxu0
  %v1895 = vadd.f32 %v1817, %v1890
  %v1896 = vld [vmem:[%s3] sm:$0x1]
  %v1898 = vlaneseq
  %v1899 = vshrl.u32 %v1898, 7
  %v1900 = vsub.s32 0, %v1899
  %v1901 = vrot.slane %v1896, %v1900
  %v1903 = vadd.f32 %v1895, %v1901
  %v1904 = vpack.c.bf16 %v1903, %v1903
  %v1905 = vld [vmem:[%s4] sm:$0xf]
  %v1906 = vld [vmem:[%s4 + $0x4] sm:$0xf]
  %v1907 = vld [vmem:[%s4 + $0x8] sm:$0xf]
  %v1908 = vld [vmem:[%s4 + $0xc] sm:$0xf]
  %v1909 = vld [vmem:[%s4 + $0x10] sm:$0xf]
  %v1910 = vld [vmem:[%s4 + $0x14] sm:$0xf]
  %v1911 = vld [vmem:[%s4 + $0x18] sm:$0xf]
  %v1912 = vld [vmem:[%s4 + $0x1c] sm:$0xf]
  %v1913 = vld [vmem:[%s5] sm:$0x1]
  %v1915 = vlaneseq
  %v1916 = vshrl.u32 %v1915, 7
  %v1917 = vsub.s32 0, %v1916
  %v1918 = vrot.slane %v1913, %v1917
  %v1928 = vunpack.c.l.b16 %v1905
  %v1929 = vunpack.c.l.b16 %v1906
  %v1930 = vunpack.c.l.b16 %v1907
  %v1931 = vunpack.c.l.b16 %v1908
  %v1932 = vunpack.c.l.b16 %v1909
  %v1933 = vunpack.c.l.b16 %v1910
  %v1934 = vunpack.c.l.b16 %v1911
  %v1935 = vunpack.c.l.b16 %v1912
  %v1936 = vpack.c.b16 %v1929, %v1928
  %v1937 = vpack.c.b16 %v1931, %v1930
  %v1938 = vpack.c.b16 %v1933, %v1932
  %v1939 = vpack.c.b16 %v1935, %v1934
  %v1945 = vsel %vm1239, %v1904, 0
  %1947 = vmatprep.subr.bf16.mxu0 0
  %1948 = vmatpush1.bf16.msra.mxu0 0
  %1949 = vmatprep.subr.bf16.mxu0 0
  %1950 = vmatpush1.bf16.msra.mxu0 0
  %1951 = vmatprep.subr.bf16.mxu0 0
  %1952 = vmatpush1.bf16.msra.mxu0 0
  %1953 = vmatprep.subr.bf16.mxu0 0
  %1954 = vmatpush1.bf16.msra.mxu0 0
  %1955 = vmatprep.subr.bf16.mxu0 0
  %1956 = vmatpush1.bf16.msra.mxu0 %v1939
  %1957 = vmatprep.subr.bf16.mxu0 0
  %1958 = vmatpush1.bf16.msra.mxu0 %v1938
  %1959 = vmatprep.subr.bf16.mxu0 0
  %1960 = vmatpush1.bf16.msra.mxu0 %v1937
  %1961 = vmatprep.subr.bf16.mxu0 0
  %1962 = vmatpush1.bf16.msra.mxu0 %v1936
  %1963 = vmatprep.subr.bf16.mxu0 0
  %1964 = vmatpush2.bf16.msra.mxu0 0
  %1965 = vmatprep.subr.bf16.mxu0 0
  %1966 = vmatpush2.bf16.msra.mxu0 0
  %1967 = vmatprep.subr.bf16.mxu0 0
  %1968 = vmatpush2.bf16.msra.mxu0 0
  %1969 = vmatprep.subr.bf16.mxu0 0
  %1970 = vmatpush2.bf16.msra.mxu0 0
  %1971 = vmatprep.subr.bf16.mxu0 0
  %1972 = vmatpush2.bf16.msra.mxu0 0
  %1973 = vmatprep.subr.bf16.mxu0 0
  %1974 = vmatpush2.bf16.msra.mxu0 0
  %1975 = vmatprep.subr.bf16.mxu0 0
  %1976 = vmatpush2.bf16.msra.mxu0 0
  %1977 = vmatprep.subr.bf16.mxu0 0
  %1978 = vmatpush2.bf16.msra.mxu0 0
  %1979 = vmatprep.mubr.bf16.mxu0 0
  %1980 = vmatmul.mubr.bf16.gmra.mxu0 %v1945
  %v1981 = vpop.f32.mrf.mxu0
  %v1982 = vadd.f32 %v1918, %v1981
  %v1983 = vpop.f32.mrf.mxu0
  %v1984 = vpop.f32.mrf.mxu0
  %v1985 = vpop.f32.mrf.mxu0
  %1986 = vdwg.mxu0
  %vm1987 = vcmask 80896
  %1988 = vst.msk [vmem:[%s6] sm:$0xff] %vm1987, %v1982
  // Predicated region
  $region26: #{cnn_net2_forward.5} parent=0 // pred_check
    _
  $region27: #{cnn_net2_forward.5} parent=0 // pred_check_branch
    %1990 = sbr.rel (0) target = $region29
  $region28: #{cnn_net2_forward.5} parent=0 // pred_region
    _
  $region29: #{cnn_net2_forward.5} parent=0 // pred_fallthru
    _
  // Predicated region
  $region30: #{cnn_net2_forward.5} parent=0 // pred_check
    _
  $region31: #{cnn_net2_forward.5} parent=0 // pred_check_branch
    %1992 = sbr.rel (0) target = $region33
  $region32: #{cnn_net2_forward.5} parent=0 // pred_region
    _
  $region33: #{cnn_net2_forward.5} parent=0 // pred_fallthru
    _

</llo_original>
